<compile_context>
chip_gen: v6e
topology: v6e:2x2x1
jax: 0.10.0
libtpu: 0.0.40
codegen_flags: <defaults>
</compile_context>

<pallas_src>
import functools

import jax
import jax.numpy as jnp
from jax import lax
from jax.experimental import pallas as pl
from jax.experimental.pallas import tpu as pltpu

# (k1, d1, p1, k2, d2, p2, kc, pc) for the (K1, conv1), (K3, conv3),
# (K5, conv5), (K7, conv7) branches -- matching the PyTorch module exactly.
BRANCH_CFG = (
    (1, 1, 0, 3, 1, 1, 1, 0),    # K1: dw(k1) -> dw(k3,d1,p1)  -> pw ; conv1
    (3, 1, 1, 5, 2, 4, 3, 1),    # K3: dw(k3) -> dw(k5,d2,p4)  -> pw ; conv3
    (5, 1, 2, 7, 3, 9, 5, 2),    # K5: dw(k5) -> dw(k7,d3,p9)  -> pw ; conv5
    (7, 1, 3, 9, 4, 16, 7, 3),   # K7: dw(k7) -> dw(k9,d4,p16) -> pw ; conv7
)

# Every branch's gate conv (convX) has the same kernel size / padding as that
# branch's first depthwise conv and dilation 1, so they share shifted values.
for _c in BRANCH_CFG:
    assert _c[1] == 1 and _c[0] == _c[6] and _c[2] == _c[7]

MAX_K1 = max(c[0] for c in BRANCH_CFG)     # 7
MAX_K2 = max(c[3] for c in BRANCH_CFG)     # 9
_SC0 = 2 * MAX_K1 + MAX_K2                 # first scalar column in ppack
# scalar columns: b1, bg, b2, bpw, outb, scale, inb_a, inb_x
PPACK_COLS = _SC0 + 8


# --------------------------------------------------------------------------
# Pallas kernel
# --------------------------------------------------------------------------
def mkc_kernel(C, L, TB, split_pw,
               x_ref, lngb_ref, inwa_ref, inwx_ref, outw_ref, pw_ref,
               ppack_ref, o_ref):
    Cg = C // 4
    N = TB * L

    # ---- per-sample LayerNorm over the (C, L) normalized shape, eps=1e-5 ----
    # gamma/beta are a (2C, L) slab applied per sample (no TB tiling).
    lngb = lngb_ref[...]
    gamma, beta = lngb[:C], lngb[C:]
    parts = []
    for s in range(TB):
        xs = x_ref[:, pl.ds(s * L, L)]          # read slice straight from VMEM
        m = jnp.mean(xs)
        xc = xs - m
        v = jnp.mean(xc * xc)                   # two-pass: robust to large mean
        parts.append(xc * lax.rsqrt(v + 1e-5) * gamma + beta)
    xn = parts[0] if TB == 1 else jnp.concatenate(parts, axis=1)
    xn_bf = xn.astype(jnp.bfloat16)

    # ---- packed small parameters (static slices of a tiny slab) ----
    pp = ppack_ref[...]                          # (C, PPACK_COLS) f32
    outb = pp[:, _SC0 + 4:_SC0 + 5]
    scale = pp[:, _SC0 + 5:_SC0 + 6]
    inb_a = pp[:, _SC0 + 6:_SC0 + 7]
    inb_x = pp[:, _SC0 + 7:_SC0 + 8]

    # ---- inconv 1x1 (C -> 2C) split into two MXU matmuls (a / gate xg) ----
    a = jnp.dot(inwa_ref[...], xn_bf, preferred_element_type=jnp.float32) + inb_a
    xg = jnp.dot(inwx_ref[...], xn_bf, preferred_element_type=jnp.float32) + inb_x

    # per-sample position index (built by concatenation: no reshape / no mod)
    pos_l = lax.broadcasted_iota(jnp.int32, (1, L), 1)
    pos = pos_l if TB == 1 else jnp.concatenate([pos_l] * TB, axis=1)

    def shifted(src, o):
        # zero-padded per-sample shift: out[c, p] = src[c, p + o] within sample
        if o == 0:
            return src
        mask = ((pos + o >= 0) & (pos + o < L)).astype(jnp.float32)
        return pltpu.roll(src, (-o) % N, axis=1) * mask

    # ---- per-branch depthwise stages on (Cg, N) slices ----
    t2_list, g_list = [], []
    for bi, (k1, d1, p1, k2, d2, p2, kc, pc) in enumerate(BRANCH_CFG):
        lo = bi * Cg
        a_b = a[lo:lo + Cg, :]
        w1 = pp[lo:lo + Cg, 0:MAX_K1]
        wg = pp[lo:lo + Cg, MAX_K1:2 * MAX_K1]
        w2 = pp[lo:lo + Cg, 2 * MAX_K1:_SC0]
        b1 = pp[lo:lo + Cg, _SC0 + 0:_SC0 + 1]
        bg = pp[lo:lo + Cg, _SC0 + 1:_SC0 + 2]
        b2 = pp[lo:lo + Cg, _SC0 + 2:_SC0 + 3]

        # stage-1 depthwise conv + gate conv (same taps: one roll, two FMAs)
        t1 = jnp.zeros((Cg, N), jnp.float32)
        g = jnp.zeros((Cg, N), jnp.float32)
        for t in range(k1):
            o = t * d1 - p1
            if abs(o) >= L:
                continue
            sh = shifted(a_b, o)
            t1 = t1 + w1[:, t:t + 1] * sh
            g = g + wg[:, t:t + 1] * sh
        t1 = t1 + b1
        g = g + bg

        # stage-2 dilated depthwise conv (this branch's taps only)
        t2 = jnp.zeros((Cg, N), jnp.float32)
        for t in range(k2):
            o = t * d2 - p2
            if abs(o) >= L:
                continue
            t2 = t2 + w2[:, t:t + 1] * shifted(t1, o)
        t2_list.append(t2 + b2)
        g_list.append(g)

    # ---- per-branch pointwise 1x1 conv + gating ----
    if split_pw:
        # Cg is at least an MXU tile: 4 dense (Cg,Cg)@(Cg,N) matmuls.
        gated = []
        for bi in range(len(BRANCH_CFG)):
            lo = bi * Cg
            bpw = pp[lo:lo + Cg, _SC0 + 3:_SC0 + 4]
            t3 = jnp.dot(pw_ref[lo:lo + Cg, :],
                         t2_list[bi].astype(jnp.bfloat16),
                         preferred_element_type=jnp.float32) + bpw
            gated.append(t3 * g_list[bi])
        acat = jnp.concatenate(gated, axis=0)
    else:
        # small Cg: one fused block-diagonal (C,C)@(C,N) matmul
        t2 = jnp.concatenate(t2_list, axis=0)
        g = jnp.concatenate(g_list, axis=0)
        t3 = jnp.dot(pw_ref[...], t2.astype(jnp.bfloat16),
                     preferred_element_type=jnp.float32) + pp[:, _SC0 + 3:_SC0 + 4]
        acat = t3 * g

    # ---- gating, outconv (single matmul), scale + residual ----
    prod = xg * acat
    y = jnp.dot(outw_ref[...], prod.astype(jnp.bfloat16),
                preferred_element_type=jnp.float32) + outb
    # shortcut re-read from the (already resident) VMEM block -> short live range
    o_ref[...] = (y * scale + x_ref[...]).astype(o_ref.dtype)


# --------------------------------------------------------------------------
# Host-side parameter packing
# --------------------------------------------------------------------------
def pack_params(params, C):
    Cg = C // 4
    split_pw = Cg >= 128
    ln_g, ln_b, scale, inw, inb, outw, outb = params[:7]
    br = params[7:]

    ppack = jnp.zeros((C, PPACK_COLS), jnp.float32)
    pw = jnp.zeros((C, Cg if split_pw else C), jnp.float32)
    for bi, (k1, d1, p1, k2, d2, p2, kc, pc) in enumerate(BRANCH_CFG):
        dw1w, dw1b, dw2w, dw2b, pww, pwb, cw, cb = br[bi * 8:(bi + 1) * 8]
        lo = bi * Cg
        ppack = ppack.at[lo:lo + Cg, 0:k1].set(dw1w)
        ppack = ppack.at[lo:lo + Cg, MAX_K1:MAX_K1 + kc].set(cw)
        ppack = ppack.at[lo:lo + Cg, 2 * MAX_K1:2 * MAX_K1 + k2].set(dw2w)
        ppack = ppack.at[lo:lo + Cg, _SC0 + 0].set(dw1b[:, 0])
        ppack = ppack.at[lo:lo + Cg, _SC0 + 1].set(cb[:, 0])
        ppack = ppack.at[lo:lo + Cg, _SC0 + 2].set(dw2b[:, 0])
        ppack = ppack.at[lo:lo + Cg, _SC0 + 3].set(pwb[:, 0])
        if split_pw:
            pw = pw.at[lo:lo + Cg, :].set(pww)
        else:
            pw = pw.at[lo:lo + Cg, lo:lo + Cg].set(pww)
    ppack = ppack.at[:, _SC0 + 4].set(outb[:, 0])
    ppack = ppack.at[:, _SC0 + 5].set(scale[:, 0])
    ppack = ppack.at[:, _SC0 + 6].set(inb[:C, 0])
    ppack = ppack.at[:, _SC0 + 7].set(inb[C:, 0])

    lngb = jnp.concatenate([ln_g, ln_b], axis=0)          # (2C, L)
    inw_a = inw[:C].astype(jnp.bfloat16)                   # (C, C)
    inw_x = inw[C:].astype(jnp.bfloat16)                   # (C, C)
    return (lngb, inw_a, inw_x, outw.astype(jnp.bfloat16),
            pw.astype(jnp.bfloat16), ppack, split_pw)


# --------------------------------------------------------------------------
# Generation-aware tiling
# --------------------------------------------------------------------------
def _vmem_capacity_bytes():
    try:
        return int(pltpu.get_tpu_info().vmem_capacity_bytes)
    except Exception:
        return 64 << 20   # conservative default (v7x per-core VMEM)


_LIVE_MULT = 14  # ~14 live (C, N) f32 slabs at peak (xn, a, xg, t2/g stacks, ...)


def _pick_batch_tile(B, C, L, itemsize=4):
    """Largest batch tile whose live intermediates fit comfortably in VMEM,
    preferring >=4 grid steps (>=2 per v7x TensorCore) and >=512-lane blocks."""
    cap = _vmem_capacity_bytes()
    budget = max(2 << 20, min(12 << 20, cap // 6))
    per_sample = max(1, C * L * itemsize)
    tb = max(1, min(B, budget // (_LIVE_MULT * per_sample)))
    while B % tb:
        tb -= 1
    # lane dim of a block must be a multiple of 128 unless it is the full dim
    cands = [t for t in range(tb, 0, -1)
             if B % t == 0 and ((t * L) % 128 == 0 or t == B)]
    if not cands:
        return B
    for steps, lanes in ((4, 512), (2, 512), (2, 128)):
        for t in cands:
            if B // t >= steps and t * L >= lanes:
                return t
    return cands[0]


# --------------------------------------------------------------------------
# Wrapper
# --------------------------------------------------------------------------
def multi_kernel_conv(x, params, *, batch_tile=None):
    B, C, L = x.shape
    assert C % 4 == 0, "n_feats must be divisible by 4"
    Cg = C // 4
    TB = batch_tile if batch_tile is not None else _pick_batch_tile(B, C, L)
    assert B % TB == 0
    N = TB * L

    lngb, inw_a, inw_x, outw, pw, ppack, split_pw = pack_params(params, C)
    consts = (lngb, inw_a, inw_x, outw, pw, ppack)

    # Lane-dense (C, B*L) activation layout: 1x1 convs become single big MXU
    # matmuls and depthwise convs become lane rolls.
    # TODO(synk): if this layer is stacked, keep activations in (C, B*L)
    # between layers (or fuse into the consumer) to drop the transpose passes.
    xf = jnp.transpose(x, (1, 0, 2)).reshape(C, B * L)

    const_spec = lambda arr: pl.BlockSpec(arr.shape, lambda i: (0, 0))

    block_bytes = C * N * 4
    const_bytes = sum(p.size * p.dtype.itemsize for p in consts)
    # double-buffered in/out blocks + live f32 slabs + (double-buffered) consts
    vmem_est = 4 * block_bytes + _LIVE_MULT * block_bytes + 2 * const_bytes
    cap = _vmem_capacity_bytes()
    vmem_limit = int(min(max(32 << 20, 2 * vmem_est), int(cap * 0.75)))

    sum_k1 = sum(c[0] for c in BRANCH_CFG)
    sum_k2 = sum(c[3] for c in BRANCH_CFG)
    flops = int(2 * B * L * (3 * C * C + C * Cg)
                + 2 * B * L * Cg * (2 * sum_k1 + sum_k2) + 12 * C * B * L)
    bytes_accessed = int(2 * B * C * L * 4 + const_bytes)

    out = pl.pallas_call(
        functools.partial(mkc_kernel, C, L, TB, split_pw),
        out_shape=jax.ShapeDtypeStruct((C, B * L), x.dtype),
        grid=(B // TB,),
        in_specs=[pl.BlockSpec((C, N), lambda i: (0, i))]
                 + [const_spec(p) for p in consts],
        out_specs=pl.BlockSpec((C, N), lambda i: (0, i)),
        compiler_params=pltpu.CompilerParams(
            dimension_semantics=("parallel",),
            vmem_limit_bytes=vmem_limit),
        cost_estimate=pl.CostEstimate(flops=flops, transcendentals=B,
                                      bytes_accessed=bytes_accessed),
    )(xf, *consts)

    return out.reshape(C, B, L).transpose(1, 0, 2)


# --------------------------------------------------------------------------
# Deterministic synthetic parameters (shapes from the module __init__)
# --------------------------------------------------------------------------
def init_params(key, C, L):
    Cg = C // 4
    keys = iter(jax.random.split(key, 64))

    def rnd(shape, s=0.1):
        return jax.random.normal(next(keys), shape, jnp.float32) * s

    params = [
        jnp.ones((C, L), jnp.float32),    # LayerNorm gamma (PyTorch init = 1)
        jnp.zeros((C, L), jnp.float32),   # LayerNorm beta  (PyTorch init = 0)
        # NOTE: PyTorch inits `scale` to zeros (output == shortcut); we use a
        # nonzero deterministic init so the whole compute path is exercised.
        rnd((C, 1)),                      # scale
        rnd((2 * C, C)),                  # inconv weight
        rnd((2 * C, 1)),                  # inconv bias
        rnd((C, C)),                      # outconv weight
        rnd((C, 1)),                      # outconv bias
    ]
    for (k1, d1, p1, k2, d2, p2, kc, pc) in BRANCH_CFG:
        params += [
            rnd((Cg, k1)), rnd((Cg, 1)),   # Kx depthwise conv 1
            rnd((Cg, k2)), rnd((Cg, 1)),   # Kx dilated depthwise conv 2
            rnd((Cg, Cg)), rnd((Cg, 1)),   # Kx pointwise conv
            rnd((Cg, kc)), rnd((Cg, 1)),   # plain convX gate
        ]
    return params


# ---------- pure-JAX reference (lax.conv) used only to validate the kernel ----------
def _ref_dwconv(x, w, b, dil, pad):
    y = lax.conv_general_dilated(
        x, w[:, None, :], (1,), [(pad, pad)], rhs_dilation=(dil,),
        dimension_numbers=("NCH", "OIH", "NCH"), feature_group_count=x.shape[1])
    return y + b[None, :, None]


def _ref_pwconv(x, w, b):
    y = lax.conv_general_dilated(
        x, w[:, :, None], (1,), [(0, 0)],
        dimension_numbers=("NCH", "OIH", "NCH"))
    return y + b[None, :, None]


def reference(x, params):
    C = x.shape[1]
    Cg = C // 4
    ln_g, ln_b, scale, inw, inb, outw, outb = params[:7]
    br = params[7:]
    shortcut = x
    mean = jnp.mean(x, axis=(1, 2), keepdims=True)
    var = jnp.mean((x - mean) ** 2, axis=(1, 2), keepdims=True)
    xn = (x - mean) / jnp.sqrt(var + 1e-5) * ln_g[None] + ln_b[None]
    h = _ref_pwconv(xn, inw, inb[:, 0])
    a, xg = h[:, :C], h[:, C:]
    outs = []
    for bi, (k1, d1, p1, k2, d2, p2, kc, pc) in enumerate(BRANCH_CFG):
        dw1w, dw1b, dw2w, dw2b, pww, pwb, cw, cb = br[bi * 8:(bi + 1) * 8]
        ai = a[:, bi * Cg:(bi + 1) * Cg]
        t = _ref_dwconv(ai, dw1w, dw1b[:, 0], d1, p1)
        t = _ref_dwconv(t, dw2w, dw2b[:, 0], d2, p2)
        t = _ref_pwconv(t, pww, pwb[:, 0])
        c = _ref_dwconv(ai, cw, cb[:, 0], 1, pc)
        outs.append(t * c)
    acat = jnp.concatenate(outs, axis=1)
    y = _ref_pwconv(xg * acat, outw, outb[:, 0])
    return y * scale[None] + shortcut


if __name__ == "__main__":
    B, C, L = 4, 32, 128   # batch, n_feats (divisible by 4), sequence length
    key = jax.random.PRNGKey(0)
    kx, kp = jax.random.split(key)
    x = jax.random.normal(kx, (B, C, L), jnp.float32)
    params = init_params(kp, C, L)

    out = jax.block_until_ready(jax.jit(multi_kernel_conv)(x, params))
    ref = jax.block_until_ready(reference(x, params))
    assert out.shape == (B, C, L)

    # Tolerance accounts for bf16 MXU operands (f32 accumulation); elementwise
    # math and biases stay in f32.
    max_err = float(jnp.max(jnp.abs(out - ref)))
    if max_err > 5e-3:
        raise AssertionError(f"kernel/reference mismatch, max abs err = {max_err}")
    print("KERNEL_OK")
</pallas_src>

<mosaic_0001>
module attributes {stable_mosaic.version = 11 : i64} {
  func.func @mkc_kernel(%arg0: i32, %arg1: memref<32x256xf32, #tpu.memory_space<vmem>>, %arg2: memref<64x128xf32, #tpu.memory_space<vmem>>, %arg3: memref<32x32xbf16, #tpu.memory_space<vmem>>, %arg4: memref<32x32xbf16, #tpu.memory_space<vmem>>, %arg5: memref<32x32xbf16, #tpu.memory_space<vmem>>, %arg6: memref<32x32xbf16, #tpu.memory_space<vmem>>, %arg7: memref<32x31xf32, #tpu.memory_space<vmem>>, %arg8: memref<32x256xf32, #tpu.memory_space<vmem>>) attributes {dimension_semantics = [#tpu.dimension_semantics<parallel>], iteration_bounds = array<i64: 2>, scalar_prefetch = 0 : i64, scratch_operands = 0 : i64, tpu.core_type = #tpu.core_type<tc>, window_params = [{transform_indices = @transform_0, window_bounds = array<i64: 32, 256>}, {pipeline_mode = #tpu.pipeline_mode<synchronous>, transform_indices = @transform_1, window_bounds = array<i64: 64, 128>}, {pipeline_mode = #tpu.pipeline_mode<synchronous>, transform_indices = @transform_2, window_bounds = array<i64: 32, 32>}, {pipeline_mode = #tpu.pipeline_mode<synchronous>, transform_indices = @transform_3, window_bounds = array<i64: 32, 32>}, {pipeline_mode = #tpu.pipeline_mode<synchronous>, transform_indices = @transform_4, window_bounds = array<i64: 32, 32>}, {pipeline_mode = #tpu.pipeline_mode<synchronous>, transform_indices = @transform_5, window_bounds = array<i64: 32, 32>}, {pipeline_mode = #tpu.pipeline_mode<synchronous>, transform_indices = @transform_6, window_bounds = array<i64: 32, 31>}, {transform_indices = @transform_7, window_bounds = array<i64: 32, 256>}]} {
    %c0 = arith.constant 0 : index
    %c0_0 = arith.constant 0 : index
    %0 = vector.load %arg2[%c0, %c0_0] : memref<64x128xf32, #tpu.memory_space<vmem>>, vector<64x128xf32>
    %1 = vector.extract_strided_slice %0 {offsets = [0, 0], sizes = [32, 128], strides = [1, 1]} : vector<64x128xf32> to vector<32x128xf32>
    %2 = vector.extract_strided_slice %0 {offsets = [32, 0], sizes = [32, 128], strides = [1, 1]} : vector<64x128xf32> to vector<32x128xf32>
    %c0_1 = arith.constant 0 : index
    %c0_2 = arith.constant 0 : index
    %3 = vector.load %arg1[%c0_1, %c0_2] : memref<32x256xf32, #tpu.memory_space<vmem>>, vector<32x128xf32>
    %4 = vector.shape_cast %3 : vector<32x128xf32> to vector<1x32x128xf32>
    %cst = arith.constant dense<0.000000e+00> : vector<1xf32>
    %5 = vector.multi_reduction <add>, %4, %cst [1, 2] : vector<1x32x128xf32> to vector<1xf32>
    %6 = vector.shape_cast %5 : vector<1xf32> to vector<1x1x1xf32>
    %7 = vector.extract %6[0, 0, 0] : f32 from vector<1x1x1xf32>
    %cst_3 = arith.constant 4.096000e+03 : f32
    %8 = arith.divf %7, %cst_3 : f32
    %9 = vector.broadcast %8 : f32 to vector<32x128xf32>
    %10 = arith.subf %3, %9 : vector<32x128xf32>
    %11 = arith.mulf %10, %10 : vector<32x128xf32>
    %12 = vector.shape_cast %11 : vector<32x128xf32> to vector<1x32x128xf32>
    %cst_4 = arith.constant dense<0.000000e+00> : vector<1xf32>
    %13 = vector.multi_reduction <add>, %12, %cst_4 [1, 2] : vector<1x32x128xf32> to vector<1xf32>
    %14 = vector.shape_cast %13 : vector<1xf32> to vector<1x1x1xf32>
    %15 = vector.extract %14[0, 0, 0] : f32 from vector<1x1x1xf32>
    %cst_5 = arith.constant 4.096000e+03 : f32
    %16 = arith.divf %15, %cst_5 : f32
    %cst_6 = arith.constant 9.99999974E-6 : f32
    %17 = arith.addf %16, %cst_6 : f32
    %18 = math.rsqrt %17 : f32
    %19 = vector.broadcast %18 : f32 to vector<32x128xf32>
    %20 = arith.mulf %10, %19 : vector<32x128xf32>
    %21 = arith.mulf %20, %1 : vector<32x128xf32>
    %22 = arith.addf %21, %2 : vector<32x128xf32>
    %c0_7 = arith.constant 0 : index
    %c128 = arith.constant 128 : index
    %23 = vector.load %arg1[%c0_7, %c128] : memref<32x256xf32, #tpu.memory_space<vmem>>, vector<32x128xf32>
    %24 = vector.shape_cast %23 : vector<32x128xf32> to vector<1x32x128xf32>
    %cst_8 = arith.constant dense<0.000000e+00> : vector<1xf32>
    %25 = vector.multi_reduction <add>, %24, %cst_8 [1, 2] : vector<1x32x128xf32> to vector<1xf32>
    %26 = vector.shape_cast %25 : vector<1xf32> to vector<1x1x1xf32>
    %27 = vector.extract %26[0, 0, 0] : f32 from vector<1x1x1xf32>
    %cst_9 = arith.constant 4.096000e+03 : f32
    %28 = arith.divf %27, %cst_9 : f32
    %29 = vector.broadcast %28 : f32 to vector<32x128xf32>
    %30 = arith.subf %23, %29 : vector<32x128xf32>
    %31 = arith.mulf %30, %30 : vector<32x128xf32>
    %32 = vector.shape_cast %31 : vector<32x128xf32> to vector<1x32x128xf32>
    %cst_10 = arith.constant dense<0.000000e+00> : vector<1xf32>
    %33 = vector.multi_reduction <add>, %32, %cst_10 [1, 2] : vector<1x32x128xf32> to vector<1xf32>
    %34 = vector.shape_cast %33 : vector<1xf32> to vector<1x1x1xf32>
    %35 = vector.extract %34[0, 0, 0] : f32 from vector<1x1x1xf32>
    %cst_11 = arith.constant 4.096000e+03 : f32
    %36 = arith.divf %35, %cst_11 : f32
    %cst_12 = arith.constant 9.99999974E-6 : f32
    %37 = arith.addf %36, %cst_12 : f32
    %38 = math.rsqrt %37 : f32
    %39 = vector.broadcast %38 : f32 to vector<32x128xf32>
    %40 = arith.mulf %30, %39 : vector<32x128xf32>
    %41 = arith.mulf %40, %1 : vector<32x128xf32>
    %42 = arith.addf %41, %2 : vector<32x128xf32>
    %43 = tpu.concatenate %22, %42 in 1 : vector<32x128xf32>, vector<32x128xf32> -> vector<32x256xf32>
    %44 = arith.truncf %43 : vector<32x256xf32> to vector<32x256xbf16>
    %c0_13 = arith.constant 0 : index
    %c0_14 = arith.constant 0 : index
    %45 = vector.load %arg7[%c0_13, %c0_14] : memref<32x31xf32, #tpu.memory_space<vmem>>, vector<32x31xf32>
    %46 = vector.extract_strided_slice %45 {offsets = [0, 27], sizes = [32, 1], strides = [1, 1]} : vector<32x31xf32> to vector<32x1xf32>
    %47 = vector.extract_strided_slice %45 {offsets = [0, 28], sizes = [32, 1], strides = [1, 1]} : vector<32x31xf32> to vector<32x1xf32>
    %48 = vector.extract_strided_slice %45 {offsets = [0, 29], sizes = [32, 1], strides = [1, 1]} : vector<32x31xf32> to vector<32x1xf32>
    %49 = vector.extract_strided_slice %45 {offsets = [0, 30], sizes = [32, 1], strides = [1, 1]} : vector<32x31xf32> to vector<32x1xf32>
    %c0_15 = arith.constant 0 : index
    %c0_16 = arith.constant 0 : index
    %50 = vector.load %arg3[%c0_15, %c0_16] : memref<32x32xbf16, #tpu.memory_space<vmem>>, vector<32x32xbf16>
    %cst_17 = arith.constant dense<0.000000e+00> : vector<32x256xf32>
    %51 = tpu.matmul %50, %44, %cst_17 {dimension_numbers = #tpu.dot_dimension_numbers<[1], [0], [0], [1], [0, 0, 1, 1], [], []>} : vector<32x32xbf16>, vector<32x256xbf16>, vector<32x256xf32> -> vector<32x256xf32>
    %52 = vector.broadcast %48 : vector<32x1xf32> to vector<32x256xf32>
    %53 = arith.addf %51, %52 : vector<32x256xf32>
    %c0_18 = arith.constant 0 : index
    %c0_19 = arith.constant 0 : index
    %54 = vector.load %arg4[%c0_18, %c0_19] : memref<32x32xbf16, #tpu.memory_space<vmem>>, vector<32x32xbf16>
    %cst_20 = arith.constant dense<0.000000e+00> : vector<32x256xf32>
    %55 = tpu.matmul %54, %44, %cst_20 {dimension_numbers = #tpu.dot_dimension_numbers<[1], [0], [0], [1], [0, 0, 1, 1], [], []>} : vector<32x32xbf16>, vector<32x256xbf16>, vector<32x256xf32> -> vector<32x256xf32>
    %56 = vector.broadcast %49 : vector<32x1xf32> to vector<32x256xf32>
    %57 = arith.addf %55, %56 : vector<32x256xf32>
    %58 = tpu.iota {dimensions = array<i32: 1>} : vector<1x128xi32>
    %59 = tpu.concatenate %58, %58 in 1 : vector<1x128xi32>, vector<1x128xi32> -> vector<1x256xi32>
    %60 = vector.extract_strided_slice %53 {offsets = [0, 0], sizes = [8, 256], strides = [1, 1]} : vector<32x256xf32> to vector<8x256xf32>
    %61 = vector.extract_strided_slice %45 {offsets = [0, 0], sizes = [8, 7], strides = [1, 1]} : vector<32x31xf32> to vector<8x7xf32>
    %62 = vector.extract_strided_slice %45 {offsets = [0, 7], sizes = [8, 7], strides = [1, 1]} : vector<32x31xf32> to vector<8x7xf32>
    %63 = vector.extract_strided_slice %45 {offsets = [0, 14], sizes = [8, 9], strides = [1, 1]} : vector<32x31xf32> to vector<8x9xf32>
    %64 = vector.extract_strided_slice %45 {offsets = [0, 23], sizes = [8, 1], strides = [1, 1]} : vector<32x31xf32> to vector<8x1xf32>
    %65 = vector.extract_strided_slice %45 {offsets = [0, 24], sizes = [8, 1], strides = [1, 1]} : vector<32x31xf32> to vector<8x1xf32>
    %66 = vector.extract_strided_slice %45 {offsets = [0, 25], sizes = [8, 1], strides = [1, 1]} : vector<32x31xf32> to vector<8x1xf32>
    %cst_21 = arith.constant 0.000000e+00 : f32
    %67 = vector.broadcast %cst_21 : f32 to vector<8x256xf32>
    %cst_22 = arith.constant 0.000000e+00 : f32
    %68 = vector.broadcast %cst_22 : f32 to vector<8x256xf32>
    %69 = vector.extract_strided_slice %61 {offsets = [0, 0], sizes = [8, 1], strides = [1, 1]} : vector<8x7xf32> to vector<8x1xf32>
    %70 = vector.broadcast %69 : vector<8x1xf32> to vector<8x256xf32>
    %71 = arith.mulf %70, %60 : vector<8x256xf32>
    %72 = arith.addf %67, %71 : vector<8x256xf32>
    %73 = vector.extract_strided_slice %62 {offsets = [0, 0], sizes = [8, 1], strides = [1, 1]} : vector<8x7xf32> to vector<8x1xf32>
    %74 = vector.broadcast %73 : vector<8x1xf32> to vector<8x256xf32>
    %75 = arith.mulf %74, %60 : vector<8x256xf32>
    %76 = arith.addf %68, %75 : vector<8x256xf32>
    %77 = vector.broadcast %64 : vector<8x1xf32> to vector<8x256xf32>
    %78 = arith.addf %72, %77 : vector<8x256xf32>
    %79 = vector.broadcast %65 : vector<8x1xf32> to vector<8x256xf32>
    %80 = arith.addf %76, %79 : vector<8x256xf32>
    %cst_23 = arith.constant 0.000000e+00 : f32
    %81 = vector.broadcast %cst_23 : f32 to vector<8x256xf32>
    %82 = vector.extract_strided_slice %63 {offsets = [0, 0], sizes = [8, 1], strides = [1, 1]} : vector<8x9xf32> to vector<8x1xf32>
    %c-1_i32 = arith.constant -1 : i32
    %83 = vector.broadcast %c-1_i32 : i32 to vector<1x256xi32>
    %84 = arith.addi %59, %83 : vector<1x256xi32>
    %c0_i32 = arith.constant 0 : i32
    %85 = vector.broadcast %c0_i32 : i32 to vector<1x256xi32>
    %86 = arith.cmpi sge, %84, %85 : vector<1x256xi32>
    %c-1_i32_24 = arith.constant -1 : i32
    %87 = vector.broadcast %c-1_i32_24 : i32 to vector<1x256xi32>
    %88 = arith.addi %59, %87 : vector<1x256xi32>
    %c128_i32 = arith.constant 128 : i32
    %89 = vector.broadcast %c128_i32 : i32 to vector<1x256xi32>
    %90 = arith.cmpi slt, %88, %89 : vector<1x256xi32>
    %91 = arith.andi %86, %90 : vector<1x256xi1>
    %92 = arith.extui %91 : vector<1x256xi1> to vector<1x256xi32>
    %93 = arith.sitofp %92 : vector<1x256xi32> to vector<1x256xf32>
    %c1_i32 = arith.constant 1 : i32
    %94 = tpu.dynamic_rotate %78 by %c1_i32 dim 1 : vector<8x256xf32>, i32 -> vector<8x256xf32>
    %95 = vector.broadcast %93 : vector<1x256xf32> to vector<8x256xf32>
    %96 = arith.mulf %94, %95 : vector<8x256xf32>
    %97 = vector.broadcast %82 : vector<8x1xf32> to vector<8x256xf32>
    %98 = arith.mulf %97, %96 : vector<8x256xf32>
    %99 = arith.addf %81, %98 : vector<8x256xf32>
    %100 = vector.extract_strided_slice %63 {offsets = [0, 1], sizes = [8, 1], strides = [1, 1]} : vector<8x9xf32> to vector<8x1xf32>
    %101 = vector.broadcast %100 : vector<8x1xf32> to vector<8x256xf32>
    %102 = arith.mulf %101, %78 : vector<8x256xf32>
    %103 = arith.addf %99, %102 : vector<8x256xf32>
    %104 = vector.extract_strided_slice %63 {offsets = [0, 2], sizes = [8, 1], strides = [1, 1]} : vector<8x9xf32> to vector<8x1xf32>
    %c1_i32_25 = arith.constant 1 : i32
    %105 = vector.broadcast %c1_i32_25 : i32 to vector<1x256xi32>
    %106 = arith.addi %59, %105 : vector<1x256xi32>
    %c0_i32_26 = arith.constant 0 : i32
    %107 = vector.broadcast %c0_i32_26 : i32 to vector<1x256xi32>
    %108 = arith.cmpi sge, %106, %107 : vector<1x256xi32>
    %c1_i32_27 = arith.constant 1 : i32
    %109 = vector.broadcast %c1_i32_27 : i32 to vector<1x256xi32>
    %110 = arith.addi %59, %109 : vector<1x256xi32>
    %c128_i32_28 = arith.constant 128 : i32
    %111 = vector.broadcast %c128_i32_28 : i32 to vector<1x256xi32>
    %112 = arith.cmpi slt, %110, %111 : vector<1x256xi32>
    %113 = arith.andi %108, %112 : vector<1x256xi1>
    %114 = arith.extui %113 : vector<1x256xi1> to vector<1x256xi32>
    %115 = arith.sitofp %114 : vector<1x256xi32> to vector<1x256xf32>
    %c255_i32 = arith.constant 255 : i32
    %116 = tpu.dynamic_rotate %78 by %c255_i32 dim 1 : vector<8x256xf32>, i32 -> vector<8x256xf32>
    %117 = vector.broadcast %115 : vector<1x256xf32> to vector<8x256xf32>
    %118 = arith.mulf %116, %117 : vector<8x256xf32>
    %119 = vector.broadcast %104 : vector<8x1xf32> to vector<8x256xf32>
    %120 = arith.mulf %119, %118 : vector<8x256xf32>
    %121 = arith.addf %103, %120 : vector<8x256xf32>
    %122 = vector.broadcast %66 : vector<8x1xf32> to vector<8x256xf32>
    %123 = arith.addf %121, %122 : vector<8x256xf32>
    %124 = vector.extract_strided_slice %53 {offsets = [8, 0], sizes = [8, 256], strides = [1, 1]} : vector<32x256xf32> to vector<8x256xf32>
    %125 = vector.extract_strided_slice %45 {offsets = [8, 0], sizes = [8, 7], strides = [1, 1]} : vector<32x31xf32> to vector<8x7xf32>
    %126 = vector.extract_strided_slice %45 {offsets = [8, 7], sizes = [8, 7], strides = [1, 1]} : vector<32x31xf32> to vector<8x7xf32>
    %127 = vector.extract_strided_slice %45 {offsets = [8, 14], sizes = [8, 9], strides = [1, 1]} : vector<32x31xf32> to vector<8x9xf32>
    %128 = vector.extract_strided_slice %45 {offsets = [8, 23], sizes = [8, 1], strides = [1, 1]} : vector<32x31xf32> to vector<8x1xf32>
    %129 = vector.extract_strided_slice %45 {offsets = [8, 24], sizes = [8, 1], strides = [1, 1]} : vector<32x31xf32> to vector<8x1xf32>
    %130 = vector.extract_strided_slice %45 {offsets = [8, 25], sizes = [8, 1], strides = [1, 1]} : vector<32x31xf32> to vector<8x1xf32>
    %cst_29 = arith.constant 0.000000e+00 : f32
    %131 = vector.broadcast %cst_29 : f32 to vector<8x256xf32>
    %cst_30 = arith.constant 0.000000e+00 : f32
    %132 = vector.broadcast %cst_30 : f32 to vector<8x256xf32>
    %c-1_i32_31 = arith.constant -1 : i32
    %133 = vector.broadcast %c-1_i32_31 : i32 to vector<1x256xi32>
    %134 = arith.addi %59, %133 : vector<1x256xi32>
    %c0_i32_32 = arith.constant 0 : i32
    %135 = vector.broadcast %c0_i32_32 : i32 to vector<1x256xi32>
    %136 = arith.cmpi sge, %134, %135 : vector<1x256xi32>
    %c-1_i32_33 = arith.constant -1 : i32
    %137 = vector.broadcast %c-1_i32_33 : i32 to vector<1x256xi32>
    %138 = arith.addi %59, %137 : vector<1x256xi32>
    %c128_i32_34 = arith.constant 128 : i32
    %139 = vector.broadcast %c128_i32_34 : i32 to vector<1x256xi32>
    %140 = arith.cmpi slt, %138, %139 : vector<1x256xi32>
    %141 = arith.andi %136, %140 : vector<1x256xi1>
    %142 = arith.extui %141 : vector<1x256xi1> to vector<1x256xi32>
    %143 = arith.sitofp %142 : vector<1x256xi32> to vector<1x256xf32>
    %c1_i32_35 = arith.constant 1 : i32
    %144 = tpu.dynamic_rotate %124 by %c1_i32_35 dim 1 : vector<8x256xf32>, i32 -> vector<8x256xf32>
    %145 = vector.broadcast %143 : vector<1x256xf32> to vector<8x256xf32>
    %146 = arith.mulf %144, %145 : vector<8x256xf32>
    %147 = vector.extract_strided_slice %125 {offsets = [0, 0], sizes = [8, 1], strides = [1, 1]} : vector<8x7xf32> to vector<8x1xf32>
    %148 = vector.broadcast %147 : vector<8x1xf32> to vector<8x256xf32>
    %149 = arith.mulf %148, %146 : vector<8x256xf32>
    %150 = arith.addf %131, %149 : vector<8x256xf32>
    %151 = vector.extract_strided_slice %126 {offsets = [0, 0], sizes = [8, 1], strides = [1, 1]} : vector<8x7xf32> to vector<8x1xf32>
    %152 = vector.broadcast %151 : vector<8x1xf32> to vector<8x256xf32>
    %153 = arith.mulf %152, %146 : vector<8x256xf32>
    %154 = arith.addf %132, %153 : vector<8x256xf32>
    %155 = vector.extract_strided_slice %125 {offsets = [0, 1], sizes = [8, 1], strides = [1, 1]} : vector<8x7xf32> to vector<8x1xf32>
    %156 = vector.broadcast %155 : vector<8x1xf32> to vector<8x256xf32>
    %157 = arith.mulf %156, %124 : vector<8x256xf32>
    %158 = arith.addf %150, %157 : vector<8x256xf32>
    %159 = vector.extract_strided_slice %126 {offsets = [0, 1], sizes = [8, 1], strides = [1, 1]} : vector<8x7xf32> to vector<8x1xf32>
    %160 = vector.broadcast %159 : vector<8x1xf32> to vector<8x256xf32>
    %161 = arith.mulf %160, %124 : vector<8x256xf32>
    %162 = arith.addf %154, %161 : vector<8x256xf32>
    %c1_i32_36 = arith.constant 1 : i32
    %163 = vector.broadcast %c1_i32_36 : i32 to vector<1x256xi32>
    %164 = arith.addi %59, %163 : vector<1x256xi32>
    %c0_i32_37 = arith.constant 0 : i32
    %165 = vector.broadcast %c0_i32_37 : i32 to vector<1x256xi32>
    %166 = arith.cmpi sge, %164, %165 : vector<1x256xi32>
    %c1_i32_38 = arith.constant 1 : i32
    %167 = vector.broadcast %c1_i32_38 : i32 to vector<1x256xi32>
    %168 = arith.addi %59, %167 : vector<1x256xi32>
    %c128_i32_39 = arith.constant 128 : i32
    %169 = vector.broadcast %c128_i32_39 : i32 to vector<1x256xi32>
    %170 = arith.cmpi slt, %168, %169 : vector<1x256xi32>
    %171 = arith.andi %166, %170 : vector<1x256xi1>
    %172 = arith.extui %171 : vector<1x256xi1> to vector<1x256xi32>
    %173 = arith.sitofp %172 : vector<1x256xi32> to vector<1x256xf32>
    %c255_i32_40 = arith.constant 255 : i32
    %174 = tpu.dynamic_rotate %124 by %c255_i32_40 dim 1 : vector<8x256xf32>, i32 -> vector<8x256xf32>
    %175 = vector.broadcast %173 : vector<1x256xf32> to vector<8x256xf32>
    %176 = arith.mulf %174, %175 : vector<8x256xf32>
    %177 = vector.extract_strided_slice %125 {offsets = [0, 2], sizes = [8, 1], strides = [1, 1]} : vector<8x7xf32> to vector<8x1xf32>
    %178 = vector.broadcast %177 : vector<8x1xf32> to vector<8x256xf32>
    %179 = arith.mulf %178, %176 : vector<8x256xf32>
    %180 = arith.addf %158, %179 : vector<8x256xf32>
    %181 = vector.extract_strided_slice %126 {offsets = [0, 2], sizes = [8, 1], strides = [1, 1]} : vector<8x7xf32> to vector<8x1xf32>
    %182 = vector.broadcast %181 : vector<8x1xf32> to vector<8x256xf32>
    %183 = arith.mulf %182, %176 : vector<8x256xf32>
    %184 = arith.addf %162, %183 : vector<8x256xf32>
    %185 = vector.broadcast %128 : vector<8x1xf32> to vector<8x256xf32>
    %186 = arith.addf %180, %185 : vector<8x256xf32>
    %187 = vector.broadcast %129 : vector<8x1xf32> to vector<8x256xf32>
    %188 = arith.addf %184, %187 : vector<8x256xf32>
    %cst_41 = arith.constant 0.000000e+00 : f32
    %189 = vector.broadcast %cst_41 : f32 to vector<8x256xf32>
    %190 = vector.extract_strided_slice %127 {offsets = [0, 0], sizes = [8, 1], strides = [1, 1]} : vector<8x9xf32> to vector<8x1xf32>
    %c-4_i32 = arith.constant -4 : i32
    %191 = vector.broadcast %c-4_i32 : i32 to vector<1x256xi32>
    %192 = arith.addi %59, %191 : vector<1x256xi32>
    %c0_i32_42 = arith.constant 0 : i32
    %193 = vector.broadcast %c0_i32_42 : i32 to vector<1x256xi32>
    %194 = arith.cmpi sge, %192, %193 : vector<1x256xi32>
    %c-4_i32_43 = arith.constant -4 : i32
    %195 = vector.broadcast %c-4_i32_43 : i32 to vector<1x256xi32>
    %196 = arith.addi %59, %195 : vector<1x256xi32>
    %c128_i32_44 = arith.constant 128 : i32
    %197 = vector.broadcast %c128_i32_44 : i32 to vector<1x256xi32>
    %198 = arith.cmpi slt, %196, %197 : vector<1x256xi32>
    %199 = arith.andi %194, %198 : vector<1x256xi1>
    %200 = arith.extui %199 : vector<1x256xi1> to vector<1x256xi32>
    %201 = arith.sitofp %200 : vector<1x256xi32> to vector<1x256xf32>
    %c4_i32 = arith.constant 4 : i32
    %202 = tpu.dynamic_rotate %186 by %c4_i32 dim 1 : vector<8x256xf32>, i32 -> vector<8x256xf32>
    %203 = vector.broadcast %201 : vector<1x256xf32> to vector<8x256xf32>
    %204 = arith.mulf %202, %203 : vector<8x256xf32>
    %205 = vector.broadcast %190 : vector<8x1xf32> to vector<8x256xf32>
    %206 = arith.mulf %205, %204 : vector<8x256xf32>
    %207 = arith.addf %189, %206 : vector<8x256xf32>
    %208 = vector.extract_strided_slice %127 {offsets = [0, 1], sizes = [8, 1], strides = [1, 1]} : vector<8x9xf32> to vector<8x1xf32>
    %c-2_i32 = arith.constant -2 : i32
    %209 = vector.broadcast %c-2_i32 : i32 to vector<1x256xi32>
    %210 = arith.addi %59, %209 : vector<1x256xi32>
    %c0_i32_45 = arith.constant 0 : i32
    %211 = vector.broadcast %c0_i32_45 : i32 to vector<1x256xi32>
    %212 = arith.cmpi sge, %210, %211 : vector<1x256xi32>
    %c-2_i32_46 = arith.constant -2 : i32
    %213 = vector.broadcast %c-2_i32_46 : i32 to vector<1x256xi32>
    %214 = arith.addi %59, %213 : vector<1x256xi32>
    %c128_i32_47 = arith.constant 128 : i32
    %215 = vector.broadcast %c128_i32_47 : i32 to vector<1x256xi32>
    %216 = arith.cmpi slt, %214, %215 : vector<1x256xi32>
    %217 = arith.andi %212, %216 : vector<1x256xi1>
    %218 = arith.extui %217 : vector<1x256xi1> to vector<1x256xi32>
    %219 = arith.sitofp %218 : vector<1x256xi32> to vector<1x256xf32>
    %c2_i32 = arith.constant 2 : i32
    %220 = tpu.dynamic_rotate %186 by %c2_i32 dim 1 : vector<8x256xf32>, i32 -> vector<8x256xf32>
    %221 = vector.broadcast %219 : vector<1x256xf32> to vector<8x256xf32>
    %222 = arith.mulf %220, %221 : vector<8x256xf32>
    %223 = vector.broadcast %208 : vector<8x1xf32> to vector<8x256xf32>
    %224 = arith.mulf %223, %222 : vector<8x256xf32>
    %225 = arith.addf %207, %224 : vector<8x256xf32>
    %226 = vector.extract_strided_slice %127 {offsets = [0, 2], sizes = [8, 1], strides = [1, 1]} : vector<8x9xf32> to vector<8x1xf32>
    %227 = vector.broadcast %226 : vector<8x1xf32> to vector<8x256xf32>
    %228 = arith.mulf %227, %186 : vector<8x256xf32>
    %229 = arith.addf %225, %228 : vector<8x256xf32>
    %230 = vector.extract_strided_slice %127 {offsets = [0, 3], sizes = [8, 1], strides = [1, 1]} : vector<8x9xf32> to vector<8x1xf32>
    %c2_i32_48 = arith.constant 2 : i32
    %231 = vector.broadcast %c2_i32_48 : i32 to vector<1x256xi32>
    %232 = arith.addi %59, %231 : vector<1x256xi32>
    %c0_i32_49 = arith.constant 0 : i32
    %233 = vector.broadcast %c0_i32_49 : i32 to vector<1x256xi32>
    %234 = arith.cmpi sge, %232, %233 : vector<1x256xi32>
    %c2_i32_50 = arith.constant 2 : i32
    %235 = vector.broadcast %c2_i32_50 : i32 to vector<1x256xi32>
    %236 = arith.addi %59, %235 : vector<1x256xi32>
    %c128_i32_51 = arith.constant 128 : i32
    %237 = vector.broadcast %c128_i32_51 : i32 to vector<1x256xi32>
    %238 = arith.cmpi slt, %236, %237 : vector<1x256xi32>
    %239 = arith.andi %234, %238 : vector<1x256xi1>
    %240 = arith.extui %239 : vector<1x256xi1> to vector<1x256xi32>
    %241 = arith.sitofp %240 : vector<1x256xi32> to vector<1x256xf32>
    %c254_i32 = arith.constant 254 : i32
    %242 = tpu.dynamic_rotate %186 by %c254_i32 dim 1 : vector<8x256xf32>, i32 -> vector<8x256xf32>
    %243 = vector.broadcast %241 : vector<1x256xf32> to vector<8x256xf32>
    %244 = arith.mulf %242, %243 : vector<8x256xf32>
    %245 = vector.broadcast %230 : vector<8x1xf32> to vector<8x256xf32>
    %246 = arith.mulf %245, %244 : vector<8x256xf32>
    %247 = arith.addf %229, %246 : vector<8x256xf32>
    %248 = vector.extract_strided_slice %127 {offsets = [0, 4], sizes = [8, 1], strides = [1, 1]} : vector<8x9xf32> to vector<8x1xf32>
    %c4_i32_52 = arith.constant 4 : i32
    %249 = vector.broadcast %c4_i32_52 : i32 to vector<1x256xi32>
    %250 = arith.addi %59, %249 : vector<1x256xi32>
    %c0_i32_53 = arith.constant 0 : i32
    %251 = vector.broadcast %c0_i32_53 : i32 to vector<1x256xi32>
    %252 = arith.cmpi sge, %250, %251 : vector<1x256xi32>
    %c4_i32_54 = arith.constant 4 : i32
    %253 = vector.broadcast %c4_i32_54 : i32 to vector<1x256xi32>
    %254 = arith.addi %59, %253 : vector<1x256xi32>
    %c128_i32_55 = arith.constant 128 : i32
    %255 = vector.broadcast %c128_i32_55 : i32 to vector<1x256xi32>
    %256 = arith.cmpi slt, %254, %255 : vector<1x256xi32>
    %257 = arith.andi %252, %256 : vector<1x256xi1>
    %258 = arith.extui %257 : vector<1x256xi1> to vector<1x256xi32>
    %259 = arith.sitofp %258 : vector<1x256xi32> to vector<1x256xf32>
    %c252_i32 = arith.constant 252 : i32
    %260 = tpu.dynamic_rotate %186 by %c252_i32 dim 1 : vector<8x256xf32>, i32 -> vector<8x256xf32>
    %261 = vector.broadcast %259 : vector<1x256xf32> to vector<8x256xf32>
    %262 = arith.mulf %260, %261 : vector<8x256xf32>
    %263 = vector.broadcast %248 : vector<8x1xf32> to vector<8x256xf32>
    %264 = arith.mulf %263, %262 : vector<8x256xf32>
    %265 = arith.addf %247, %264 : vector<8x256xf32>
    %266 = vector.broadcast %130 : vector<8x1xf32> to vector<8x256xf32>
    %267 = arith.addf %265, %266 : vector<8x256xf32>
    %268 = vector.extract_strided_slice %53 {offsets = [16, 0], sizes = [8, 256], strides = [1, 1]} : vector<32x256xf32> to vector<8x256xf32>
    %269 = vector.extract_strided_slice %45 {offsets = [16, 0], sizes = [8, 7], strides = [1, 1]} : vector<32x31xf32> to vector<8x7xf32>
    %270 = vector.extract_strided_slice %45 {offsets = [16, 7], sizes = [8, 7], strides = [1, 1]} : vector<32x31xf32> to vector<8x7xf32>
    %271 = vector.extract_strided_slice %45 {offsets = [16, 14], sizes = [8, 9], strides = [1, 1]} : vector<32x31xf32> to vector<8x9xf32>
    %272 = vector.extract_strided_slice %45 {offsets = [16, 23], sizes = [8, 1], strides = [1, 1]} : vector<32x31xf32> to vector<8x1xf32>
    %273 = vector.extract_strided_slice %45 {offsets = [16, 24], sizes = [8, 1], strides = [1, 1]} : vector<32x31xf32> to vector<8x1xf32>
    %274 = vector.extract_strided_slice %45 {offsets = [16, 25], sizes = [8, 1], strides = [1, 1]} : vector<32x31xf32> to vector<8x1xf32>
    %cst_56 = arith.constant 0.000000e+00 : f32
    %275 = vector.broadcast %cst_56 : f32 to vector<8x256xf32>
    %cst_57 = arith.constant 0.000000e+00 : f32
    %276 = vector.broadcast %cst_57 : f32 to vector<8x256xf32>
    %c-2_i32_58 = arith.constant -2 : i32
    %277 = vector.broadcast %c-2_i32_58 : i32 to vector<1x256xi32>
    %278 = arith.addi %59, %277 : vector<1x256xi32>
    %c0_i32_59 = arith.constant 0 : i32
    %279 = vector.broadcast %c0_i32_59 : i32 to vector<1x256xi32>
    %280 = arith.cmpi sge, %278, %279 : vector<1x256xi32>
    %c-2_i32_60 = arith.constant -2 : i32
    %281 = vector.broadcast %c-2_i32_60 : i32 to vector<1x256xi32>
    %282 = arith.addi %59, %281 : vector<1x256xi32>
    %c128_i32_61 = arith.constant 128 : i32
    %283 = vector.broadcast %c128_i32_61 : i32 to vector<1x256xi32>
    %284 = arith.cmpi slt, %282, %283 : vector<1x256xi32>
    %285 = arith.andi %280, %284 : vector<1x256xi1>
    %286 = arith.extui %285 : vector<1x256xi1> to vector<1x256xi32>
    %287 = arith.sitofp %286 : vector<1x256xi32> to vector<1x256xf32>
    %c2_i32_62 = arith.constant 2 : i32
    %288 = tpu.dynamic_rotate %268 by %c2_i32_62 dim 1 : vector<8x256xf32>, i32 -> vector<8x256xf32>
    %289 = vector.broadcast %287 : vector<1x256xf32> to vector<8x256xf32>
    %290 = arith.mulf %288, %289 : vector<8x256xf32>
    %291 = vector.extract_strided_slice %269 {offsets = [0, 0], sizes = [8, 1], strides = [1, 1]} : vector<8x7xf32> to vector<8x1xf32>
    %292 = vector.broadcast %291 : vector<8x1xf32> to vector<8x256xf32>
    %293 = arith.mulf %292, %290 : vector<8x256xf32>
    %294 = arith.addf %275, %293 : vector<8x256xf32>
    %295 = vector.extract_strided_slice %270 {offsets = [0, 0], sizes = [8, 1], strides = [1, 1]} : vector<8x7xf32> to vector<8x1xf32>
    %296 = vector.broadcast %295 : vector<8x1xf32> to vector<8x256xf32>
    %297 = arith.mulf %296, %290 : vector<8x256xf32>
    %298 = arith.addf %276, %297 : vector<8x256xf32>
    %c-1_i32_63 = arith.constant -1 : i32
    %299 = vector.broadcast %c-1_i32_63 : i32 to vector<1x256xi32>
    %300 = arith.addi %59, %299 : vector<1x256xi32>
    %c0_i32_64 = arith.constant 0 : i32
    %301 = vector.broadcast %c0_i32_64 : i32 to vector<1x256xi32>
    %302 = arith.cmpi sge, %300, %301 : vector<1x256xi32>
    %c-1_i32_65 = arith.constant -1 : i32
    %303 = vector.broadcast %c-1_i32_65 : i32 to vector<1x256xi32>
    %304 = arith.addi %59, %303 : vector<1x256xi32>
    %c128_i32_66 = arith.constant 128 : i32
    %305 = vector.broadcast %c128_i32_66 : i32 to vector<1x256xi32>
    %306 = arith.cmpi slt, %304, %305 : vector<1x256xi32>
    %307 = arith.andi %302, %306 : vector<1x256xi1>
    %308 = arith.extui %307 : vector<1x256xi1> to vector<1x256xi32>
    %309 = arith.sitofp %308 : vector<1x256xi32> to vector<1x256xf32>
    %c1_i32_67 = arith.constant 1 : i32
    %310 = tpu.dynamic_rotate %268 by %c1_i32_67 dim 1 : vector<8x256xf32>, i32 -> vector<8x256xf32>
    %311 = vector.broadcast %309 : vector<1x256xf32> to vector<8x256xf32>
    %312 = arith.mulf %310, %311 : vector<8x256xf32>
    %313 = vector.extract_strided_slice %269 {offsets = [0, 1], sizes = [8, 1], strides = [1, 1]} : vector<8x7xf32> to vector<8x1xf32>
    %314 = vector.broadcast %313 : vector<8x1xf32> to vector<8x256xf32>
    %315 = arith.mulf %314, %312 : vector<8x256xf32>
    %316 = arith.addf %294, %315 : vector<8x256xf32>
    %317 = vector.extract_strided_slice %270 {offsets = [0, 1], sizes = [8, 1], strides = [1, 1]} : vector<8x7xf32> to vector<8x1xf32>
    %318 = vector.broadcast %317 : vector<8x1xf32> to vector<8x256xf32>
    %319 = arith.mulf %318, %312 : vector<8x256xf32>
    %320 = arith.addf %298, %319 : vector<8x256xf32>
    %321 = vector.extract_strided_slice %269 {offsets = [0, 2], sizes = [8, 1], strides = [1, 1]} : vector<8x7xf32> to vector<8x1xf32>
    %322 = vector.broadcast %321 : vector<8x1xf32> to vector<8x256xf32>
    %323 = arith.mulf %322, %268 : vector<8x256xf32>
    %324 = arith.addf %316, %323 : vector<8x256xf32>
    %325 = vector.extract_strided_slice %270 {offsets = [0, 2], sizes = [8, 1], strides = [1, 1]} : vector<8x7xf32> to vector<8x1xf32>
    %326 = vector.broadcast %325 : vector<8x1xf32> to vector<8x256xf32>
    %327 = arith.mulf %326, %268 : vector<8x256xf32>
    %328 = arith.addf %320, %327 : vector<8x256xf32>
    %c1_i32_68 = arith.constant 1 : i32
    %329 = vector.broadcast %c1_i32_68 : i32 to vector<1x256xi32>
    %330 = arith.addi %59, %329 : vector<1x256xi32>
    %c0_i32_69 = arith.constant 0 : i32
    %331 = vector.broadcast %c0_i32_69 : i32 to vector<1x256xi32>
    %332 = arith.cmpi sge, %330, %331 : vector<1x256xi32>
    %c1_i32_70 = arith.constant 1 : i32
    %333 = vector.broadcast %c1_i32_70 : i32 to vector<1x256xi32>
    %334 = arith.addi %59, %333 : vector<1x256xi32>
    %c128_i32_71 = arith.constant 128 : i32
    %335 = vector.broadcast %c128_i32_71 : i32 to vector<1x256xi32>
    %336 = arith.cmpi slt, %334, %335 : vector<1x256xi32>
    %337 = arith.andi %332, %336 : vector<1x256xi1>
    %338 = arith.extui %337 : vector<1x256xi1> to vector<1x256xi32>
    %339 = arith.sitofp %338 : vector<1x256xi32> to vector<1x256xf32>
    %c255_i32_72 = arith.constant 255 : i32
    %340 = tpu.dynamic_rotate %268 by %c255_i32_72 dim 1 : vector<8x256xf32>, i32 -> vector<8x256xf32>
    %341 = vector.broadcast %339 : vector<1x256xf32> to vector<8x256xf32>
    %342 = arith.mulf %340, %341 : vector<8x256xf32>
    %343 = vector.extract_strided_slice %269 {offsets = [0, 3], sizes = [8, 1], strides = [1, 1]} : vector<8x7xf32> to vector<8x1xf32>
    %344 = vector.broadcast %343 : vector<8x1xf32> to vector<8x256xf32>
    %345 = arith.mulf %344, %342 : vector<8x256xf32>
    %346 = arith.addf %324, %345 : vector<8x256xf32>
    %347 = vector.extract_strided_slice %270 {offsets = [0, 3], sizes = [8, 1], strides = [1, 1]} : vector<8x7xf32> to vector<8x1xf32>
    %348 = vector.broadcast %347 : vector<8x1xf32> to vector<8x256xf32>
    %349 = arith.mulf %348, %342 : vector<8x256xf32>
    %350 = arith.addf %328, %349 : vector<8x256xf32>
    %c2_i32_73 = arith.constant 2 : i32
    %351 = vector.broadcast %c2_i32_73 : i32 to vector<1x256xi32>
    %352 = arith.addi %59, %351 : vector<1x256xi32>
    %c0_i32_74 = arith.constant 0 : i32
    %353 = vector.broadcast %c0_i32_74 : i32 to vector<1x256xi32>
    %354 = arith.cmpi sge, %352, %353 : vector<1x256xi32>
    %c2_i32_75 = arith.constant 2 : i32
    %355 = vector.broadcast %c2_i32_75 : i32 to vector<1x256xi32>
    %356 = arith.addi %59, %355 : vector<1x256xi32>
    %c128_i32_76 = arith.constant 128 : i32
    %357 = vector.broadcast %c128_i32_76 : i32 to vector<1x256xi32>
    %358 = arith.cmpi slt, %356, %357 : vector<1x256xi32>
    %359 = arith.andi %354, %358 : vector<1x256xi1>
    %360 = arith.extui %359 : vector<1x256xi1> to vector<1x256xi32>
    %361 = arith.sitofp %360 : vector<1x256xi32> to vector<1x256xf32>
    %c254_i32_77 = arith.constant 254 : i32
    %362 = tpu.dynamic_rotate %268 by %c254_i32_77 dim 1 : vector<8x256xf32>, i32 -> vector<8x256xf32>
    %363 = vector.broadcast %361 : vector<1x256xf32> to vector<8x256xf32>
    %364 = arith.mulf %362, %363 : vector<8x256xf32>
    %365 = vector.extract_strided_slice %269 {offsets = [0, 4], sizes = [8, 1], strides = [1, 1]} : vector<8x7xf32> to vector<8x1xf32>
    %366 = vector.broadcast %365 : vector<8x1xf32> to vector<8x256xf32>
    %367 = arith.mulf %366, %364 : vector<8x256xf32>
    %368 = arith.addf %346, %367 : vector<8x256xf32>
    %369 = vector.extract_strided_slice %270 {offsets = [0, 4], sizes = [8, 1], strides = [1, 1]} : vector<8x7xf32> to vector<8x1xf32>
    %370 = vector.broadcast %369 : vector<8x1xf32> to vector<8x256xf32>
    %371 = arith.mulf %370, %364 : vector<8x256xf32>
    %372 = arith.addf %350, %371 : vector<8x256xf32>
    %373 = vector.broadcast %272 : vector<8x1xf32> to vector<8x256xf32>
    %374 = arith.addf %368, %373 : vector<8x256xf32>
    %375 = vector.broadcast %273 : vector<8x1xf32> to vector<8x256xf32>
    %376 = arith.addf %372, %375 : vector<8x256xf32>
    %cst_78 = arith.constant 0.000000e+00 : f32
    %377 = vector.broadcast %cst_78 : f32 to vector<8x256xf32>
    %378 = vector.extract_strided_slice %271 {offsets = [0, 0], sizes = [8, 1], strides = [1, 1]} : vector<8x9xf32> to vector<8x1xf32>
    %c-9_i32 = arith.constant -9 : i32
    %379 = vector.broadcast %c-9_i32 : i32 to vector<1x256xi32>
    %380 = arith.addi %59, %379 : vector<1x256xi32>
    %c0_i32_79 = arith.constant 0 : i32
    %381 = vector.broadcast %c0_i32_79 : i32 to vector<1x256xi32>
    %382 = arith.cmpi sge, %380, %381 : vector<1x256xi32>
    %c-9_i32_80 = arith.constant -9 : i32
    %383 = vector.broadcast %c-9_i32_80 : i32 to vector<1x256xi32>
    %384 = arith.addi %59, %383 : vector<1x256xi32>
    %c128_i32_81 = arith.constant 128 : i32
    %385 = vector.broadcast %c128_i32_81 : i32 to vector<1x256xi32>
    %386 = arith.cmpi slt, %384, %385 : vector<1x256xi32>
    %387 = arith.andi %382, %386 : vector<1x256xi1>
    %388 = arith.extui %387 : vector<1x256xi1> to vector<1x256xi32>
    %389 = arith.sitofp %388 : vector<1x256xi32> to vector<1x256xf32>
    %c9_i32 = arith.constant 9 : i32
    %390 = tpu.dynamic_rotate %374 by %c9_i32 dim 1 : vector<8x256xf32>, i32 -> vector<8x256xf32>
    %391 = vector.broadcast %389 : vector<1x256xf32> to vector<8x256xf32>
    %392 = arith.mulf %390, %391 : vector<8x256xf32>
    %393 = vector.broadcast %378 : vector<8x1xf32> to vector<8x256xf32>
    %394 = arith.mulf %393, %392 : vector<8x256xf32>
    %395 = arith.addf %377, %394 : vector<8x256xf32>
    %396 = vector.extract_strided_slice %271 {offsets = [0, 1], sizes = [8, 1], strides = [1, 1]} : vector<8x9xf32> to vector<8x1xf32>
    %c-6_i32 = arith.constant -6 : i32
    %397 = vector.broadcast %c-6_i32 : i32 to vector<1x256xi32>
    %398 = arith.addi %59, %397 : vector<1x256xi32>
    %c0_i32_82 = arith.constant 0 : i32
    %399 = vector.broadcast %c0_i32_82 : i32 to vector<1x256xi32>
    %400 = arith.cmpi sge, %398, %399 : vector<1x256xi32>
    %c-6_i32_83 = arith.constant -6 : i32
    %401 = vector.broadcast %c-6_i32_83 : i32 to vector<1x256xi32>
    %402 = arith.addi %59, %401 : vector<1x256xi32>
    %c128_i32_84 = arith.constant 128 : i32
    %403 = vector.broadcast %c128_i32_84 : i32 to vector<1x256xi32>
    %404 = arith.cmpi slt, %402, %403 : vector<1x256xi32>
    %405 = arith.andi %400, %404 : vector<1x256xi1>
    %406 = arith.extui %405 : vector<1x256xi1> to vector<1x256xi32>
    %407 = arith.sitofp %406 : vector<1x256xi32> to vector<1x256xf32>
    %c6_i32 = arith.constant 6 : i32
    %408 = tpu.dynamic_rotate %374 by %c6_i32 dim 1 : vector<8x256xf32>, i32 -> vector<8x256xf32>
    %409 = vector.broadcast %407 : vector<1x256xf32> to vector<8x256xf32>
    %410 = arith.mulf %408, %409 : vector<8x256xf32>
    %411 = vector.broadcast %396 : vector<8x1xf32> to vector<8x256xf32>
    %412 = arith.mulf %411, %410 : vector<8x256xf32>
    %413 = arith.addf %395, %412 : vector<8x256xf32>
    %414 = vector.extract_strided_slice %271 {offsets = [0, 2], sizes = [8, 1], strides = [1, 1]} : vector<8x9xf32> to vector<8x1xf32>
    %c-3_i32 = arith.constant -3 : i32
    %415 = vector.broadcast %c-3_i32 : i32 to vector<1x256xi32>
    %416 = arith.addi %59, %415 : vector<1x256xi32>
    %c0_i32_85 = arith.constant 0 : i32
    %417 = vector.broadcast %c0_i32_85 : i32 to vector<1x256xi32>
    %418 = arith.cmpi sge, %416, %417 : vector<1x256xi32>
    %c-3_i32_86 = arith.constant -3 : i32
    %419 = vector.broadcast %c-3_i32_86 : i32 to vector<1x256xi32>
    %420 = arith.addi %59, %419 : vector<1x256xi32>
    %c128_i32_87 = arith.constant 128 : i32
    %421 = vector.broadcast %c128_i32_87 : i32 to vector<1x256xi32>
    %422 = arith.cmpi slt, %420, %421 : vector<1x256xi32>
    %423 = arith.andi %418, %422 : vector<1x256xi1>
    %424 = arith.extui %423 : vector<1x256xi1> to vector<1x256xi32>
    %425 = arith.sitofp %424 : vector<1x256xi32> to vector<1x256xf32>
    %c3_i32 = arith.constant 3 : i32
    %426 = tpu.dynamic_rotate %374 by %c3_i32 dim 1 : vector<8x256xf32>, i32 -> vector<8x256xf32>
    %427 = vector.broadcast %425 : vector<1x256xf32> to vector<8x256xf32>
    %428 = arith.mulf %426, %427 : vector<8x256xf32>
    %429 = vector.broadcast %414 : vector<8x1xf32> to vector<8x256xf32>
    %430 = arith.mulf %429, %428 : vector<8x256xf32>
    %431 = arith.addf %413, %430 : vector<8x256xf32>
    %432 = vector.extract_strided_slice %271 {offsets = [0, 3], sizes = [8, 1], strides = [1, 1]} : vector<8x9xf32> to vector<8x1xf32>
    %433 = vector.broadcast %432 : vector<8x1xf32> to vector<8x256xf32>
    %434 = arith.mulf %433, %374 : vector<8x256xf32>
    %435 = arith.addf %431, %434 : vector<8x256xf32>
    %436 = vector.extract_strided_slice %271 {offsets = [0, 4], sizes = [8, 1], strides = [1, 1]} : vector<8x9xf32> to vector<8x1xf32>
    %c3_i32_88 = arith.constant 3 : i32
    %437 = vector.broadcast %c3_i32_88 : i32 to vector<1x256xi32>
    %438 = arith.addi %59, %437 : vector<1x256xi32>
    %c0_i32_89 = arith.constant 0 : i32
    %439 = vector.broadcast %c0_i32_89 : i32 to vector<1x256xi32>
    %440 = arith.cmpi sge, %438, %439 : vector<1x256xi32>
    %c3_i32_90 = arith.constant 3 : i32
    %441 = vector.broadcast %c3_i32_90 : i32 to vector<1x256xi32>
    %442 = arith.addi %59, %441 : vector<1x256xi32>
    %c128_i32_91 = arith.constant 128 : i32
    %443 = vector.broadcast %c128_i32_91 : i32 to vector<1x256xi32>
    %444 = arith.cmpi slt, %442, %443 : vector<1x256xi32>
    %445 = arith.andi %440, %444 : vector<1x256xi1>
    %446 = arith.extui %445 : vector<1x256xi1> to vector<1x256xi32>
    %447 = arith.sitofp %446 : vector<1x256xi32> to vector<1x256xf32>
    %c253_i32 = arith.constant 253 : i32
    %448 = tpu.dynamic_rotate %374 by %c253_i32 dim 1 : vector<8x256xf32>, i32 -> vector<8x256xf32>
    %449 = vector.broadcast %447 : vector<1x256xf32> to vector<8x256xf32>
    %450 = arith.mulf %448, %449 : vector<8x256xf32>
    %451 = vector.broadcast %436 : vector<8x1xf32> to vector<8x256xf32>
    %452 = arith.mulf %451, %450 : vector<8x256xf32>
    %453 = arith.addf %435, %452 : vector<8x256xf32>
    %454 = vector.extract_strided_slice %271 {offsets = [0, 5], sizes = [8, 1], strides = [1, 1]} : vector<8x9xf32> to vector<8x1xf32>
    %c6_i32_92 = arith.constant 6 : i32
    %455 = vector.broadcast %c6_i32_92 : i32 to vector<1x256xi32>
    %456 = arith.addi %59, %455 : vector<1x256xi32>
    %c0_i32_93 = arith.constant 0 : i32
    %457 = vector.broadcast %c0_i32_93 : i32 to vector<1x256xi32>
    %458 = arith.cmpi sge, %456, %457 : vector<1x256xi32>
    %c6_i32_94 = arith.constant 6 : i32
    %459 = vector.broadcast %c6_i32_94 : i32 to vector<1x256xi32>
    %460 = arith.addi %59, %459 : vector<1x256xi32>
    %c128_i32_95 = arith.constant 128 : i32
    %461 = vector.broadcast %c128_i32_95 : i32 to vector<1x256xi32>
    %462 = arith.cmpi slt, %460, %461 : vector<1x256xi32>
    %463 = arith.andi %458, %462 : vector<1x256xi1>
    %464 = arith.extui %463 : vector<1x256xi1> to vector<1x256xi32>
    %465 = arith.sitofp %464 : vector<1x256xi32> to vector<1x256xf32>
    %c250_i32 = arith.constant 250 : i32
    %466 = tpu.dynamic_rotate %374 by %c250_i32 dim 1 : vector<8x256xf32>, i32 -> vector<8x256xf32>
    %467 = vector.broadcast %465 : vector<1x256xf32> to vector<8x256xf32>
    %468 = arith.mulf %466, %467 : vector<8x256xf32>
    %469 = vector.broadcast %454 : vector<8x1xf32> to vector<8x256xf32>
    %470 = arith.mulf %469, %468 : vector<8x256xf32>
    %471 = arith.addf %453, %470 : vector<8x256xf32>
    %472 = vector.extract_strided_slice %271 {offsets = [0, 6], sizes = [8, 1], strides = [1, 1]} : vector<8x9xf32> to vector<8x1xf32>
    %c9_i32_96 = arith.constant 9 : i32
    %473 = vector.broadcast %c9_i32_96 : i32 to vector<1x256xi32>
    %474 = arith.addi %59, %473 : vector<1x256xi32>
    %c0_i32_97 = arith.constant 0 : i32
    %475 = vector.broadcast %c0_i32_97 : i32 to vector<1x256xi32>
    %476 = arith.cmpi sge, %474, %475 : vector<1x256xi32>
    %c9_i32_98 = arith.constant 9 : i32
    %477 = vector.broadcast %c9_i32_98 : i32 to vector<1x256xi32>
    %478 = arith.addi %59, %477 : vector<1x256xi32>
    %c128_i32_99 = arith.constant 128 : i32
    %479 = vector.broadcast %c128_i32_99 : i32 to vector<1x256xi32>
    %480 = arith.cmpi slt, %478, %479 : vector<1x256xi32>
    %481 = arith.andi %476, %480 : vector<1x256xi1>
    %482 = arith.extui %481 : vector<1x256xi1> to vector<1x256xi32>
    %483 = arith.sitofp %482 : vector<1x256xi32> to vector<1x256xf32>
    %c247_i32 = arith.constant 247 : i32
    %484 = tpu.dynamic_rotate %374 by %c247_i32 dim 1 : vector<8x256xf32>, i32 -> vector<8x256xf32>
    %485 = vector.broadcast %483 : vector<1x256xf32> to vector<8x256xf32>
    %486 = arith.mulf %484, %485 : vector<8x256xf32>
    %487 = vector.broadcast %472 : vector<8x1xf32> to vector<8x256xf32>
    %488 = arith.mulf %487, %486 : vector<8x256xf32>
    %489 = arith.addf %471, %488 : vector<8x256xf32>
    %490 = vector.broadcast %274 : vector<8x1xf32> to vector<8x256xf32>
    %491 = arith.addf %489, %490 : vector<8x256xf32>
    %492 = vector.extract_strided_slice %53 {offsets = [24, 0], sizes = [8, 256], strides = [1, 1]} : vector<32x256xf32> to vector<8x256xf32>
    %493 = vector.extract_strided_slice %45 {offsets = [24, 0], sizes = [8, 7], strides = [1, 1]} : vector<32x31xf32> to vector<8x7xf32>
    %494 = vector.extract_strided_slice %45 {offsets = [24, 7], sizes = [8, 7], strides = [1, 1]} : vector<32x31xf32> to vector<8x7xf32>
    %495 = vector.extract_strided_slice %45 {offsets = [24, 14], sizes = [8, 9], strides = [1, 1]} : vector<32x31xf32> to vector<8x9xf32>
    %496 = vector.extract_strided_slice %45 {offsets = [24, 23], sizes = [8, 1], strides = [1, 1]} : vector<32x31xf32> to vector<8x1xf32>
    %497 = vector.extract_strided_slice %45 {offsets = [24, 24], sizes = [8, 1], strides = [1, 1]} : vector<32x31xf32> to vector<8x1xf32>
    %498 = vector.extract_strided_slice %45 {offsets = [24, 25], sizes = [8, 1], strides = [1, 1]} : vector<32x31xf32> to vector<8x1xf32>
    %cst_100 = arith.constant 0.000000e+00 : f32
    %499 = vector.broadcast %cst_100 : f32 to vector<8x256xf32>
    %cst_101 = arith.constant 0.000000e+00 : f32
    %500 = vector.broadcast %cst_101 : f32 to vector<8x256xf32>
    %c-3_i32_102 = arith.constant -3 : i32
    %501 = vector.broadcast %c-3_i32_102 : i32 to vector<1x256xi32>
    %502 = arith.addi %59, %501 : vector<1x256xi32>
    %c0_i32_103 = arith.constant 0 : i32
    %503 = vector.broadcast %c0_i32_103 : i32 to vector<1x256xi32>
    %504 = arith.cmpi sge, %502, %503 : vector<1x256xi32>
    %c-3_i32_104 = arith.constant -3 : i32
    %505 = vector.broadcast %c-3_i32_104 : i32 to vector<1x256xi32>
    %506 = arith.addi %59, %505 : vector<1x256xi32>
    %c128_i32_105 = arith.constant 128 : i32
    %507 = vector.broadcast %c128_i32_105 : i32 to vector<1x256xi32>
    %508 = arith.cmpi slt, %506, %507 : vector<1x256xi32>
    %509 = arith.andi %504, %508 : vector<1x256xi1>
    %510 = arith.extui %509 : vector<1x256xi1> to vector<1x256xi32>
    %511 = arith.sitofp %510 : vector<1x256xi32> to vector<1x256xf32>
    %c3_i32_106 = arith.constant 3 : i32
    %512 = tpu.dynamic_rotate %492 by %c3_i32_106 dim 1 : vector<8x256xf32>, i32 -> vector<8x256xf32>
    %513 = vector.broadcast %511 : vector<1x256xf32> to vector<8x256xf32>
    %514 = arith.mulf %512, %513 : vector<8x256xf32>
    %515 = vector.extract_strided_slice %493 {offsets = [0, 0], sizes = [8, 1], strides = [1, 1]} : vector<8x7xf32> to vector<8x1xf32>
    %516 = vector.broadcast %515 : vector<8x1xf32> to vector<8x256xf32>
    %517 = arith.mulf %516, %514 : vector<8x256xf32>
    %518 = arith.addf %499, %517 : vector<8x256xf32>
    %519 = vector.extract_strided_slice %494 {offsets = [0, 0], sizes = [8, 1], strides = [1, 1]} : vector<8x7xf32> to vector<8x1xf32>
    %520 = vector.broadcast %519 : vector<8x1xf32> to vector<8x256xf32>
    %521 = arith.mulf %520, %514 : vector<8x256xf32>
    %522 = arith.addf %500, %521 : vector<8x256xf32>
    %c-2_i32_107 = arith.constant -2 : i32
    %523 = vector.broadcast %c-2_i32_107 : i32 to vector<1x256xi32>
    %524 = arith.addi %59, %523 : vector<1x256xi32>
    %c0_i32_108 = arith.constant 0 : i32
    %525 = vector.broadcast %c0_i32_108 : i32 to vector<1x256xi32>
    %526 = arith.cmpi sge, %524, %525 : vector<1x256xi32>
    %c-2_i32_109 = arith.constant -2 : i32
    %527 = vector.broadcast %c-2_i32_109 : i32 to vector<1x256xi32>
    %528 = arith.addi %59, %527 : vector<1x256xi32>
    %c128_i32_110 = arith.constant 128 : i32
    %529 = vector.broadcast %c128_i32_110 : i32 to vector<1x256xi32>
    %530 = arith.cmpi slt, %528, %529 : vector<1x256xi32>
    %531 = arith.andi %526, %530 : vector<1x256xi1>
    %532 = arith.extui %531 : vector<1x256xi1> to vector<1x256xi32>
    %533 = arith.sitofp %532 : vector<1x256xi32> to vector<1x256xf32>
    %c2_i32_111 = arith.constant 2 : i32
    %534 = tpu.dynamic_rotate %492 by %c2_i32_111 dim 1 : vector<8x256xf32>, i32 -> vector<8x256xf32>
    %535 = vector.broadcast %533 : vector<1x256xf32> to vector<8x256xf32>
    %536 = arith.mulf %534, %535 : vector<8x256xf32>
    %537 = vector.extract_strided_slice %493 {offsets = [0, 1], sizes = [8, 1], strides = [1, 1]} : vector<8x7xf32> to vector<8x1xf32>
    %538 = vector.broadcast %537 : vector<8x1xf32> to vector<8x256xf32>
    %539 = arith.mulf %538, %536 : vector<8x256xf32>
    %540 = arith.addf %518, %539 : vector<8x256xf32>
    %541 = vector.extract_strided_slice %494 {offsets = [0, 1], sizes = [8, 1], strides = [1, 1]} : vector<8x7xf32> to vector<8x1xf32>
    %542 = vector.broadcast %541 : vector<8x1xf32> to vector<8x256xf32>
    %543 = arith.mulf %542, %536 : vector<8x256xf32>
    %544 = arith.addf %522, %543 : vector<8x256xf32>
    %c-1_i32_112 = arith.constant -1 : i32
    %545 = vector.broadcast %c-1_i32_112 : i32 to vector<1x256xi32>
    %546 = arith.addi %59, %545 : vector<1x256xi32>
    %c0_i32_113 = arith.constant 0 : i32
    %547 = vector.broadcast %c0_i32_113 : i32 to vector<1x256xi32>
    %548 = arith.cmpi sge, %546, %547 : vector<1x256xi32>
    %c-1_i32_114 = arith.constant -1 : i32
    %549 = vector.broadcast %c-1_i32_114 : i32 to vector<1x256xi32>
    %550 = arith.addi %59, %549 : vector<1x256xi32>
    %c128_i32_115 = arith.constant 128 : i32
    %551 = vector.broadcast %c128_i32_115 : i32 to vector<1x256xi32>
    %552 = arith.cmpi slt, %550, %551 : vector<1x256xi32>
    %553 = arith.andi %548, %552 : vector<1x256xi1>
    %554 = arith.extui %553 : vector<1x256xi1> to vector<1x256xi32>
    %555 = arith.sitofp %554 : vector<1x256xi32> to vector<1x256xf32>
    %c1_i32_116 = arith.constant 1 : i32
    %556 = tpu.dynamic_rotate %492 by %c1_i32_116 dim 1 : vector<8x256xf32>, i32 -> vector<8x256xf32>
    %557 = vector.broadcast %555 : vector<1x256xf32> to vector<8x256xf32>
    %558 = arith.mulf %556, %557 : vector<8x256xf32>
    %559 = vector.extract_strided_slice %493 {offsets = [0, 2], sizes = [8, 1], strides = [1, 1]} : vector<8x7xf32> to vector<8x1xf32>
    %560 = vector.broadcast %559 : vector<8x1xf32> to vector<8x256xf32>
    %561 = arith.mulf %560, %558 : vector<8x256xf32>
    %562 = arith.addf %540, %561 : vector<8x256xf32>
    %563 = vector.extract_strided_slice %494 {offsets = [0, 2], sizes = [8, 1], strides = [1, 1]} : vector<8x7xf32> to vector<8x1xf32>
    %564 = vector.broadcast %563 : vector<8x1xf32> to vector<8x256xf32>
    %565 = arith.mulf %564, %558 : vector<8x256xf32>
    %566 = arith.addf %544, %565 : vector<8x256xf32>
    %567 = vector.extract_strided_slice %493 {offsets = [0, 3], sizes = [8, 1], strides = [1, 1]} : vector<8x7xf32> to vector<8x1xf32>
    %568 = vector.broadcast %567 : vector<8x1xf32> to vector<8x256xf32>
    %569 = arith.mulf %568, %492 : vector<8x256xf32>
    %570 = arith.addf %562, %569 : vector<8x256xf32>
    %571 = vector.extract_strided_slice %494 {offsets = [0, 3], sizes = [8, 1], strides = [1, 1]} : vector<8x7xf32> to vector<8x1xf32>
    %572 = vector.broadcast %571 : vector<8x1xf32> to vector<8x256xf32>
    %573 = arith.mulf %572, %492 : vector<8x256xf32>
    %574 = arith.addf %566, %573 : vector<8x256xf32>
    %c1_i32_117 = arith.constant 1 : i32
    %575 = vector.broadcast %c1_i32_117 : i32 to vector<1x256xi32>
    %576 = arith.addi %59, %575 : vector<1x256xi32>
    %c0_i32_118 = arith.constant 0 : i32
    %577 = vector.broadcast %c0_i32_118 : i32 to vector<1x256xi32>
    %578 = arith.cmpi sge, %576, %577 : vector<1x256xi32>
    %c1_i32_119 = arith.constant 1 : i32
    %579 = vector.broadcast %c1_i32_119 : i32 to vector<1x256xi32>
    %580 = arith.addi %59, %579 : vector<1x256xi32>
    %c128_i32_120 = arith.constant 128 : i32
    %581 = vector.broadcast %c128_i32_120 : i32 to vector<1x256xi32>
    %582 = arith.cmpi slt, %580, %581 : vector<1x256xi32>
    %583 = arith.andi %578, %582 : vector<1x256xi1>
    %584 = arith.extui %583 : vector<1x256xi1> to vector<1x256xi32>
    %585 = arith.sitofp %584 : vector<1x256xi32> to vector<1x256xf32>
    %c255_i32_121 = arith.constant 255 : i32
    %586 = tpu.dynamic_rotate %492 by %c255_i32_121 dim 1 : vector<8x256xf32>, i32 -> vector<8x256xf32>
    %587 = vector.broadcast %585 : vector<1x256xf32> to vector<8x256xf32>
    %588 = arith.mulf %586, %587 : vector<8x256xf32>
    %589 = vector.extract_strided_slice %493 {offsets = [0, 4], sizes = [8, 1], strides = [1, 1]} : vector<8x7xf32> to vector<8x1xf32>
    %590 = vector.broadcast %589 : vector<8x1xf32> to vector<8x256xf32>
    %591 = arith.mulf %590, %588 : vector<8x256xf32>
    %592 = arith.addf %570, %591 : vector<8x256xf32>
    %593 = vector.extract_strided_slice %494 {offsets = [0, 4], sizes = [8, 1], strides = [1, 1]} : vector<8x7xf32> to vector<8x1xf32>
    %594 = vector.broadcast %593 : vector<8x1xf32> to vector<8x256xf32>
    %595 = arith.mulf %594, %588 : vector<8x256xf32>
    %596 = arith.addf %574, %595 : vector<8x256xf32>
    %c2_i32_122 = arith.constant 2 : i32
    %597 = vector.broadcast %c2_i32_122 : i32 to vector<1x256xi32>
    %598 = arith.addi %59, %597 : vector<1x256xi32>
    %c0_i32_123 = arith.constant 0 : i32
    %599 = vector.broadcast %c0_i32_123 : i32 to vector<1x256xi32>
    %600 = arith.cmpi sge, %598, %599 : vector<1x256xi32>
    %c2_i32_124 = arith.constant 2 : i32
    %601 = vector.broadcast %c2_i32_124 : i32 to vector<1x256xi32>
    %602 = arith.addi %59, %601 : vector<1x256xi32>
    %c128_i32_125 = arith.constant 128 : i32
    %603 = vector.broadcast %c128_i32_125 : i32 to vector<1x256xi32>
    %604 = arith.cmpi slt, %602, %603 : vector<1x256xi32>
    %605 = arith.andi %600, %604 : vector<1x256xi1>
    %606 = arith.extui %605 : vector<1x256xi1> to vector<1x256xi32>
    %607 = arith.sitofp %606 : vector<1x256xi32> to vector<1x256xf32>
    %c254_i32_126 = arith.constant 254 : i32
    %608 = tpu.dynamic_rotate %492 by %c254_i32_126 dim 1 : vector<8x256xf32>, i32 -> vector<8x256xf32>
    %609 = vector.broadcast %607 : vector<1x256xf32> to vector<8x256xf32>
    %610 = arith.mulf %608, %609 : vector<8x256xf32>
    %611 = vector.extract_strided_slice %493 {offsets = [0, 5], sizes = [8, 1], strides = [1, 1]} : vector<8x7xf32> to vector<8x1xf32>
    %612 = vector.broadcast %611 : vector<8x1xf32> to vector<8x256xf32>
    %613 = arith.mulf %612, %610 : vector<8x256xf32>
    %614 = arith.addf %592, %613 : vector<8x256xf32>
    %615 = vector.extract_strided_slice %494 {offsets = [0, 5], sizes = [8, 1], strides = [1, 1]} : vector<8x7xf32> to vector<8x1xf32>
    %616 = vector.broadcast %615 : vector<8x1xf32> to vector<8x256xf32>
    %617 = arith.mulf %616, %610 : vector<8x256xf32>
    %618 = arith.addf %596, %617 : vector<8x256xf32>
    %c3_i32_127 = arith.constant 3 : i32
    %619 = vector.broadcast %c3_i32_127 : i32 to vector<1x256xi32>
    %620 = arith.addi %59, %619 : vector<1x256xi32>
    %c0_i32_128 = arith.constant 0 : i32
    %621 = vector.broadcast %c0_i32_128 : i32 to vector<1x256xi32>
    %622 = arith.cmpi sge, %620, %621 : vector<1x256xi32>
    %c3_i32_129 = arith.constant 3 : i32
    %623 = vector.broadcast %c3_i32_129 : i32 to vector<1x256xi32>
    %624 = arith.addi %59, %623 : vector<1x256xi32>
    %c128_i32_130 = arith.constant 128 : i32
    %625 = vector.broadcast %c128_i32_130 : i32 to vector<1x256xi32>
    %626 = arith.cmpi slt, %624, %625 : vector<1x256xi32>
    %627 = arith.andi %622, %626 : vector<1x256xi1>
    %628 = arith.extui %627 : vector<1x256xi1> to vector<1x256xi32>
    %629 = arith.sitofp %628 : vector<1x256xi32> to vector<1x256xf32>
    %c253_i32_131 = arith.constant 253 : i32
    %630 = tpu.dynamic_rotate %492 by %c253_i32_131 dim 1 : vector<8x256xf32>, i32 -> vector<8x256xf32>
    %631 = vector.broadcast %629 : vector<1x256xf32> to vector<8x256xf32>
    %632 = arith.mulf %630, %631 : vector<8x256xf32>
    %633 = vector.extract_strided_slice %493 {offsets = [0, 6], sizes = [8, 1], strides = [1, 1]} : vector<8x7xf32> to vector<8x1xf32>
    %634 = vector.broadcast %633 : vector<8x1xf32> to vector<8x256xf32>
    %635 = arith.mulf %634, %632 : vector<8x256xf32>
    %636 = arith.addf %614, %635 : vector<8x256xf32>
    %637 = vector.extract_strided_slice %494 {offsets = [0, 6], sizes = [8, 1], strides = [1, 1]} : vector<8x7xf32> to vector<8x1xf32>
    %638 = vector.broadcast %637 : vector<8x1xf32> to vector<8x256xf32>
    %639 = arith.mulf %638, %632 : vector<8x256xf32>
    %640 = arith.addf %618, %639 : vector<8x256xf32>
    %641 = vector.broadcast %496 : vector<8x1xf32> to vector<8x256xf32>
    %642 = arith.addf %636, %641 : vector<8x256xf32>
    %643 = vector.broadcast %497 : vector<8x1xf32> to vector<8x256xf32>
    %644 = arith.addf %640, %643 : vector<8x256xf32>
    %cst_132 = arith.constant 0.000000e+00 : f32
    %645 = vector.broadcast %cst_132 : f32 to vector<8x256xf32>
    %646 = vector.extract_strided_slice %495 {offsets = [0, 0], sizes = [8, 1], strides = [1, 1]} : vector<8x9xf32> to vector<8x1xf32>
    %c-16_i32 = arith.constant -16 : i32
    %647 = vector.broadcast %c-16_i32 : i32 to vector<1x256xi32>
    %648 = arith.addi %59, %647 : vector<1x256xi32>
    %c0_i32_133 = arith.constant 0 : i32
    %649 = vector.broadcast %c0_i32_133 : i32 to vector<1x256xi32>
    %650 = arith.cmpi sge, %648, %649 : vector<1x256xi32>
    %c-16_i32_134 = arith.constant -16 : i32
    %651 = vector.broadcast %c-16_i32_134 : i32 to vector<1x256xi32>
    %652 = arith.addi %59, %651 : vector<1x256xi32>
    %c128_i32_135 = arith.constant 128 : i32
    %653 = vector.broadcast %c128_i32_135 : i32 to vector<1x256xi32>
    %654 = arith.cmpi slt, %652, %653 : vector<1x256xi32>
    %655 = arith.andi %650, %654 : vector<1x256xi1>
    %656 = arith.extui %655 : vector<1x256xi1> to vector<1x256xi32>
    %657 = arith.sitofp %656 : vector<1x256xi32> to vector<1x256xf32>
    %c16_i32 = arith.constant 16 : i32
    %658 = tpu.dynamic_rotate %642 by %c16_i32 dim 1 : vector<8x256xf32>, i32 -> vector<8x256xf32>
    %659 = vector.broadcast %657 : vector<1x256xf32> to vector<8x256xf32>
    %660 = arith.mulf %658, %659 : vector<8x256xf32>
    %661 = vector.broadcast %646 : vector<8x1xf32> to vector<8x256xf32>
    %662 = arith.mulf %661, %660 : vector<8x256xf32>
    %663 = arith.addf %645, %662 : vector<8x256xf32>
    %664 = vector.extract_strided_slice %495 {offsets = [0, 1], sizes = [8, 1], strides = [1, 1]} : vector<8x9xf32> to vector<8x1xf32>
    %c-12_i32 = arith.constant -12 : i32
    %665 = vector.broadcast %c-12_i32 : i32 to vector<1x256xi32>
    %666 = arith.addi %59, %665 : vector<1x256xi32>
    %c0_i32_136 = arith.constant 0 : i32
    %667 = vector.broadcast %c0_i32_136 : i32 to vector<1x256xi32>
    %668 = arith.cmpi sge, %666, %667 : vector<1x256xi32>
    %c-12_i32_137 = arith.constant -12 : i32
    %669 = vector.broadcast %c-12_i32_137 : i32 to vector<1x256xi32>
    %670 = arith.addi %59, %669 : vector<1x256xi32>
    %c128_i32_138 = arith.constant 128 : i32
    %671 = vector.broadcast %c128_i32_138 : i32 to vector<1x256xi32>
    %672 = arith.cmpi slt, %670, %671 : vector<1x256xi32>
    %673 = arith.andi %668, %672 : vector<1x256xi1>
    %674 = arith.extui %673 : vector<1x256xi1> to vector<1x256xi32>
    %675 = arith.sitofp %674 : vector<1x256xi32> to vector<1x256xf32>
    %c12_i32 = arith.constant 12 : i32
    %676 = tpu.dynamic_rotate %642 by %c12_i32 dim 1 : vector<8x256xf32>, i32 -> vector<8x256xf32>
    %677 = vector.broadcast %675 : vector<1x256xf32> to vector<8x256xf32>
    %678 = arith.mulf %676, %677 : vector<8x256xf32>
    %679 = vector.broadcast %664 : vector<8x1xf32> to vector<8x256xf32>
    %680 = arith.mulf %679, %678 : vector<8x256xf32>
    %681 = arith.addf %663, %680 : vector<8x256xf32>
    %682 = vector.extract_strided_slice %495 {offsets = [0, 2], sizes = [8, 1], strides = [1, 1]} : vector<8x9xf32> to vector<8x1xf32>
    %c-8_i32 = arith.constant -8 : i32
    %683 = vector.broadcast %c-8_i32 : i32 to vector<1x256xi32>
    %684 = arith.addi %59, %683 : vector<1x256xi32>
    %c0_i32_139 = arith.constant 0 : i32
    %685 = vector.broadcast %c0_i32_139 : i32 to vector<1x256xi32>
    %686 = arith.cmpi sge, %684, %685 : vector<1x256xi32>
    %c-8_i32_140 = arith.constant -8 : i32
    %687 = vector.broadcast %c-8_i32_140 : i32 to vector<1x256xi32>
    %688 = arith.addi %59, %687 : vector<1x256xi32>
    %c128_i32_141 = arith.constant 128 : i32
    %689 = vector.broadcast %c128_i32_141 : i32 to vector<1x256xi32>
    %690 = arith.cmpi slt, %688, %689 : vector<1x256xi32>
    %691 = arith.andi %686, %690 : vector<1x256xi1>
    %692 = arith.extui %691 : vector<1x256xi1> to vector<1x256xi32>
    %693 = arith.sitofp %692 : vector<1x256xi32> to vector<1x256xf32>
    %c8_i32 = arith.constant 8 : i32
    %694 = tpu.dynamic_rotate %642 by %c8_i32 dim 1 : vector<8x256xf32>, i32 -> vector<8x256xf32>
    %695 = vector.broadcast %693 : vector<1x256xf32> to vector<8x256xf32>
    %696 = arith.mulf %694, %695 : vector<8x256xf32>
    %697 = vector.broadcast %682 : vector<8x1xf32> to vector<8x256xf32>
    %698 = arith.mulf %697, %696 : vector<8x256xf32>
    %699 = arith.addf %681, %698 : vector<8x256xf32>
    %700 = vector.extract_strided_slice %495 {offsets = [0, 3], sizes = [8, 1], strides = [1, 1]} : vector<8x9xf32> to vector<8x1xf32>
    %c-4_i32_142 = arith.constant -4 : i32
    %701 = vector.broadcast %c-4_i32_142 : i32 to vector<1x256xi32>
    %702 = arith.addi %59, %701 : vector<1x256xi32>
    %c0_i32_143 = arith.constant 0 : i32
    %703 = vector.broadcast %c0_i32_143 : i32 to vector<1x256xi32>
    %704 = arith.cmpi sge, %702, %703 : vector<1x256xi32>
    %c-4_i32_144 = arith.constant -4 : i32
    %705 = vector.broadcast %c-4_i32_144 : i32 to vector<1x256xi32>
    %706 = arith.addi %59, %705 : vector<1x256xi32>
    %c128_i32_145 = arith.constant 128 : i32
    %707 = vector.broadcast %c128_i32_145 : i32 to vector<1x256xi32>
    %708 = arith.cmpi slt, %706, %707 : vector<1x256xi32>
    %709 = arith.andi %704, %708 : vector<1x256xi1>
    %710 = arith.extui %709 : vector<1x256xi1> to vector<1x256xi32>
    %711 = arith.sitofp %710 : vector<1x256xi32> to vector<1x256xf32>
    %c4_i32_146 = arith.constant 4 : i32
    %712 = tpu.dynamic_rotate %642 by %c4_i32_146 dim 1 : vector<8x256xf32>, i32 -> vector<8x256xf32>
    %713 = vector.broadcast %711 : vector<1x256xf32> to vector<8x256xf32>
    %714 = arith.mulf %712, %713 : vector<8x256xf32>
    %715 = vector.broadcast %700 : vector<8x1xf32> to vector<8x256xf32>
    %716 = arith.mulf %715, %714 : vector<8x256xf32>
    %717 = arith.addf %699, %716 : vector<8x256xf32>
    %718 = vector.extract_strided_slice %495 {offsets = [0, 4], sizes = [8, 1], strides = [1, 1]} : vector<8x9xf32> to vector<8x1xf32>
    %719 = vector.broadcast %718 : vector<8x1xf32> to vector<8x256xf32>
    %720 = arith.mulf %719, %642 : vector<8x256xf32>
    %721 = arith.addf %717, %720 : vector<8x256xf32>
    %722 = vector.extract_strided_slice %495 {offsets = [0, 5], sizes = [8, 1], strides = [1, 1]} : vector<8x9xf32> to vector<8x1xf32>
    %c4_i32_147 = arith.constant 4 : i32
    %723 = vector.broadcast %c4_i32_147 : i32 to vector<1x256xi32>
    %724 = arith.addi %59, %723 : vector<1x256xi32>
    %c0_i32_148 = arith.constant 0 : i32
    %725 = vector.broadcast %c0_i32_148 : i32 to vector<1x256xi32>
    %726 = arith.cmpi sge, %724, %725 : vector<1x256xi32>
    %c4_i32_149 = arith.constant 4 : i32
    %727 = vector.broadcast %c4_i32_149 : i32 to vector<1x256xi32>
    %728 = arith.addi %59, %727 : vector<1x256xi32>
    %c128_i32_150 = arith.constant 128 : i32
    %729 = vector.broadcast %c128_i32_150 : i32 to vector<1x256xi32>
    %730 = arith.cmpi slt, %728, %729 : vector<1x256xi32>
    %731 = arith.andi %726, %730 : vector<1x256xi1>
    %732 = arith.extui %731 : vector<1x256xi1> to vector<1x256xi32>
    %733 = arith.sitofp %732 : vector<1x256xi32> to vector<1x256xf32>
    %c252_i32_151 = arith.constant 252 : i32
    %734 = tpu.dynamic_rotate %642 by %c252_i32_151 dim 1 : vector<8x256xf32>, i32 -> vector<8x256xf32>
    %735 = vector.broadcast %733 : vector<1x256xf32> to vector<8x256xf32>
    %736 = arith.mulf %734, %735 : vector<8x256xf32>
    %737 = vector.broadcast %722 : vector<8x1xf32> to vector<8x256xf32>
    %738 = arith.mulf %737, %736 : vector<8x256xf32>
    %739 = arith.addf %721, %738 : vector<8x256xf32>
    %740 = vector.extract_strided_slice %495 {offsets = [0, 6], sizes = [8, 1], strides = [1, 1]} : vector<8x9xf32> to vector<8x1xf32>
    %c8_i32_152 = arith.constant 8 : i32
    %741 = vector.broadcast %c8_i32_152 : i32 to vector<1x256xi32>
    %742 = arith.addi %59, %741 : vector<1x256xi32>
    %c0_i32_153 = arith.constant 0 : i32
    %743 = vector.broadcast %c0_i32_153 : i32 to vector<1x256xi32>
    %744 = arith.cmpi sge, %742, %743 : vector<1x256xi32>
    %c8_i32_154 = arith.constant 8 : i32
    %745 = vector.broadcast %c8_i32_154 : i32 to vector<1x256xi32>
    %746 = arith.addi %59, %745 : vector<1x256xi32>
    %c128_i32_155 = arith.constant 128 : i32
    %747 = vector.broadcast %c128_i32_155 : i32 to vector<1x256xi32>
    %748 = arith.cmpi slt, %746, %747 : vector<1x256xi32>
    %749 = arith.andi %744, %748 : vector<1x256xi1>
    %750 = arith.extui %749 : vector<1x256xi1> to vector<1x256xi32>
    %751 = arith.sitofp %750 : vector<1x256xi32> to vector<1x256xf32>
    %c248_i32 = arith.constant 248 : i32
    %752 = tpu.dynamic_rotate %642 by %c248_i32 dim 1 : vector<8x256xf32>, i32 -> vector<8x256xf32>
    %753 = vector.broadcast %751 : vector<1x256xf32> to vector<8x256xf32>
    %754 = arith.mulf %752, %753 : vector<8x256xf32>
    %755 = vector.broadcast %740 : vector<8x1xf32> to vector<8x256xf32>
    %756 = arith.mulf %755, %754 : vector<8x256xf32>
    %757 = arith.addf %739, %756 : vector<8x256xf32>
    %758 = vector.extract_strided_slice %495 {offsets = [0, 7], sizes = [8, 1], strides = [1, 1]} : vector<8x9xf32> to vector<8x1xf32>
    %c12_i32_156 = arith.constant 12 : i32
    %759 = vector.broadcast %c12_i32_156 : i32 to vector<1x256xi32>
    %760 = arith.addi %59, %759 : vector<1x256xi32>
    %c0_i32_157 = arith.constant 0 : i32
    %761 = vector.broadcast %c0_i32_157 : i32 to vector<1x256xi32>
    %762 = arith.cmpi sge, %760, %761 : vector<1x256xi32>
    %c12_i32_158 = arith.constant 12 : i32
    %763 = vector.broadcast %c12_i32_158 : i32 to vector<1x256xi32>
    %764 = arith.addi %59, %763 : vector<1x256xi32>
    %c128_i32_159 = arith.constant 128 : i32
    %765 = vector.broadcast %c128_i32_159 : i32 to vector<1x256xi32>
    %766 = arith.cmpi slt, %764, %765 : vector<1x256xi32>
    %767 = arith.andi %762, %766 : vector<1x256xi1>
    %768 = arith.extui %767 : vector<1x256xi1> to vector<1x256xi32>
    %769 = arith.sitofp %768 : vector<1x256xi32> to vector<1x256xf32>
    %c244_i32 = arith.constant 244 : i32
    %770 = tpu.dynamic_rotate %642 by %c244_i32 dim 1 : vector<8x256xf32>, i32 -> vector<8x256xf32>
    %771 = vector.broadcast %769 : vector<1x256xf32> to vector<8x256xf32>
    %772 = arith.mulf %770, %771 : vector<8x256xf32>
    %773 = vector.broadcast %758 : vector<8x1xf32> to vector<8x256xf32>
    %774 = arith.mulf %773, %772 : vector<8x256xf32>
    %775 = arith.addf %757, %774 : vector<8x256xf32>
    %776 = vector.extract_strided_slice %495 {offsets = [0, 8], sizes = [8, 1], strides = [1, 1]} : vector<8x9xf32> to vector<8x1xf32>
    %c16_i32_160 = arith.constant 16 : i32
    %777 = vector.broadcast %c16_i32_160 : i32 to vector<1x256xi32>
    %778 = arith.addi %59, %777 : vector<1x256xi32>
    %c0_i32_161 = arith.constant 0 : i32
    %779 = vector.broadcast %c0_i32_161 : i32 to vector<1x256xi32>
    %780 = arith.cmpi sge, %778, %779 : vector<1x256xi32>
    %c16_i32_162 = arith.constant 16 : i32
    %781 = vector.broadcast %c16_i32_162 : i32 to vector<1x256xi32>
    %782 = arith.addi %59, %781 : vector<1x256xi32>
    %c128_i32_163 = arith.constant 128 : i32
    %783 = vector.broadcast %c128_i32_163 : i32 to vector<1x256xi32>
    %784 = arith.cmpi slt, %782, %783 : vector<1x256xi32>
    %785 = arith.andi %780, %784 : vector<1x256xi1>
    %786 = arith.extui %785 : vector<1x256xi1> to vector<1x256xi32>
    %787 = arith.sitofp %786 : vector<1x256xi32> to vector<1x256xf32>
    %c240_i32 = arith.constant 240 : i32
    %788 = tpu.dynamic_rotate %642 by %c240_i32 dim 1 : vector<8x256xf32>, i32 -> vector<8x256xf32>
    %789 = vector.broadcast %787 : vector<1x256xf32> to vector<8x256xf32>
    %790 = arith.mulf %788, %789 : vector<8x256xf32>
    %791 = vector.broadcast %776 : vector<8x1xf32> to vector<8x256xf32>
    %792 = arith.mulf %791, %790 : vector<8x256xf32>
    %793 = arith.addf %775, %792 : vector<8x256xf32>
    %794 = vector.broadcast %498 : vector<8x1xf32> to vector<8x256xf32>
    %795 = arith.addf %793, %794 : vector<8x256xf32>
    %796 = tpu.concatenate %123, %267, %491, %795 in 0 : vector<8x256xf32>, vector<8x256xf32>, vector<8x256xf32>, vector<8x256xf32> -> vector<32x256xf32>
    %797 = tpu.concatenate %80, %188, %376, %644 in 0 : vector<8x256xf32>, vector<8x256xf32>, vector<8x256xf32>, vector<8x256xf32> -> vector<32x256xf32>
    %c0_164 = arith.constant 0 : index
    %c0_165 = arith.constant 0 : index
    %798 = vector.load %arg6[%c0_164, %c0_165] : memref<32x32xbf16, #tpu.memory_space<vmem>>, vector<32x32xbf16>
    %799 = arith.truncf %796 : vector<32x256xf32> to vector<32x256xbf16>
    %cst_166 = arith.constant dense<0.000000e+00> : vector<32x256xf32>
    %800 = tpu.matmul %798, %799, %cst_166 {dimension_numbers = #tpu.dot_dimension_numbers<[1], [0], [0], [1], [0, 0, 1, 1], [], []>} : vector<32x32xbf16>, vector<32x256xbf16>, vector<32x256xf32> -> vector<32x256xf32>
    %801 = vector.extract_strided_slice %45 {offsets = [0, 26], sizes = [32, 1], strides = [1, 1]} : vector<32x31xf32> to vector<32x1xf32>
    %802 = vector.broadcast %801 : vector<32x1xf32> to vector<32x256xf32>
    %803 = arith.addf %800, %802 : vector<32x256xf32>
    %804 = arith.mulf %803, %797 : vector<32x256xf32>
    %805 = arith.mulf %57, %804 : vector<32x256xf32>
    %c0_167 = arith.constant 0 : index
    %c0_168 = arith.constant 0 : index
    %806 = vector.load %arg5[%c0_167, %c0_168] : memref<32x32xbf16, #tpu.memory_space<vmem>>, vector<32x32xbf16>
    %807 = arith.truncf %805 : vector<32x256xf32> to vector<32x256xbf16>
    %cst_169 = arith.constant dense<0.000000e+00> : vector<32x256xf32>
    %808 = tpu.matmul %806, %807, %cst_169 {dimension_numbers = #tpu.dot_dimension_numbers<[1], [0], [0], [1], [0, 0, 1, 1], [], []>} : vector<32x32xbf16>, vector<32x256xbf16>, vector<32x256xf32> -> vector<32x256xf32>
    %809 = vector.broadcast %46 : vector<32x1xf32> to vector<32x256xf32>
    %810 = arith.addf %808, %809 : vector<32x256xf32>
    %811 = vector.broadcast %47 : vector<32x1xf32> to vector<32x256xf32>
    %812 = arith.mulf %810, %811 : vector<32x256xf32>
    %c0_170 = arith.constant 0 : index
    %c0_171 = arith.constant 0 : index
    %813 = vector.load %arg1[%c0_170, %c0_171] : memref<32x256xf32, #tpu.memory_space<vmem>>, vector<32x256xf32>
    %814 = arith.addf %812, %813 : vector<32x256xf32>
    %c0_172 = arith.constant 0 : index
    %c0_173 = arith.constant 0 : index
    %815 = vector.load %arg8[%c0_172, %c0_173] : memref<32x256xf32, #tpu.memory_space<vmem>>, vector<32x256xf32>
    tpu.vector_store %arg8[%c0_172, %c0_173], %814 {strides = array<i32>} : memref<32x256xf32, #tpu.memory_space<vmem>>, vector<32x256xf32>,
    return
  }
  func.func @transform_0(%arg0: i32) -> (i32, i32) {
    %c0_i32 = arith.constant 0 : i32
    %c0_i32_0 = arith.constant 0 : i32
    return %c0_i32, %arg0 : i32, i32
  }
  func.func @transform_1(%arg0: i32) -> (i32, i32) {
    %c0_i32 = arith.constant 0 : i32
    %c0_i32_0 = arith.constant 0 : i32
    %c0_i32_1 = arith.constant 0 : i32
    return %c0_i32, %c0_i32_0 : i32, i32
  }
  func.func @transform_2(%arg0: i32) -> (i32, i32) {
    %c0_i32 = arith.constant 0 : i32
    %c0_i32_0 = arith.constant 0 : i32
    %c0_i32_1 = arith.constant 0 : i32
    return %c0_i32, %c0_i32_0 : i32, i32
  }
  func.func @transform_3(%arg0: i32) -> (i32, i32) {
    %c0_i32 = arith.constant 0 : i32
    %c0_i32_0 = arith.constant 0 : i32
    %c0_i32_1 = arith.constant 0 : i32
    return %c0_i32, %c0_i32_0 : i32, i32
  }
  func.func @transform_4(%arg0: i32) -> (i32, i32) {
    %c0_i32 = arith.constant 0 : i32
    %c0_i32_0 = arith.constant 0 : i32
    %c0_i32_1 = arith.constant 0 : i32
    return %c0_i32, %c0_i32_0 : i32, i32
  }
  func.func @transform_5(%arg0: i32) -> (i32, i32) {
    %c0_i32 = arith.constant 0 : i32
    %c0_i32_0 = arith.constant 0 : i32
    %c0_i32_1 = arith.constant 0 : i32
    return %c0_i32, %c0_i32_0 : i32, i32
  }
  func.func @transform_6(%arg0: i32) -> (i32, i32) {
    %c0_i32 = arith.constant 0 : i32
    %c0_i32_0 = arith.constant 0 : i32
    %c0_i32_1 = arith.constant 0 : i32
    return %c0_i32, %c0_i32_0 : i32, i32
  }
  func.func @transform_7(%arg0: i32) -> (i32, i32) {
    %c0_i32 = arith.constant 0 : i32
    %c0_i32_0 = arith.constant 0 : i32
    return %c0_i32, %arg0 : i32, i32
  }
}

</mosaic_0001>

<llo_original>
// kernel: multi_kernel_conv.1
$region0: #{multi_kernel_conv.1}
  #allocation0 [shape = 'u32[]', space=smem, size = 0x4, offset = 0x4, fixed_abs, tag = 'smem constant byte address 0x4 - core index']
  #allocation1 [shape = 'u32[144,128]{1,0:T(1,128)}', space=vmem, size = 0x12000, scoped, tag = 'internal scratch']
  %s0 = inlined_call_operand.vmem [shape: f32[32,512], index: 0, kind: input, shape index: {}]
  %s1 = inlined_call_operand.vmem [shape: f32[64,128], index: 1, kind: input, shape index: {}]
  %s2 = inlined_call_operand.vmem [shape: bf16[32,32], index: 2, kind: input, shape index: {}]
  %s3 = inlined_call_operand.vmem [shape: bf16[32,32], index: 3, kind: input, shape index: {}]
  %s4 = inlined_call_operand.vmem [shape: bf16[32,32], index: 4, kind: input, shape index: {}]
  %s5 = inlined_call_operand.vmem [shape: bf16[32,32], index: 5, kind: input, shape index: {}]
  %s6 = inlined_call_operand.vmem [shape: f32[32,31], index: 6, kind: input, shape index: {}]
  %s7 = inlined_call_operand.vmem [shape: f32[32,512], index: 7, kind: output, shape index: {}]
  %s8 = sld [smem:[#allocation0]]
  $region103: #{multi_kernel_conv.1} parent=0
    _
  %s10 = ssub.s32 1, %s8
  %s11 = scalar_select 0, %s10, %s8
  $region1: #{multi_kernel_conv.1} parent=0
    #allocation2 [shape = 'u8[65536]{0}', space=vmem, size = 0x10000, scoped, tag = 'input window, operand 0']
    #allocation3 [shape = 'u8[65536]{0}', space=vmem, size = 0x10000, scoped, tag = 'output window, operand 0']
    loop: start=0, step=1, limit=4
    $region2: #{multi_kernel_conv.1} parent=1 // loop_pre_header
      _
    $region3: #{multi_kernel_conv.1} parent=1 // loop_header
      %s13 = sphi 0, %s17
      %p14 = scmp.ge.s32.totalorder %s13, 4
      %s23 = sphi 0, %s25
      %s26 = sphi 0, %s23
      %s27 = sphi 0, %s26
      %s43 = sphi 0, %s27
      %s47 = sphi 0, %s47
      %s49 = sphi 0, %s47
      %s50 = sphi 0, %s49
      %s64 = sphi 0, %s50
      %s68 = sphi 0, %s68
      %s70 = sphi 0, %s68
      %s71 = sphi 0, %s70
      %s85 = sphi 0, %s71
      %s89 = sphi 0, %s89
      %s91 = sphi 0, %s89
      %s92 = sphi 0, %s91
      %s106 = sphi 0, %s92
      %s110 = sphi 0, %s110
      %s112 = sphi 0, %s110
      %s113 = sphi 0, %s112
      %s127 = sphi 0, %s113
      %s131 = sphi 0, %s131
      %s133 = sphi 0, %s131
      %s134 = sphi 0, %s133
      %s148 = sphi 0, %s134
      %s152 = sphi 0, %s152
      %s154 = sphi 0, %s152
      %s155 = sphi 0, %s154
      %s169 = sphi 0, %s155
      %s175 = sphi 0, %s177
      %s178 = sphi 0, %s175
      %s179 = sphi 0, %s178
      %s195 = sphi 0, %s179
    $region4: #{multi_kernel_conv.1} parent=1 // loop_header_branch
      %16 = sbr.rel (%p14) target = $region8
    $region5: #{multi_kernel_conv.1} parent=1 // loop_body
      %s18 = ssub.s32 %s13, 1
      %s19 = ssub.s32 %s13, 2
      %s20 = sadd.s32 %s13, 1
      %s21 = ssub.s32 %s13, %s20
      %p22 = scmp.eq.s32.totalorder %s21, 0
      %s24 = sadd.s32 %s23, 1
      %s25 = scalar_select %p22, %s23, %s24
      %p28 = pneg %p22
      %p29 = scmp.eq.s32.totalorder %s13, 1
      %p30 = por %p28, %p29
      %p31 = scmp.ne.s32.totalorder %s23, %s26
      %p32 = scmp.eq.s32.totalorder %s13, 0
      %p33 = por %p31, %p32
      %p34 = scmp.ne.s32.totalorder %s23, %s26
      %p35 = scmp.eq.s32.totalorder %s18, 1
      %p36 = por %p34, %p35
      %p37 = scmp.ne.s32.totalorder %s26, %s27
      %p38 = scmp.eq.s32.totalorder %s18, 0
      %p39 = por %p37, %p38
      %p40 = scmp.ne.s32.totalorder %s26, %s27
      %p41 = scmp.eq.s32.totalorder %s19, 1
      %p42 = por %p40, %p41
      %p44 = scmp.ne.s32.totalorder %s27, %s43
      %p45 = scmp.eq.s32.totalorder %s19, 0
      %p46 = por %p44, %p45
      %s48 = sadd.s32 %s47, 1
      %p51 = scmp.eq.s32.totalorder %s13, 1
      %p52 = scmp.ne.s32.totalorder %s47, %s49
      %p53 = scmp.eq.s32.totalorder %s13, 0
      %p54 = por %p52, %p53
      %p55 = scmp.ne.s32.totalorder %s47, %s49
      %p56 = scmp.eq.s32.totalorder %s18, 1
      %p57 = por %p55, %p56
      %p58 = scmp.ne.s32.totalorder %s49, %s50
      %p59 = scmp.eq.s32.totalorder %s18, 0
      %p60 = por %p58, %p59
      %p61 = scmp.ne.s32.totalorder %s49, %s50
      %p62 = scmp.eq.s32.totalorder %s19, 1
      %p63 = por %p61, %p62
      %p65 = scmp.ne.s32.totalorder %s50, %s64
      %p66 = scmp.eq.s32.totalorder %s19, 0
      %p67 = por %p65, %p66
      %s69 = sadd.s32 %s68, 1
      %p72 = scmp.eq.s32.totalorder %s13, 1
      %p73 = scmp.ne.s32.totalorder %s68, %s70
      %p74 = scmp.eq.s32.totalorder %s13, 0
      %p75 = por %p73, %p74
      %p76 = scmp.ne.s32.totalorder %s68, %s70
      %p77 = scmp.eq.s32.totalorder %s18, 1
      %p78 = por %p76, %p77
      %p79 = scmp.ne.s32.totalorder %s70, %s71
      %p80 = scmp.eq.s32.totalorder %s18, 0
      %p81 = por %p79, %p80
      %p82 = scmp.ne.s32.totalorder %s70, %s71
      %p83 = scmp.eq.s32.totalorder %s19, 1
      %p84 = por %p82, %p83
      %p86 = scmp.ne.s32.totalorder %s71, %s85
      %p87 = scmp.eq.s32.totalorder %s19, 0
      %p88 = por %p86, %p87
      %s90 = sadd.s32 %s89, 1
      %p93 = scmp.eq.s32.totalorder %s13, 1
      %p94 = scmp.ne.s32.totalorder %s89, %s91
      %p95 = scmp.eq.s32.totalorder %s13, 0
      %p96 = por %p94, %p95
      %p97 = scmp.ne.s32.totalorder %s89, %s91
      %p98 = scmp.eq.s32.totalorder %s18, 1
      %p99 = por %p97, %p98
      %p100 = scmp.ne.s32.totalorder %s91, %s92
      %p101 = scmp.eq.s32.totalorder %s18, 0
      %p102 = por %p100, %p101
      %p103 = scmp.ne.s32.totalorder %s91, %s92
      %p104 = scmp.eq.s32.totalorder %s19, 1
      %p105 = por %p103, %p104
      %p107 = scmp.ne.s32.totalorder %s92, %s106
      %p108 = scmp.eq.s32.totalorder %s19, 0
      %p109 = por %p107, %p108
      %s111 = sadd.s32 %s110, 1
      %p114 = scmp.eq.s32.totalorder %s13, 1
      %p115 = scmp.ne.s32.totalorder %s110, %s112
      %p116 = scmp.eq.s32.totalorder %s13, 0
      %p117 = por %p115, %p116
      %p118 = scmp.ne.s32.totalorder %s110, %s112
      %p119 = scmp.eq.s32.totalorder %s18, 1
      %p120 = por %p118, %p119
      %p121 = scmp.ne.s32.totalorder %s112, %s113
      %p122 = scmp.eq.s32.totalorder %s18, 0
      %p123 = por %p121, %p122
      %p124 = scmp.ne.s32.totalorder %s112, %s113
      %p125 = scmp.eq.s32.totalorder %s19, 1
      %p126 = por %p124, %p125
      %p128 = scmp.ne.s32.totalorder %s113, %s127
      %p129 = scmp.eq.s32.totalorder %s19, 0
      %p130 = por %p128, %p129
      %s132 = sadd.s32 %s131, 1
      %p135 = scmp.eq.s32.totalorder %s13, 1
      %p136 = scmp.ne.s32.totalorder %s131, %s133
      %p137 = scmp.eq.s32.totalorder %s13, 0
      %p138 = por %p136, %p137
      %p139 = scmp.ne.s32.totalorder %s131, %s133
      %p140 = scmp.eq.s32.totalorder %s18, 1
      %p141 = por %p139, %p140
      %p142 = scmp.ne.s32.totalorder %s133, %s134
      %p143 = scmp.eq.s32.totalorder %s18, 0
      %p144 = por %p142, %p143
      %p145 = scmp.ne.s32.totalorder %s133, %s134
      %p146 = scmp.eq.s32.totalorder %s19, 1
      %p147 = por %p145, %p146
      %p149 = scmp.ne.s32.totalorder %s134, %s148
      %p150 = scmp.eq.s32.totalorder %s19, 0
      %p151 = por %p149, %p150
      %s153 = sadd.s32 %s152, 1
      %p156 = scmp.eq.s32.totalorder %s13, 1
      %p157 = scmp.ne.s32.totalorder %s152, %s154
      %p158 = scmp.eq.s32.totalorder %s13, 0
      %p159 = por %p157, %p158
      %p160 = scmp.ne.s32.totalorder %s152, %s154
      %p161 = scmp.eq.s32.totalorder %s18, 1
      %p162 = por %p160, %p161
      %p163 = scmp.ne.s32.totalorder %s154, %s155
      %p164 = scmp.eq.s32.totalorder %s18, 0
      %p165 = por %p163, %p164
      %p166 = scmp.ne.s32.totalorder %s154, %s155
      %p167 = scmp.eq.s32.totalorder %s19, 1
      %p168 = por %p166, %p167
      %p170 = scmp.ne.s32.totalorder %s155, %s169
      %p171 = scmp.eq.s32.totalorder %s19, 0
      %p172 = por %p170, %p171
      %s173 = ssub.s32 %s13, %s20
      %p174 = scmp.eq.s32.totalorder %s173, 0
      %s176 = sadd.s32 %s175, 1
      %s177 = scalar_select %p174, %s175, %s176
      %p180 = pneg %p174
      %p181 = scmp.eq.s32.totalorder %s13, 1
      %p182 = por %p180, %p181
      %p183 = scmp.ne.s32.totalorder %s175, %s178
      %p184 = scmp.eq.s32.totalorder %s13, 0
      %p185 = por %p183, %p184
      %p186 = scmp.ne.s32.totalorder %s175, %s178
      %p187 = scmp.eq.s32.totalorder %s18, 1
      %p188 = por %p186, %p187
      %p189 = scmp.ne.s32.totalorder %s178, %s179
      %p190 = scmp.eq.s32.totalorder %s18, 0
      %p191 = por %p189, %p190
      %p192 = scmp.ne.s32.totalorder %s178, %s179
      %p193 = scmp.eq.s32.totalorder %s19, 1
      %p194 = por %p192, %p193
      %p196 = scmp.ne.s32.totalorder %s179, %s195
      %p197 = scmp.eq.s32.totalorder %s19, 0
      %p198 = por %p196, %p197
      %p199 = scmp.le.s32.totalorder 1, %s13
      %p200 = scmp.lt.s32.totalorder %s13, 3
      %p201 = pnand %p199, %p200
      %p202 = pneg %p201
      // Predicated region
      $region9: #{multi_kernel_conv.1} parent=5 // pred_check
        _
      $region10: #{multi_kernel_conv.1} parent=5 // pred_check_branch
        %204 = sbr.rel (%p201) target = $region12
      $region11: #{multi_kernel_conv.1} parent=5 // pred_region
        %s205 = ssub.s32 %s13, 1
        // Predicated region
        $region13: #{multi_kernel_conv.1} parent=11 // pred_check
          %p206 = pneg %p60
        $region14: #{multi_kernel_conv.1} parent=11 // pred_check_branch
          %208 = sbr.rel (%p206) target = $region16
        $region15: #{multi_kernel_conv.1} parent=11 // pred_region
          _
        $region16: #{multi_kernel_conv.1} parent=11 // pred_fallthru
          _
        // Predicated region
        $region17: #{multi_kernel_conv.1} parent=11 // pred_check
          %p209 = pneg %p81
        $region18: #{multi_kernel_conv.1} parent=11 // pred_check_branch
          %211 = sbr.rel (%p209) target = $region20
        $region19: #{multi_kernel_conv.1} parent=11 // pred_region
          _
        $region20: #{multi_kernel_conv.1} parent=11 // pred_fallthru
          _
        // Predicated region
        $region21: #{multi_kernel_conv.1} parent=11 // pred_check
          %p212 = pneg %p102
        $region22: #{multi_kernel_conv.1} parent=11 // pred_check_branch
          %214 = sbr.rel (%p212) target = $region24
        $region23: #{multi_kernel_conv.1} parent=11 // pred_region
          _
        $region24: #{multi_kernel_conv.1} parent=11 // pred_fallthru
          _
        // Predicated region
        $region25: #{multi_kernel_conv.1} parent=11 // pred_check
          %p215 = pneg %p123
        $region26: #{multi_kernel_conv.1} parent=11 // pred_check_branch
          %217 = sbr.rel (%p215) target = $region28
        $region27: #{multi_kernel_conv.1} parent=11 // pred_region
          _
        $region28: #{multi_kernel_conv.1} parent=11 // pred_fallthru
          _
        // Predicated region
        $region29: #{multi_kernel_conv.1} parent=11 // pred_check
          %p218 = pneg %p144
        $region30: #{multi_kernel_conv.1} parent=11 // pred_check_branch
          %220 = sbr.rel (%p218) target = $region32
        $region31: #{multi_kernel_conv.1} parent=11 // pred_region
          _
        $region32: #{multi_kernel_conv.1} parent=11 // pred_fallthru
          _
        // Predicated region
        $region33: #{multi_kernel_conv.1} parent=11 // pred_check
          %p221 = pneg %p165
        $region34: #{multi_kernel_conv.1} parent=11 // pred_check_branch
          %223 = sbr.rel (%p221) target = $region36
        $region35: #{multi_kernel_conv.1} parent=11 // pred_region
          _
        $region36: #{multi_kernel_conv.1} parent=11 // pred_fallthru
          _
      $region12: #{multi_kernel_conv.1} parent=5 // pred_fallthru
        _
      %p224 = scmp.lt.s32.totalorder %s13, 2
      // Predicated region
      $region37: #{multi_kernel_conv.1} parent=5 // pred_check
        %p225 = pneg %p224
      $region38: #{multi_kernel_conv.1} parent=5 // pred_check_branch
        %227 = sbr.rel (%p225) target = $region40
      $region39: #{multi_kernel_conv.1} parent=5 // pred_region
        // Predicated region
        $region41: #{multi_kernel_conv.1} parent=39 // pred_check
          %p228 = pneg %p33
        $region42: #{multi_kernel_conv.1} parent=39 // pred_check_branch
          %230 = sbr.rel (%p228) target = $region44
        $region43: #{multi_kernel_conv.1} parent=39 // pred_region
          %s231 = sand.u32 %s23, 1
          %s232 = sand.u32 %s23, 1
          %s233 = smul.addr %s232, 64
          %s234 = scalar_lea.vmem [#allocation2], %s233
          %s235 = smul.u32 2, %s13
          %s236 = smul.addr %s235, 8
          %s237 = scalar_lea.vmem %s0, %s236
          // Predicated region
          $region45: #{multi_kernel_conv.1} parent=43 // pred_check
            _
          $region46: #{multi_kernel_conv.1} parent=43 // pred_check_branch
            %239 = sbr.rel (0) target = $region48
          $region47: #{multi_kernel_conv.1} parent=43 // pred_region
            // Predicated region
            $region49: #{multi_kernel_conv.1} parent=47 // pred_check
              _
            $region50: #{multi_kernel_conv.1} parent=47 // pred_check_branch
              %241 = sbr.rel (0) target = $region52
            $region51: #{multi_kernel_conv.1} parent=47 // pred_region
              loop: start=0, step=1, limit=1
              $region53: #{multi_kernel_conv.1} parent=51 // loop_pre_header
                _
              $region54: #{multi_kernel_conv.1} parent=51 // loop_header
                %s243 = sphi 0, %s247
                %p244 = scmp.ge.s32.totalorder %s243, 1
                %s248 = sphi %s237, %s237
                %s249 = sphi %s234, %s234
              $region55: #{multi_kernel_conv.1} parent=51 // loop_header_branch
                %246 = sbr.rel (%p244) target = $region59
              $region56: #{multi_kernel_conv.1} parent=51 // loop_body
                %v250 = vld [vmem:[%s248] sm:$0xff]
                %251 = vst [vmem:[%s249] sm:$0xff] %v250
                %v252 = vld [vmem:[%s248 + $0x8] sm:$0xff]
                %253 = vst [vmem:[%s249 + $0x8] sm:$0xff] %v252
                %v254 = vld [vmem:[%s248 + $0x20] sm:$0xff]
                %255 = vst [vmem:[%s249 + $0x10] sm:$0xff] %v254
                %v256 = vld [vmem:[%s248 + $0x28] sm:$0xff]
                %257 = vst [vmem:[%s249 + $0x18] sm:$0xff] %v256
                %v258 = vld [vmem:[%s248 + $0x40] sm:$0xff]
                %259 = vst [vmem:[%s249 + $0x20] sm:$0xff] %v258
                %v260 = vld [vmem:[%s248 + $0x48] sm:$0xff]
                %261 = vst [vmem:[%s249 + $0x28] sm:$0xff] %v260
                %v262 = vld [vmem:[%s248 + $0x60] sm:$0xff]
                %263 = vst [vmem:[%s249 + $0x30] sm:$0xff] %v262
                %v264 = vld [vmem:[%s248 + $0x68] sm:$0xff]
                %265 = vst [vmem:[%s249 + $0x38] sm:$0xff] %v264
              $region57: #{multi_kernel_conv.1} parent=51 // loop_footer
                %s247 = sadd.s32 1, %s243
              $region58: #{multi_kernel_conv.1} parent=51 // loop_footer_branch
                %242 = sbr.rel target = $region54
              $region59: #{multi_kernel_conv.1} parent=51 // loop_exit
                _
            $region52: #{multi_kernel_conv.1} parent=47 // pred_fallthru
              _
            // Predicated region
            $region60: #{multi_kernel_conv.1} parent=47 // pred_check
              _
            $region61: #{multi_kernel_conv.1} parent=47 // pred_check_branch
              %267 = sbr.rel target = $region63
            $region62: #{multi_kernel_conv.1} parent=47 // pred_region
              _
            $region63: #{multi_kernel_conv.1} parent=47 // pred_fallthru
              _
          $region48: #{multi_kernel_conv.1} parent=43 // pred_fallthru
            _
          %268 = vnop
        $region44: #{multi_kernel_conv.1} parent=39 // pred_fallthru
          _
      $region40: #{multi_kernel_conv.1} parent=5 // pred_fallthru
        _
      %p269 = scmp.le.s32.totalorder 1, %s13
      %p270 = scmp.lt.s32.totalorder %s13, 3
      %p271 = pnand %p269, %p270
      %p272 = pneg %p271
      // Predicated region
      $region64: #{multi_kernel_conv.1} parent=5 // pred_check
        _
      $region65: #{multi_kernel_conv.1} parent=5 // pred_check_branch
        %274 = sbr.rel (%p271) target = $region67
      $region66: #{multi_kernel_conv.1} parent=5 // pred_region
        %s275 = ssub.s32 %s13, 1
        %s276 = sand.u32 %s26, 1
        %s277 = sand.u32 %s26, 1
        %s278 = smul.addr %s277, 64
        %s279 = scalar_lea.vmem [#allocation2], %s278
        // Predicated region
        $region68: #{multi_kernel_conv.1} parent=66 // pred_check
          %p280 = pneg %p39
        $region69: #{multi_kernel_conv.1} parent=66 // pred_check_branch
          %282 = sbr.rel (%p280) target = $region71
        $region70: #{multi_kernel_conv.1} parent=66 // pred_region
          _
        $region71: #{multi_kernel_conv.1} parent=66 // pred_fallthru
          _
        %s283 = sand.u32 %s26, 1
        %s284 = sand.u32 %s26, 1
        %s285 = smul.addr %s284, 64
        %s286 = scalar_lea.vmem [#allocation2], %s285
        %p287 = pneg %p39
        %p288 = pneg %p36
        %p289 = pneg %p60
        %p290 = pneg %p57
        %p291 = pneg %p81
        %p292 = pneg %p78
        %p293 = pneg %p102
        %p294 = pneg %p99
        %p295 = pneg %p123
        %p296 = pneg %p120
        %p297 = pneg %p144
        %p298 = pneg %p141
        %p299 = pneg %p165
        %p300 = pneg %p162
        %p301 = pneg %p191
        %p302 = pneg %p188
        %s303 = sand.u32 %s178, 1
        %s304 = sand.u32 %s178, 1
        %s305 = smul.addr %s304, 64
        %s306 = scalar_lea.vmem [#allocation3], %s305
        %s307 = smul.u32 2, %s18
        %s308 = smul.u32 2, %s18
        %v310 = vld [vmem:[%s1] sm:$0xff]
        %v311 = vld [vmem:[%s1 + $0x8] sm:$0xff]
        %v312 = vld [vmem:[%s1 + $0x10] sm:$0xff]
        %v313 = vld [vmem:[%s1 + $0x18] sm:$0xff]
        %v314 = vld [vmem:[%s1 + $0x20] sm:$0xff]
        %v315 = vld [vmem:[%s1 + $0x28] sm:$0xff]
        %v316 = vld [vmem:[%s1 + $0x30] sm:$0xff]
        %v317 = vld [vmem:[%s1 + $0x38] sm:$0xff]
        %v318 = vld [vmem:[%s279] sm:$0xff]
        %v319 = vld [vmem:[%s279 + $0x10] sm:$0xff]
        %v320 = vld [vmem:[%s279 + $0x20] sm:$0xff]
        %v321 = vld [vmem:[%s279 + $0x30] sm:$0xff]
        %v322 = vadd.f32 %v318, %v319
        %v323 = vadd.f32 %v322, %v320
        %v324 = vadd.f32 %v323, %v321
        %325 = vadd.xlane.f32.xlu0 %v324
        %v326 = vpop.xlane.xlu0 %325
        %v327 = vrot.slane %v326, 4
        %v328 = vadd.f32 %v326, %v327
        %v329 = vrot.slane %v328, 2
        %v330 = vadd.f32 %v328, %v329
        %v331 = vrot.slane %v330, 1
        %v332 = vadd.f32 %v330, %v331
        %s333 = vtos %v332
        %v334 = vrcp.pop 4096.0
        %s335 = vtos %v334
        %s336 = smul.f32 %s333, %s335
        %v337 = vstv %s336
        %v338 = vsub.f32 %v318, %v337
        %v339 = vsub.f32 %v319, %v337
        %v340 = vsub.f32 %v320, %v337
        %v341 = vsub.f32 %v321, %v337
        %v342 = vmul.f32 %v338, %v338
        %v343 = vmul.f32 %v339, %v339
        %v344 = vmul.f32 %v340, %v340
        %v345 = vmul.f32 %v341, %v341
        %v346 = vadd.f32 %v342, %v343
        %v347 = vadd.f32 %v346, %v344
        %v348 = vadd.f32 %v347, %v345
        %349 = vadd.xlane.f32.xlu0 %v348
        %v350 = vpop.xlane.xlu0 %349
        %v351 = vrot.slane %v350, 4
        %v352 = vadd.f32 %v350, %v351
        %v353 = vrot.slane %v352, 2
        %v354 = vadd.f32 %v352, %v353
        %v355 = vrot.slane %v354, 1
        %v356 = vadd.f32 %v354, %v355
        %s357 = vtos %v356
        %v358 = vrcp.pop 4096.0
        %s359 = vtos %v358
        %s360 = smul.f32 %s357, %s359
        %s361 = sadd.f32 %s360, 1e-05
        %v362 = vstv %s361
        %v363 = vrsqrt.pop %v362
        %s364 = vtos %v363
        %v365 = vstv %s364
        %v366 = vmul.f32 %v338, %v365
        %v367 = vmul.f32 %v339, %v365
        %v368 = vmul.f32 %v340, %v365
        %v369 = vmul.f32 %v341, %v365
        %v370 = vmul.f32 %v366, %v310
        %v371 = vmul.f32 %v367, %v311
        %v372 = vmul.f32 %v368, %v312
        %v373 = vmul.f32 %v369, %v313
        %v374 = vadd.f32 %v370, %v314
        %v375 = vadd.f32 %v371, %v315
        %v376 = vadd.f32 %v372, %v316
        %v377 = vadd.f32 %v373, %v317
        %v378 = vld [vmem:[%s279 + $0x8] sm:$0xff]
        %v379 = vld [vmem:[%s279 + $0x18] sm:$0xff]
        %v380 = vld [vmem:[%s279 + $0x28] sm:$0xff]
        %v381 = vld [vmem:[%s279 + $0x38] sm:$0xff]
        %v382 = vadd.f32 %v378, %v379
        %v383 = vadd.f32 %v382, %v380
        %v384 = vadd.f32 %v383, %v381
        %385 = vadd.xlane.f32.xlu0 %v384
        %v386 = vpop.xlane.xlu0 %385
        %v387 = vrot.slane %v386, 4
        %v388 = vadd.f32 %v386, %v387
        %v389 = vrot.slane %v388, 2
        %v390 = vadd.f32 %v388, %v389
        %v391 = vrot.slane %v390, 1
        %v392 = vadd.f32 %v390, %v391
        %s393 = vtos %v392
        %v394 = vrcp.pop 4096.0
        %s395 = vtos %v394
        %s396 = smul.f32 %s393, %s395
        %v397 = vstv %s396
        %v398 = vsub.f32 %v378, %v397
        %v399 = vsub.f32 %v379, %v397
        %v400 = vsub.f32 %v380, %v397
        %v401 = vsub.f32 %v381, %v397
        %v402 = vmul.f32 %v398, %v398
        %v403 = vmul.f32 %v399, %v399
        %v404 = vmul.f32 %v400, %v400
        %v405 = vmul.f32 %v401, %v401
        %v406 = vadd.f32 %v402, %v403
        %v407 = vadd.f32 %v406, %v404
        %v408 = vadd.f32 %v407, %v405
        %409 = vadd.xlane.f32.xlu0 %v408
        %v410 = vpop.xlane.xlu0 %409
        %v411 = vrot.slane %v410, 4
        %v412 = vadd.f32 %v410, %v411
        %v413 = vrot.slane %v412, 2
        %v414 = vadd.f32 %v412, %v413
        %v415 = vrot.slane %v414, 1
        %v416 = vadd.f32 %v414, %v415
        %s417 = vtos %v416
        %v418 = vrcp.pop 4096.0
        %s419 = vtos %v418
        %s420 = smul.f32 %s417, %s419
        %s421 = sadd.f32 %s420, 1e-05
        %v422 = vstv %s421
        %v423 = vrsqrt.pop %v422
        %s424 = vtos %v423
        %v425 = vstv %s424
        %v426 = vmul.f32 %v398, %v425
        %v427 = vmul.f32 %v399, %v425
        %v428 = vmul.f32 %v400, %v425
        %v429 = vmul.f32 %v401, %v425
        %v430 = vmul.f32 %v426, %v310
        %v431 = vmul.f32 %v427, %v311
        %v432 = vmul.f32 %v428, %v312
        %v433 = vmul.f32 %v429, %v313
        %v434 = vadd.f32 %v430, %v314
        %v435 = vadd.f32 %v431, %v315
        %v436 = vadd.f32 %v432, %v316
        %v437 = vadd.f32 %v433, %v317
        %v438 = vpack.c.bf16 %v375, %v374
        %v439 = vpack.c.bf16 %v435, %v434
        %v440 = vpack.c.bf16 %v377, %v376
        %v441 = vpack.c.bf16 %v437, %v436
        %v442 = vld [vmem:[%s6] sm:$0xff]
        %v443 = vld [vmem:[%s6 + $0x8] sm:$0xff]
        %v444 = vld [vmem:[%s6 + $0x10] sm:$0xff]
        %v445 = vld [vmem:[%s6 + $0x18] sm:$0xff]
        %v446 = vld [vmem:[%s2] sm:$0xf]
        %v447 = vld [vmem:[%s2 + $0x4] sm:$0xf]
        %v448 = vld [vmem:[%s2 + $0x8] sm:$0xf]
        %v449 = vld [vmem:[%s2 + $0xc] sm:$0xf]
        %451 = vset.pattern.permute.xlu0 29
        %452 = vperm.xlu0 %451, %v442
        %v453 = vpop.permute.xlu0 %452
        %456 = vset.pattern.permute.xlu0 29
        %457 = vperm.xlu0 %456, %v443
        %v458 = vpop.permute.xlu0 %457
        %461 = vset.pattern.permute.xlu0 29
        %462 = vperm.xlu0 %461, %v444
        %v463 = vpop.permute.xlu0 %462
        %466 = vset.pattern.permute.xlu0 29
        %467 = vperm.xlu0 %466, %v445
        %v468 = vpop.permute.xlu0 %467
        %v474 = vunpack.c.l.b16 %v446
        %v475 = vunpack.c.l.b16 %v447
        %v476 = vunpack.c.l.b16 %v448
        %v477 = vunpack.c.l.b16 %v449
        %v478 = vpack.c.b16 %v475, %v474
        %v479 = vpack.c.b16 %v477, %v476
        %vm480 = vcmask 261120
        %v482 = vsel %vm480, %v478, 0
        %v485 = vsel %vm480, %v479, 0
        %487 = vmatprep.subr.bf16.mxu0 0
        %488 = vmatpush1.bf16.msra.mxu0 0
        %489 = vmatprep.subr.bf16.mxu0 0
        %490 = vmatpush1.bf16.msra.mxu0 0
        %491 = vmatprep.subr.bf16.mxu0 0
        %492 = vmatpush1.bf16.msra.mxu0 0
        %493 = vmatprep.subr.bf16.mxu0 0
        %494 = vmatpush1.bf16.msra.mxu0 0
        %495 = vmatprep.subr.bf16.mxu0 0
        %496 = vmatpush1.bf16.msra.mxu0 0
        %497 = vmatprep.subr.bf16.mxu0 0
        %498 = vmatpush1.bf16.msra.mxu0 0
        %499 = vmatprep.subr.bf16.mxu0 %v441
        %500 = vmatpush1.bf16.msra.mxu0 %v440
        %501 = vmatprep.subr.bf16.mxu0 %v439
        %502 = vmatpush1.bf16.msra.mxu0 %v438
        %503 = vmatprep.subr.bf16.mxu0 0
        %504 = vmatpush2.bf16.msra.mxu0 0
        %505 = vmatprep.subr.bf16.mxu0 0
        %506 = vmatpush2.bf16.msra.mxu0 0
        %507 = vmatprep.subr.bf16.mxu0 0
        %508 = vmatpush2.bf16.msra.mxu0 0
        %509 = vmatprep.subr.bf16.mxu0 0
        %510 = vmatpush2.bf16.msra.mxu0 0
        %511 = vmatprep.subr.bf16.mxu0 0
        %512 = vmatpush2.bf16.msra.mxu0 0
        %513 = vmatprep.subr.bf16.mxu0 0
        %514 = vmatpush2.bf16.msra.mxu0 0
        %515 = vmatprep.subr.bf16.mxu0 0
        %516 = vmatpush2.bf16.msra.mxu0 0
        %517 = vmatprep.subr.bf16.mxu0 0
        %518 = vmatpush2.bf16.msra.mxu0 0
        %519 = vmatprep.mubr.bf16.mxu0 0
        %520 = vmatmul.mubr.bf16.gmra.mxu0 %v482
        %v521 = vpop.f32.mrf.mxu0
        %v522 = vadd.f32 %v453, %v521
        %v523 = vpop.f32.mrf.mxu0
        %v524 = vadd.f32 %v453, %v523
        %v525 = vpop.f32.mrf.mxu0
        %v526 = vadd.f32 %v458, %v525
        %v527 = vpop.f32.mrf.mxu0
        %v528 = vadd.f32 %v458, %v527
        %529 = vmatprep.mubr.bf16.mxu0 0
        %530 = vmatmul.mubr.bf16.gmra.mxu0 %v485
        %v531 = vpop.f32.mrf.mxu0
        %v532 = vadd.f32 %v463, %v531
        %v533 = vpop.f32.mrf.mxu0
        %v534 = vadd.f32 %v463, %v533
        %v535 = vpop.f32.mrf.mxu0
        %v536 = vadd.f32 %v468, %v535
        %v537 = vpop.f32.mrf.mxu0
        %v538 = vadd.f32 %v468, %v537
        %539 = vdwg.mxu0
        %v540 = vld [vmem:[%s3] sm:$0xf]
        %v541 = vld [vmem:[%s3 + $0x4] sm:$0xf]
        %v542 = vld [vmem:[%s3 + $0x8] sm:$0xf]
        %v543 = vld [vmem:[%s3 + $0xc] sm:$0xf]
        %544 = vset.pattern.permute.xlu0 30
        %545 = vperm.xlu0 %544, %v442
        %v546 = vpop.permute.xlu0 %545
        %548 = vset.pattern.permute.xlu0 30
        %549 = vperm.xlu0 %548, %v443
        %v550 = vpop.permute.xlu0 %549
        %552 = vset.pattern.permute.xlu0 30
        %553 = vperm.xlu0 %552, %v444
        %v554 = vpop.permute.xlu0 %553
        %556 = vset.pattern.permute.xlu0 30
        %557 = vperm.xlu0 %556, %v445
        %v558 = vpop.permute.xlu0 %557
        %v564 = vunpack.c.l.b16 %v540
        %v565 = vunpack.c.l.b16 %v541
        %v566 = vunpack.c.l.b16 %v542
        %v567 = vunpack.c.l.b16 %v543
        %v568 = vpack.c.b16 %v565, %v564
        %v569 = vpack.c.b16 %v567, %v566
        %v571 = vsel %vm480, %v568, 0
        %v574 = vsel %vm480, %v569, 0
        %576 = vmatprep.subr.bf16.mxu0 0
        %577 = vmatpush1.bf16.msra.mxu0 0
        %578 = vmatprep.subr.bf16.mxu0 0
        %579 = vmatpush1.bf16.msra.mxu0 0
        %580 = vmatprep.subr.bf16.mxu0 0
        %581 = vmatpush1.bf16.msra.mxu0 0
        %582 = vmatprep.subr.bf16.mxu0 0
        %583 = vmatpush1.bf16.msra.mxu0 0
        %584 = vmatprep.subr.bf16.mxu0 0
        %585 = vmatpush1.bf16.msra.mxu0 0
        %586 = vmatprep.subr.bf16.mxu0 0
        %587 = vmatpush1.bf16.msra.mxu0 0
        %588 = vmatprep.subr.bf16.mxu0 %v441
        %589 = vmatpush1.bf16.msra.mxu0 %v440
        %590 = vmatprep.subr.bf16.mxu0 %v439
        %591 = vmatpush1.bf16.msra.mxu0 %v438
        %592 = vmatprep.subr.bf16.mxu0 0
        %593 = vmatpush2.bf16.msra.mxu0 0
        %594 = vmatprep.subr.bf16.mxu0 0
        %595 = vmatpush2.bf16.msra.mxu0 0
        %596 = vmatprep.subr.bf16.mxu0 0
        %597 = vmatpush2.bf16.msra.mxu0 0
        %598 = vmatprep.subr.bf16.mxu0 0
        %599 = vmatpush2.bf16.msra.mxu0 0
        %600 = vmatprep.subr.bf16.mxu0 0
        %601 = vmatpush2.bf16.msra.mxu0 0
        %602 = vmatprep.subr.bf16.mxu0 0
        %603 = vmatpush2.bf16.msra.mxu0 0
        %604 = vmatprep.subr.bf16.mxu0 0
        %605 = vmatpush2.bf16.msra.mxu0 0
        %606 = vmatprep.subr.bf16.mxu0 0
        %607 = vmatpush2.bf16.msra.mxu0 0
        %608 = vmatprep.mubr.bf16.mxu0 0
        %609 = vmatmul.mubr.bf16.gmra.mxu0 %v571
        %v610 = vpop.f32.mrf.mxu0
        %v611 = vadd.f32 %v546, %v610
        %v612 = vpop.f32.mrf.mxu0
        %v613 = vadd.f32 %v546, %v612
        %v614 = vpop.f32.mrf.mxu0
        %v615 = vadd.f32 %v550, %v614
        %v616 = vpop.f32.mrf.mxu0
        %v617 = vadd.f32 %v550, %v616
        %618 = vmatprep.mubr.bf16.mxu0 0
        %619 = vmatmul.mubr.bf16.gmra.mxu0 %v574
        %v620 = vpop.f32.mrf.mxu0
        %v621 = vadd.f32 %v554, %v620
        %v622 = vpop.f32.mrf.mxu0
        %v623 = vadd.f32 %v554, %v622
        %v624 = vpop.f32.mrf.mxu0
        %v625 = vadd.f32 %v558, %v624
        %v626 = vpop.f32.mrf.mxu0
        %v627 = vadd.f32 %v558, %v626
        %628 = vdwg.mxu0
        %v629 = vlaneseq
        %v630 = vand.u32 %v629, 127
        %631 = vset.pattern.permute.xlu0 0
        %632 = vperm.xlu0 %631, %v442
        %v633 = vpop.permute.xlu0 %632
        %v635 = vmul.f32 %v633, %v522
        %v636 = vmul.f32 %v633, %v524
        %v637 = vadd.f32 %v635, 0.0
        %v638 = vadd.f32 %v636, 0.0
        %639 = vset.pattern.permute.xlu0 7
        %640 = vperm.xlu0 %639, %v442
        %v641 = vpop.permute.xlu0 %640
        %v643 = vmul.f32 %v641, %v522
        %v644 = vmul.f32 %v641, %v524
        %v645 = vadd.f32 %v643, 0.0
        %v646 = vadd.f32 %v644, 0.0
        %647 = vset.pattern.permute.xlu0 23
        %648 = vperm.xlu0 %647, %v442
        %v649 = vpop.permute.xlu0 %648
        %v651 = vadd.f32 %v637, %v649
        %v652 = vadd.f32 %v638, %v649
        %653 = vset.pattern.permute.xlu0 24
        %654 = vperm.xlu0 %653, %v442
        %v655 = vpop.permute.xlu0 %654
        %v657 = vadd.f32 %v645, %v655
        %v658 = vadd.f32 %v646, %v655
        %v659 = vadd.s32 %v630, 4294967295
        %vm660 = vcmp.ge.s32.totalorder %v659, 0
        %vm661 = vcmp.lt.s32.totalorder %v659, 128
        %vm662 = vmand %vm660, %vm661
        %v663 = vsel %vm662, 1, 0
        %v664 = vcvt.s32.f32 %v663
        %665 = vrot.lane.b32.xlu0 %v651, 1
        %v666 = vpop.permute.xlu0 %665
        %667 = vrot.lane.b32.xlu0 %v652, 1
        %v668 = vpop.permute.xlu0 %667
        %vm669 = vcmp.lt.s32.totalorder %v630, 1
        %v670 = vsel %vm669, %v666, %v668
        %v671 = vsel %vm669, %v668, %v666
        %v672 = vlaneseq
        %v673 = vshrl.u32 %v672, 7
        %v674 = vsub.s32 0, %v673
        %v675 = vrot.slane %v664, %v674
        %v676 = vmul.f32 %v671, %v675
        %v677 = vmul.f32 %v670, %v675
        %678 = vset.pattern.permute.xlu0 14
        %679 = vperm.xlu0 %678, %v442
        %v680 = vpop.permute.xlu0 %679
        %v682 = vmul.f32 %v680, %v676
        %v683 = vmul.f32 %v680, %v677
        %v684 = vadd.f32 %v682, 0.0
        %v685 = vadd.f32 %v683, 0.0
        %686 = vset.pattern.permute.xlu0 15
        %687 = vperm.xlu0 %686, %v442
        %v688 = vpop.permute.xlu0 %687
        %v690 = vmul.f32 %v688, %v651
        %v691 = vmul.f32 %v688, %v652
        %v692 = vadd.f32 %v684, %v690
        %v693 = vadd.f32 %v685, %v691
        %v694 = vadd.s32 %v630, 1
        %vm695 = vcmp.ge.s32.totalorder %v694, 0
        %vm696 = vcmp.lt.s32.totalorder %v694, 128
        %vm697 = vmand %vm695, %vm696
        %v698 = vsel %vm697, 1, 0
        %v699 = vcvt.s32.f32 %v698
        %700 = vrot.lane.b32.xlu0 %v651, 127
        %v701 = vpop.permute.xlu0 %700
        %702 = vrot.lane.b32.xlu0 %v652, 127
        %v703 = vpop.permute.xlu0 %702
        %vm704 = vcmp.lt.s32.totalorder %v630, 127
        %v705 = vsel %vm704, %v701, %v703
        %v706 = vsel %vm704, %v703, %v701
        %v707 = vlaneseq
        %v708 = vshrl.u32 %v707, 7
        %v709 = vsub.s32 0, %v708
        %v710 = vrot.slane %v699, %v709
        %v711 = vmul.f32 %v705, %v710
        %v712 = vmul.f32 %v706, %v710
        %713 = vset.pattern.permute.xlu0 16
        %714 = vperm.xlu0 %713, %v442
        %v715 = vpop.permute.xlu0 %714
        %v717 = vmul.f32 %v715, %v711
        %v718 = vmul.f32 %v715, %v712
        %v719 = vadd.f32 %v692, %v717
        %v720 = vadd.f32 %v693, %v718
        %721 = vset.pattern.permute.xlu0 25
        %722 = vperm.xlu0 %721, %v442
        %v723 = vpop.permute.xlu0 %722
        %v725 = vadd.f32 %v719, %v723
        %v726 = vadd.f32 %v720, %v723
        %727 = vrot.lane.b32.xlu0 %v526, 1
        %v728 = vpop.permute.xlu0 %727
        %729 = vrot.lane.b32.xlu0 %v528, 1
        %v730 = vpop.permute.xlu0 %729
        %v731 = vsel %vm669, %v728, %v730
        %v732 = vsel %vm669, %v730, %v728
        %v733 = vmul.f32 %v732, %v675
        %v734 = vmul.f32 %v731, %v675
        %735 = vset.pattern.permute.xlu0 0
        %736 = vperm.xlu0 %735, %v443
        %v737 = vpop.permute.xlu0 %736
        %v739 = vmul.f32 %v737, %v733
        %v740 = vmul.f32 %v737, %v734
        %v741 = vadd.f32 %v739, 0.0
        %v742 = vadd.f32 %v740, 0.0
        %743 = vset.pattern.permute.xlu0 7
        %744 = vperm.xlu0 %743, %v443
        %v745 = vpop.permute.xlu0 %744
        %v747 = vmul.f32 %v745, %v733
        %v748 = vmul.f32 %v745, %v734
        %v749 = vadd.f32 %v747, 0.0
        %v750 = vadd.f32 %v748, 0.0
        %751 = vset.pattern.permute.xlu0 1
        %752 = vperm.xlu0 %751, %v443
        %v753 = vpop.permute.xlu0 %752
        %v755 = vmul.f32 %v753, %v526
        %v756 = vmul.f32 %v753, %v528
        %v757 = vadd.f32 %v741, %v755
        %v758 = vadd.f32 %v742, %v756
        %759 = vset.pattern.permute.xlu0 8
        %760 = vperm.xlu0 %759, %v443
        %v761 = vpop.permute.xlu0 %760
        %v763 = vmul.f32 %v761, %v526
        %v764 = vmul.f32 %v761, %v528
        %v765 = vadd.f32 %v749, %v763
        %v766 = vadd.f32 %v750, %v764
        %767 = vrot.lane.b32.xlu0 %v526, 127
        %v768 = vpop.permute.xlu0 %767
        %769 = vrot.lane.b32.xlu0 %v528, 127
        %v770 = vpop.permute.xlu0 %769
        %v771 = vsel %vm704, %v768, %v770
        %v772 = vsel %vm704, %v770, %v768
        %v773 = vmul.f32 %v771, %v710
        %v774 = vmul.f32 %v772, %v710
        %775 = vset.pattern.permute.xlu0 2
        %776 = vperm.xlu0 %775, %v443
        %v777 = vpop.permute.xlu0 %776
        %v779 = vmul.f32 %v777, %v773
        %v780 = vmul.f32 %v777, %v774
        %v781 = vadd.f32 %v757, %v779
        %v782 = vadd.f32 %v758, %v780
        %783 = vset.pattern.permute.xlu0 9
        %784 = vperm.xlu0 %783, %v443
        %v785 = vpop.permute.xlu0 %784
        %v787 = vmul.f32 %v785, %v773
        %v788 = vmul.f32 %v785, %v774
        %v789 = vadd.f32 %v765, %v787
        %v790 = vadd.f32 %v766, %v788
        %791 = vset.pattern.permute.xlu0 23
        %792 = vperm.xlu0 %791, %v443
        %v793 = vpop.permute.xlu0 %792
        %v795 = vadd.f32 %v781, %v793
        %v796 = vadd.f32 %v782, %v793
        %797 = vset.pattern.permute.xlu0 24
        %798 = vperm.xlu0 %797, %v443
        %v799 = vpop.permute.xlu0 %798
        %v801 = vadd.f32 %v789, %v799
        %v802 = vadd.f32 %v790, %v799
        %v803 = vadd.s32 %v630, 4294967292
        %vm804 = vcmp.ge.s32.totalorder %v803, 0
        %vm805 = vcmp.lt.s32.totalorder %v803, 128
        %vm806 = vmand %vm804, %vm805
        %v807 = vsel %vm806, 1, 0
        %v808 = vcvt.s32.f32 %v807
        %809 = vrot.lane.b32.xlu0 %v795, 4
        %v810 = vpop.permute.xlu0 %809
        %811 = vrot.lane.b32.xlu0 %v796, 4
        %v812 = vpop.permute.xlu0 %811
        %vm813 = vcmp.lt.s32.totalorder %v630, 4
        %v814 = vsel %vm813, %v810, %v812
        %v815 = vsel %vm813, %v812, %v810
        %v816 = vlaneseq
        %v817 = vshrl.u32 %v816, 7
        %v818 = vsub.s32 0, %v817
        %v819 = vrot.slane %v808, %v818
        %v820 = vmul.f32 %v815, %v819
        %v821 = vmul.f32 %v814, %v819
        %822 = vset.pattern.permute.xlu0 14
        %823 = vperm.xlu0 %822, %v443
        %v824 = vpop.permute.xlu0 %823
        %v826 = vmul.f32 %v824, %v820
        %v827 = vmul.f32 %v824, %v821
        %v828 = vadd.f32 %v826, 0.0
        %v829 = vadd.f32 %v827, 0.0
        %v830 = vadd.s32 %v630, 4294967294
        %vm831 = vcmp.ge.s32.totalorder %v830, 0
        %vm832 = vcmp.lt.s32.totalorder %v830, 128
        %vm833 = vmand %vm831, %vm832
        %v834 = vsel %vm833, 1, 0
        %v835 = vcvt.s32.f32 %v834
        %836 = vrot.lane.b32.xlu0 %v795, 2
        %v837 = vpop.permute.xlu0 %836
        %838 = vrot.lane.b32.xlu0 %v796, 2
        %v839 = vpop.permute.xlu0 %838
        %vm840 = vcmp.lt.s32.totalorder %v630, 2
        %v841 = vsel %vm840, %v837, %v839
        %v842 = vsel %vm840, %v839, %v837
        %v843 = vlaneseq
        %v844 = vshrl.u32 %v843, 7
        %v845 = vsub.s32 0, %v844
        %v846 = vrot.slane %v835, %v845
        %v847 = vmul.f32 %v842, %v846
        %v848 = vmul.f32 %v841, %v846
        %849 = vset.pattern.permute.xlu0 15
        %850 = vperm.xlu0 %849, %v443
        %v851 = vpop.permute.xlu0 %850
        %v853 = vmul.f32 %v851, %v847
        %v854 = vmul.f32 %v851, %v848
        %v855 = vadd.f32 %v828, %v853
        %v856 = vadd.f32 %v829, %v854
        %857 = vset.pattern.permute.xlu0 16
        %858 = vperm.xlu0 %857, %v443
        %v859 = vpop.permute.xlu0 %858
        %v861 = vmul.f32 %v859, %v795
        %v862 = vmul.f32 %v859, %v796
        %v863 = vadd.f32 %v855, %v861
        %v864 = vadd.f32 %v856, %v862
        %v865 = vadd.s32 %v630, 2
        %vm866 = vcmp.ge.s32.totalorder %v865, 0
        %vm867 = vcmp.lt.s32.totalorder %v865, 128
        %vm868 = vmand %vm866, %vm867
        %v869 = vsel %vm868, 1, 0
        %v870 = vcvt.s32.f32 %v869
        %871 = vrot.lane.b32.xlu0 %v795, 126
        %v872 = vpop.permute.xlu0 %871
        %873 = vrot.lane.b32.xlu0 %v796, 126
        %v874 = vpop.permute.xlu0 %873
        %vm875 = vcmp.lt.s32.totalorder %v630, 126
        %v876 = vsel %vm875, %v872, %v874
        %v877 = vsel %vm875, %v874, %v872
        %v878 = vlaneseq
        %v879 = vshrl.u32 %v878, 7
        %v880 = vsub.s32 0, %v879
        %v881 = vrot.slane %v870, %v880
        %v882 = vmul.f32 %v876, %v881
        %v883 = vmul.f32 %v877, %v881
        %884 = vset.pattern.permute.xlu0 17
        %885 = vperm.xlu0 %884, %v443
        %v886 = vpop.permute.xlu0 %885
        %v888 = vmul.f32 %v886, %v882
        %v889 = vmul.f32 %v886, %v883
        %v890 = vadd.f32 %v863, %v888
        %v891 = vadd.f32 %v864, %v889
        %v892 = vadd.s32 %v630, 4
        %vm893 = vcmp.ge.s32.totalorder %v892, 0
        %vm894 = vcmp.lt.s32.totalorder %v892, 128
        %vm895 = vmand %vm893, %vm894
        %v896 = vsel %vm895, 1, 0
        %v897 = vcvt.s32.f32 %v896
        %898 = vrot.lane.b32.xlu0 %v795, 124
        %v899 = vpop.permute.xlu0 %898
        %900 = vrot.lane.b32.xlu0 %v796, 124
        %v901 = vpop.permute.xlu0 %900
        %vm902 = vcmp.lt.s32.totalorder %v630, 124
        %v903 = vsel %vm902, %v899, %v901
        %v904 = vsel %vm902, %v901, %v899
        %v905 = vlaneseq
        %v906 = vshrl.u32 %v905, 7
        %v907 = vsub.s32 0, %v906
        %v908 = vrot.slane %v897, %v907
        %v909 = vmul.f32 %v903, %v908
        %v910 = vmul.f32 %v904, %v908
        %911 = vset.pattern.permute.xlu0 18
        %912 = vperm.xlu0 %911, %v443
        %v913 = vpop.permute.xlu0 %912
        %v915 = vmul.f32 %v913, %v909
        %v916 = vmul.f32 %v913, %v910
        %v917 = vadd.f32 %v890, %v915
        %v918 = vadd.f32 %v891, %v916
        %919 = vset.pattern.permute.xlu0 25
        %920 = vperm.xlu0 %919, %v443
        %v921 = vpop.permute.xlu0 %920
        %v923 = vadd.f32 %v917, %v921
        %v924 = vadd.f32 %v918, %v921
        %925 = vrot.lane.b32.xlu0 %v532, 2
        %v926 = vpop.permute.xlu0 %925
        %927 = vrot.lane.b32.xlu0 %v534, 2
        %v928 = vpop.permute.xlu0 %927
        %v929 = vsel %vm840, %v926, %v928
        %v930 = vsel %vm840, %v928, %v926
        %v931 = vmul.f32 %v930, %v846
        %v932 = vmul.f32 %v929, %v846
        %933 = vset.pattern.permute.xlu0 0
        %934 = vperm.xlu0 %933, %v444
        %v935 = vpop.permute.xlu0 %934
        %v937 = vmul.f32 %v935, %v931
        %v938 = vmul.f32 %v935, %v932
        %v939 = vadd.f32 %v937, 0.0
        %v940 = vadd.f32 %v938, 0.0
        %941 = vset.pattern.permute.xlu0 7
        %942 = vperm.xlu0 %941, %v444
        %v943 = vpop.permute.xlu0 %942
        %v945 = vmul.f32 %v943, %v931
        %v946 = vmul.f32 %v943, %v932
        %v947 = vadd.f32 %v945, 0.0
        %v948 = vadd.f32 %v946, 0.0
        %949 = vrot.lane.b32.xlu0 %v532, 1
        %v950 = vpop.permute.xlu0 %949
        %951 = vrot.lane.b32.xlu0 %v534, 1
        %v952 = vpop.permute.xlu0 %951
        %v953 = vsel %vm669, %v950, %v952
        %v954 = vsel %vm669, %v952, %v950
        %v955 = vmul.f32 %v954, %v675
        %v956 = vmul.f32 %v953, %v675
        %957 = vset.pattern.permute.xlu0 1
        %958 = vperm.xlu0 %957, %v444
        %v959 = vpop.permute.xlu0 %958
        %v961 = vmul.f32 %v959, %v955
        %v962 = vmul.f32 %v959, %v956
        %v963 = vadd.f32 %v939, %v961
        %v964 = vadd.f32 %v940, %v962
        %965 = vset.pattern.permute.xlu0 8
        %966 = vperm.xlu0 %965, %v444
        %v967 = vpop.permute.xlu0 %966
        %v969 = vmul.f32 %v967, %v955
        %v970 = vmul.f32 %v967, %v956
        %v971 = vadd.f32 %v947, %v969
        %v972 = vadd.f32 %v948, %v970
        %973 = vset.pattern.permute.xlu0 2
        %974 = vperm.xlu0 %973, %v444
        %v975 = vpop.permute.xlu0 %974
        %v977 = vmul.f32 %v975, %v532
        %v978 = vmul.f32 %v975, %v534
        %v979 = vadd.f32 %v963, %v977
        %v980 = vadd.f32 %v964, %v978
        %981 = vset.pattern.permute.xlu0 9
        %982 = vperm.xlu0 %981, %v444
        %v983 = vpop.permute.xlu0 %982
        %v985 = vmul.f32 %v983, %v532
        %v986 = vmul.f32 %v983, %v534
        %v987 = vadd.f32 %v971, %v985
        %v988 = vadd.f32 %v972, %v986
        %989 = vrot.lane.b32.xlu0 %v532, 127
        %v990 = vpop.permute.xlu0 %989
        %991 = vrot.lane.b32.xlu0 %v534, 127
        %v992 = vpop.permute.xlu0 %991
        %v993 = vsel %vm704, %v990, %v992
        %v994 = vsel %vm704, %v992, %v990
        %v995 = vmul.f32 %v993, %v710
        %v996 = vmul.f32 %v994, %v710
        %997 = vset.pattern.permute.xlu0 3
        %998 = vperm.xlu0 %997, %v444
        %v999 = vpop.permute.xlu0 %998
        %v1001 = vmul.f32 %v999, %v995
        %v1002 = vmul.f32 %v999, %v996
        %v1003 = vadd.f32 %v979, %v1001
        %v1004 = vadd.f32 %v980, %v1002
        %1005 = vset.pattern.permute.xlu0 10
        %1006 = vperm.xlu0 %1005, %v444
        %v1007 = vpop.permute.xlu0 %1006
        %v1009 = vmul.f32 %v1007, %v995
        %v1010 = vmul.f32 %v1007, %v996
        %v1011 = vadd.f32 %v987, %v1009
        %v1012 = vadd.f32 %v988, %v1010
        %1013 = vrot.lane.b32.xlu0 %v532, 126
        %v1014 = vpop.permute.xlu0 %1013
        %1015 = vrot.lane.b32.xlu0 %v534, 126
        %v1016 = vpop.permute.xlu0 %1015
        %v1017 = vsel %vm875, %v1014, %v1016
        %v1018 = vsel %vm875, %v1016, %v1014
        %v1019 = vmul.f32 %v1017, %v881
        %v1020 = vmul.f32 %v1018, %v881
        %1021 = vset.pattern.permute.xlu0 4
        %1022 = vperm.xlu0 %1021, %v444
        %v1023 = vpop.permute.xlu0 %1022
        %v1025 = vmul.f32 %v1023, %v1019
        %v1026 = vmul.f32 %v1023, %v1020
        %v1027 = vadd.f32 %v1003, %v1025
        %v1028 = vadd.f32 %v1004, %v1026
        %1029 = vset.pattern.permute.xlu0 11
        %1030 = vperm.xlu0 %1029, %v444
        %v1031 = vpop.permute.xlu0 %1030
        %v1033 = vmul.f32 %v1031, %v1019
        %v1034 = vmul.f32 %v1031, %v1020
        %v1035 = vadd.f32 %v1011, %v1033
        %v1036 = vadd.f32 %v1012, %v1034
        %1037 = vset.pattern.permute.xlu0 23
        %1038 = vperm.xlu0 %1037, %v444
        %v1039 = vpop.permute.xlu0 %1038
        %v1041 = vadd.f32 %v1027, %v1039
        %v1042 = vadd.f32 %v1028, %v1039
        %1043 = vset.pattern.permute.xlu0 24
        %1044 = vperm.xlu0 %1043, %v444
        %v1045 = vpop.permute.xlu0 %1044
        %v1047 = vadd.f32 %v1035, %v1045
        %v1048 = vadd.f32 %v1036, %v1045
        %v1049 = vadd.s32 %v630, 4294967287
        %vm1050 = vcmp.ge.s32.totalorder %v1049, 0
        %vm1051 = vcmp.lt.s32.totalorder %v1049, 128
        %vm1052 = vmand %vm1050, %vm1051
        %v1053 = vsel %vm1052, 1, 0
        %v1054 = vcvt.s32.f32 %v1053
        %1055 = vrot.lane.b32.xlu0 %v1041, 9
        %v1056 = vpop.permute.xlu0 %1055
        %1057 = vrot.lane.b32.xlu0 %v1042, 9
        %v1058 = vpop.permute.xlu0 %1057
        %vm1059 = vcmp.lt.s32.totalorder %v630, 9
        %v1060 = vsel %vm1059, %v1056, %v1058
        %v1061 = vsel %vm1059, %v1058, %v1056
        %v1062 = vlaneseq
        %v1063 = vshrl.u32 %v1062, 7
        %v1064 = vsub.s32 0, %v1063
        %v1065 = vrot.slane %v1054, %v1064
        %v1066 = vmul.f32 %v1061, %v1065
        %v1067 = vmul.f32 %v1060, %v1065
        %1068 = vset.pattern.permute.xlu0 14
        %1069 = vperm.xlu0 %1068, %v444
        %v1070 = vpop.permute.xlu0 %1069
        %v1072 = vmul.f32 %v1070, %v1066
        %v1073 = vmul.f32 %v1070, %v1067
        %v1074 = vadd.f32 %v1072, 0.0
        %v1075 = vadd.f32 %v1073, 0.0
        %v1076 = vadd.s32 %v630, 4294967290
        %vm1077 = vcmp.ge.s32.totalorder %v1076, 0
        %vm1078 = vcmp.lt.s32.totalorder %v1076, 128
        %vm1079 = vmand %vm1077, %vm1078
        %v1080 = vsel %vm1079, 1, 0
        %v1081 = vcvt.s32.f32 %v1080
        %1082 = vrot.lane.b32.xlu0 %v1041, 6
        %v1083 = vpop.permute.xlu0 %1082
        %1084 = vrot.lane.b32.xlu0 %v1042, 6
        %v1085 = vpop.permute.xlu0 %1084
        %vm1086 = vcmp.lt.s32.totalorder %v630, 6
        %v1087 = vsel %vm1086, %v1083, %v1085
        %v1088 = vsel %vm1086, %v1085, %v1083
        %v1089 = vlaneseq
        %v1090 = vshrl.u32 %v1089, 7
        %v1091 = vsub.s32 0, %v1090
        %v1092 = vrot.slane %v1081, %v1091
        %v1093 = vmul.f32 %v1088, %v1092
        %v1094 = vmul.f32 %v1087, %v1092
        %1095 = vset.pattern.permute.xlu0 15
        %1096 = vperm.xlu0 %1095, %v444
        %v1097 = vpop.permute.xlu0 %1096
        %v1099 = vmul.f32 %v1097, %v1093
        %v1100 = vmul.f32 %v1097, %v1094
        %v1101 = vadd.f32 %v1074, %v1099
        %v1102 = vadd.f32 %v1075, %v1100
        %v1103 = vadd.s32 %v630, 4294967293
        %vm1104 = vcmp.ge.s32.totalorder %v1103, 0
        %vm1105 = vcmp.lt.s32.totalorder %v1103, 128
        %vm1106 = vmand %vm1104, %vm1105
        %v1107 = vsel %vm1106, 1, 0
        %v1108 = vcvt.s32.f32 %v1107
        %1109 = vrot.lane.b32.xlu0 %v1041, 3
        %v1110 = vpop.permute.xlu0 %1109
        %1111 = vrot.lane.b32.xlu0 %v1042, 3
        %v1112 = vpop.permute.xlu0 %1111
        %vm1113 = vcmp.lt.s32.totalorder %v630, 3
        %v1114 = vsel %vm1113, %v1110, %v1112
        %v1115 = vsel %vm1113, %v1112, %v1110
        %v1116 = vlaneseq
        %v1117 = vshrl.u32 %v1116, 7
        %v1118 = vsub.s32 0, %v1117
        %v1119 = vrot.slane %v1108, %v1118
        %v1120 = vmul.f32 %v1115, %v1119
        %v1121 = vmul.f32 %v1114, %v1119
        %1122 = vset.pattern.permute.xlu0 16
        %1123 = vperm.xlu0 %1122, %v444
        %v1124 = vpop.permute.xlu0 %1123
        %v1126 = vmul.f32 %v1124, %v1120
        %v1127 = vmul.f32 %v1124, %v1121
        %v1128 = vadd.f32 %v1101, %v1126
        %v1129 = vadd.f32 %v1102, %v1127
        %1130 = vset.pattern.permute.xlu0 17
        %1131 = vperm.xlu0 %1130, %v444
        %v1132 = vpop.permute.xlu0 %1131
        %v1134 = vmul.f32 %v1132, %v1041
        %v1135 = vmul.f32 %v1132, %v1042
        %v1136 = vadd.f32 %v1128, %v1134
        %v1137 = vadd.f32 %v1129, %v1135
        %v1138 = vadd.s32 %v630, 3
        %vm1139 = vcmp.ge.s32.totalorder %v1138, 0
        %vm1140 = vcmp.lt.s32.totalorder %v1138, 128
        %vm1141 = vmand %vm1139, %vm1140
        %v1142 = vsel %vm1141, 1, 0
        %v1143 = vcvt.s32.f32 %v1142
        %1144 = vrot.lane.b32.xlu0 %v1041, 125
        %v1145 = vpop.permute.xlu0 %1144
        %1146 = vrot.lane.b32.xlu0 %v1042, 125
        %v1147 = vpop.permute.xlu0 %1146
        %vm1148 = vcmp.lt.s32.totalorder %v630, 125
        %v1149 = vsel %vm1148, %v1145, %v1147
        %v1150 = vsel %vm1148, %v1147, %v1145
        %v1151 = vlaneseq
        %v1152 = vshrl.u32 %v1151, 7
        %v1153 = vsub.s32 0, %v1152
        %v1154 = vrot.slane %v1143, %v1153
        %v1155 = vmul.f32 %v1149, %v1154
        %v1156 = vmul.f32 %v1150, %v1154
        %1157 = vset.pattern.permute.xlu0 18
        %1158 = vperm.xlu0 %1157, %v444
        %v1159 = vpop.permute.xlu0 %1158
        %v1161 = vmul.f32 %v1159, %v1155
        %v1162 = vmul.f32 %v1159, %v1156
        %v1163 = vadd.f32 %v1136, %v1161
        %v1164 = vadd.f32 %v1137, %v1162
        %v1165 = vadd.s32 %v630, 6
        %vm1166 = vcmp.ge.s32.totalorder %v1165, 0
        %vm1167 = vcmp.lt.s32.totalorder %v1165, 128
        %vm1168 = vmand %vm1166, %vm1167
        %v1169 = vsel %vm1168, 1, 0
        %v1170 = vcvt.s32.f32 %v1169
        %1171 = vrot.lane.b32.xlu0 %v1041, 122
        %v1172 = vpop.permute.xlu0 %1171
        %1173 = vrot.lane.b32.xlu0 %v1042, 122
        %v1174 = vpop.permute.xlu0 %1173
        %vm1175 = vcmp.lt.s32.totalorder %v630, 122
        %v1176 = vsel %vm1175, %v1172, %v1174
        %v1177 = vsel %vm1175, %v1174, %v1172
        %v1178 = vlaneseq
        %v1179 = vshrl.u32 %v1178, 7
        %v1180 = vsub.s32 0, %v1179
        %v1181 = vrot.slane %v1170, %v1180
        %v1182 = vmul.f32 %v1176, %v1181
        %v1183 = vmul.f32 %v1177, %v1181
        %1184 = vset.pattern.permute.xlu0 19
        %1185 = vperm.xlu0 %1184, %v444
        %v1186 = vpop.permute.xlu0 %1185
        %v1188 = vmul.f32 %v1186, %v1182
        %v1189 = vmul.f32 %v1186, %v1183
        %v1190 = vadd.f32 %v1163, %v1188
        %v1191 = vadd.f32 %v1164, %v1189
        %v1192 = vadd.s32 %v630, 9
        %vm1193 = vcmp.ge.s32.totalorder %v1192, 0
        %vm1194 = vcmp.lt.s32.totalorder %v1192, 128
        %vm1195 = vmand %vm1193, %vm1194
        %v1196 = vsel %vm1195, 1, 0
        %v1197 = vcvt.s32.f32 %v1196
        %1198 = vrot.lane.b32.xlu0 %v1041, 119
        %v1199 = vpop.permute.xlu0 %1198
        %1200 = vrot.lane.b32.xlu0 %v1042, 119
        %v1201 = vpop.permute.xlu0 %1200
        %vm1202 = vcmp.lt.s32.totalorder %v630, 119
        %v1203 = vsel %vm1202, %v1199, %v1201
        %v1204 = vsel %vm1202, %v1201, %v1199
        %v1205 = vlaneseq
        %v1206 = vshrl.u32 %v1205, 7
        %v1207 = vsub.s32 0, %v1206
        %v1208 = vrot.slane %v1197, %v1207
        %v1209 = vmul.f32 %v1203, %v1208
        %v1210 = vmul.f32 %v1204, %v1208
        %1211 = vset.pattern.permute.xlu0 20
        %1212 = vperm.xlu0 %1211, %v444
        %v1213 = vpop.permute.xlu0 %1212
        %v1215 = vmul.f32 %v1213, %v1209
        %v1216 = vmul.f32 %v1213, %v1210
        %v1217 = vadd.f32 %v1190, %v1215
        %v1218 = vadd.f32 %v1191, %v1216
        %1219 = vset.pattern.permute.xlu0 25
        %1220 = vperm.xlu0 %1219, %v444
        %v1221 = vpop.permute.xlu0 %1220
        %v1223 = vadd.f32 %v1217, %v1221
        %v1224 = vadd.f32 %v1218, %v1221
        %1225 = vrot.lane.b32.xlu0 %v536, 3
        %v1226 = vpop.permute.xlu0 %1225
        %1227 = vrot.lane.b32.xlu0 %v538, 3
        %v1228 = vpop.permute.xlu0 %1227
        %v1229 = vsel %vm1113, %v1226, %v1228
        %v1230 = vsel %vm1113, %v1228, %v1226
        %v1231 = vmul.f32 %v1230, %v1119
        %v1232 = vmul.f32 %v1229, %v1119
        %1233 = vset.pattern.permute.xlu0 0
        %1234 = vperm.xlu0 %1233, %v445
        %v1235 = vpop.permute.xlu0 %1234
        %v1237 = vmul.f32 %v1235, %v1231
        %v1238 = vmul.f32 %v1235, %v1232
        %v1239 = vadd.f32 %v1237, 0.0
        %v1240 = vadd.f32 %v1238, 0.0
        %1241 = vset.pattern.permute.xlu0 7
        %1242 = vperm.xlu0 %1241, %v445
        %v1243 = vpop.permute.xlu0 %1242
        %v1245 = vmul.f32 %v1243, %v1231
        %v1246 = vmul.f32 %v1243, %v1232
        %v1247 = vadd.f32 %v1245, 0.0
        %v1248 = vadd.f32 %v1246, 0.0
        %1249 = vrot.lane.b32.xlu0 %v536, 2
        %v1250 = vpop.permute.xlu0 %1249
        %1251 = vrot.lane.b32.xlu0 %v538, 2
        %v1252 = vpop.permute.xlu0 %1251
        %v1253 = vsel %vm840, %v1250, %v1252
        %v1254 = vsel %vm840, %v1252, %v1250
        %v1255 = vmul.f32 %v1254, %v846
        %v1256 = vmul.f32 %v1253, %v846
        %1257 = vset.pattern.permute.xlu0 1
        %1258 = vperm.xlu0 %1257, %v445
        %v1259 = vpop.permute.xlu0 %1258
        %v1261 = vmul.f32 %v1259, %v1255
        %v1262 = vmul.f32 %v1259, %v1256
        %v1263 = vadd.f32 %v1239, %v1261
        %v1264 = vadd.f32 %v1240, %v1262
        %1265 = vset.pattern.permute.xlu0 8
        %1266 = vperm.xlu0 %1265, %v445
        %v1267 = vpop.permute.xlu0 %1266
        %v1269 = vmul.f32 %v1267, %v1255
        %v1270 = vmul.f32 %v1267, %v1256
        %v1271 = vadd.f32 %v1247, %v1269
        %v1272 = vadd.f32 %v1248, %v1270
        %1273 = vrot.lane.b32.xlu0 %v536, 1
        %v1274 = vpop.permute.xlu0 %1273
        %1275 = vrot.lane.b32.xlu0 %v538, 1
        %v1276 = vpop.permute.xlu0 %1275
        %v1277 = vsel %vm669, %v1274, %v1276
        %v1278 = vsel %vm669, %v1276, %v1274
        %v1279 = vmul.f32 %v1278, %v675
        %v1280 = vmul.f32 %v1277, %v675
        %1281 = vset.pattern.permute.xlu0 2
        %1282 = vperm.xlu0 %1281, %v445
        %v1283 = vpop.permute.xlu0 %1282
        %v1285 = vmul.f32 %v1283, %v1279
        %v1286 = vmul.f32 %v1283, %v1280
        %v1287 = vadd.f32 %v1263, %v1285
        %v1288 = vadd.f32 %v1264, %v1286
        %1289 = vset.pattern.permute.xlu0 9
        %1290 = vperm.xlu0 %1289, %v445
        %v1291 = vpop.permute.xlu0 %1290
        %v1293 = vmul.f32 %v1291, %v1279
        %v1294 = vmul.f32 %v1291, %v1280
        %v1295 = vadd.f32 %v1271, %v1293
        %v1296 = vadd.f32 %v1272, %v1294
        %1297 = vset.pattern.permute.xlu0 3
        %1298 = vperm.xlu0 %1297, %v445
        %v1299 = vpop.permute.xlu0 %1298
        %v1301 = vmul.f32 %v1299, %v536
        %v1302 = vmul.f32 %v1299, %v538
        %v1303 = vadd.f32 %v1287, %v1301
        %v1304 = vadd.f32 %v1288, %v1302
        %1305 = vset.pattern.permute.xlu0 10
        %1306 = vperm.xlu0 %1305, %v445
        %v1307 = vpop.permute.xlu0 %1306
        %v1309 = vmul.f32 %v1307, %v536
        %v1310 = vmul.f32 %v1307, %v538
        %v1311 = vadd.f32 %v1295, %v1309
        %v1312 = vadd.f32 %v1296, %v1310
        %1313 = vrot.lane.b32.xlu0 %v536, 127
        %v1314 = vpop.permute.xlu0 %1313
        %1315 = vrot.lane.b32.xlu0 %v538, 127
        %v1316 = vpop.permute.xlu0 %1315
        %v1317 = vsel %vm704, %v1314, %v1316
        %v1318 = vsel %vm704, %v1316, %v1314
        %v1319 = vmul.f32 %v1317, %v710
        %v1320 = vmul.f32 %v1318, %v710
        %1321 = vset.pattern.permute.xlu0 4
        %1322 = vperm.xlu0 %1321, %v445
        %v1323 = vpop.permute.xlu0 %1322
        %v1325 = vmul.f32 %v1323, %v1319
        %v1326 = vmul.f32 %v1323, %v1320
        %v1327 = vadd.f32 %v1303, %v1325
        %v1328 = vadd.f32 %v1304, %v1326
        %1329 = vset.pattern.permute.xlu0 11
        %1330 = vperm.xlu0 %1329, %v445
        %v1331 = vpop.permute.xlu0 %1330
        %v1333 = vmul.f32 %v1331, %v1319
        %v1334 = vmul.f32 %v1331, %v1320
        %v1335 = vadd.f32 %v1311, %v1333
        %v1336 = vadd.f32 %v1312, %v1334
        %1337 = vrot.lane.b32.xlu0 %v536, 126
        %v1338 = vpop.permute.xlu0 %1337
        %1339 = vrot.lane.b32.xlu0 %v538, 126
        %v1340 = vpop.permute.xlu0 %1339
        %v1341 = vsel %vm875, %v1338, %v1340
        %v1342 = vsel %vm875, %v1340, %v1338
        %v1343 = vmul.f32 %v1341, %v881
        %v1344 = vmul.f32 %v1342, %v881
        %1345 = vset.pattern.permute.xlu0 5
        %1346 = vperm.xlu0 %1345, %v445
        %v1347 = vpop.permute.xlu0 %1346
        %v1349 = vmul.f32 %v1347, %v1343
        %v1350 = vmul.f32 %v1347, %v1344
        %v1351 = vadd.f32 %v1327, %v1349
        %v1352 = vadd.f32 %v1328, %v1350
        %1353 = vset.pattern.permute.xlu0 12
        %1354 = vperm.xlu0 %1353, %v445
        %v1355 = vpop.permute.xlu0 %1354
        %v1357 = vmul.f32 %v1355, %v1343
        %v1358 = vmul.f32 %v1355, %v1344
        %v1359 = vadd.f32 %v1335, %v1357
        %v1360 = vadd.f32 %v1336, %v1358
        %1361 = vrot.lane.b32.xlu0 %v536, 125
        %v1362 = vpop.permute.xlu0 %1361
        %1363 = vrot.lane.b32.xlu0 %v538, 125
        %v1364 = vpop.permute.xlu0 %1363
        %v1365 = vsel %vm1148, %v1362, %v1364
        %v1366 = vsel %vm1148, %v1364, %v1362
        %v1367 = vmul.f32 %v1365, %v1154
        %v1368 = vmul.f32 %v1366, %v1154
        %1369 = vset.pattern.permute.xlu0 6
        %1370 = vperm.xlu0 %1369, %v445
        %v1371 = vpop.permute.xlu0 %1370
        %v1373 = vmul.f32 %v1371, %v1367
        %v1374 = vmul.f32 %v1371, %v1368
        %v1375 = vadd.f32 %v1351, %v1373
        %v1376 = vadd.f32 %v1352, %v1374
        %1377 = vset.pattern.permute.xlu0 13
        %1378 = vperm.xlu0 %1377, %v445
        %v1379 = vpop.permute.xlu0 %1378
        %v1381 = vmul.f32 %v1379, %v1367
        %v1382 = vmul.f32 %v1379, %v1368
        %v1383 = vadd.f32 %v1359, %v1381
        %v1384 = vadd.f32 %v1360, %v1382
        %1385 = vset.pattern.permute.xlu0 23
        %1386 = vperm.xlu0 %1385, %v445
        %v1387 = vpop.permute.xlu0 %1386
        %v1389 = vadd.f32 %v1375, %v1387
        %v1390 = vadd.f32 %v1376, %v1387
        %1391 = vset.pattern.permute.xlu0 24
        %1392 = vperm.xlu0 %1391, %v445
        %v1393 = vpop.permute.xlu0 %1392
        %v1395 = vadd.f32 %v1383, %v1393
        %v1396 = vadd.f32 %v1384, %v1393
        %v1397 = vadd.s32 %v630, 4294967280
        %vm1398 = vcmp.ge.s32.totalorder %v1397, 0
        %vm1399 = vcmp.lt.s32.totalorder %v1397, 128
        %vm1400 = vmand %vm1398, %vm1399
        %v1401 = vsel %vm1400, 1, 0
        %v1402 = vcvt.s32.f32 %v1401
        %1403 = vrot.lane.b32.xlu0 %v1389, 16
        %v1404 = vpop.permute.xlu0 %1403
        %1405 = vrot.lane.b32.xlu0 %v1390, 16
        %v1406 = vpop.permute.xlu0 %1405
        %vm1407 = vcmp.lt.s32.totalorder %v630, 16
        %v1408 = vsel %vm1407, %v1404, %v1406
        %v1409 = vsel %vm1407, %v1406, %v1404
        %v1410 = vlaneseq
        %v1411 = vshrl.u32 %v1410, 7
        %v1412 = vsub.s32 0, %v1411
        %v1413 = vrot.slane %v1402, %v1412
        %v1414 = vmul.f32 %v1409, %v1413
        %v1415 = vmul.f32 %v1408, %v1413
        %1416 = vset.pattern.permute.xlu0 14
        %1417 = vperm.xlu0 %1416, %v445
        %v1418 = vpop.permute.xlu0 %1417
        %v1420 = vmul.f32 %v1418, %v1414
        %v1421 = vmul.f32 %v1418, %v1415
        %v1422 = vadd.f32 %v1420, 0.0
        %v1423 = vadd.f32 %v1421, 0.0
        %v1424 = vadd.s32 %v630, 4294967284
        %vm1425 = vcmp.ge.s32.totalorder %v1424, 0
        %vm1426 = vcmp.lt.s32.totalorder %v1424, 128
        %vm1427 = vmand %vm1425, %vm1426
        %v1428 = vsel %vm1427, 1, 0
        %v1429 = vcvt.s32.f32 %v1428
        %1430 = vrot.lane.b32.xlu0 %v1389, 12
        %v1431 = vpop.permute.xlu0 %1430
        %1432 = vrot.lane.b32.xlu0 %v1390, 12
        %v1433 = vpop.permute.xlu0 %1432
        %vm1434 = vcmp.lt.s32.totalorder %v630, 12
        %v1435 = vsel %vm1434, %v1431, %v1433
        %v1436 = vsel %vm1434, %v1433, %v1431
        %v1437 = vlaneseq
        %v1438 = vshrl.u32 %v1437, 7
        %v1439 = vsub.s32 0, %v1438
        %v1440 = vrot.slane %v1429, %v1439
        %v1441 = vmul.f32 %v1436, %v1440
        %v1442 = vmul.f32 %v1435, %v1440
        %1443 = vset.pattern.permute.xlu0 15
        %1444 = vperm.xlu0 %1443, %v445
        %v1445 = vpop.permute.xlu0 %1444
        %v1447 = vmul.f32 %v1445, %v1441
        %v1448 = vmul.f32 %v1445, %v1442
        %v1449 = vadd.f32 %v1422, %v1447
        %v1450 = vadd.f32 %v1423, %v1448
        %v1451 = vadd.s32 %v630, 4294967288
        %vm1452 = vcmp.ge.s32.totalorder %v1451, 0
        %vm1453 = vcmp.lt.s32.totalorder %v1451, 128
        %vm1454 = vmand %vm1452, %vm1453
        %v1455 = vsel %vm1454, 1, 0
        %v1456 = vcvt.s32.f32 %v1455
        %1457 = vrot.lane.b32.xlu0 %v1389, 8
        %v1458 = vpop.permute.xlu0 %1457
        %1459 = vrot.lane.b32.xlu0 %v1390, 8
        %v1460 = vpop.permute.xlu0 %1459
        %vm1461 = vcmp.lt.s32.totalorder %v630, 8
        %v1462 = vsel %vm1461, %v1458, %v1460
        %v1463 = vsel %vm1461, %v1460, %v1458
        %v1464 = vlaneseq
        %v1465 = vshrl.u32 %v1464, 7
        %v1466 = vsub.s32 0, %v1465
        %v1467 = vrot.slane %v1456, %v1466
        %v1468 = vmul.f32 %v1463, %v1467
        %v1469 = vmul.f32 %v1462, %v1467
        %1470 = vset.pattern.permute.xlu0 16
        %1471 = vperm.xlu0 %1470, %v445
        %v1472 = vpop.permute.xlu0 %1471
        %v1474 = vmul.f32 %v1472, %v1468
        %v1475 = vmul.f32 %v1472, %v1469
        %v1476 = vadd.f32 %v1449, %v1474
        %v1477 = vadd.f32 %v1450, %v1475
        %1478 = vrot.lane.b32.xlu0 %v1389, 4
        %v1479 = vpop.permute.xlu0 %1478
        %1480 = vrot.lane.b32.xlu0 %v1390, 4
        %v1481 = vpop.permute.xlu0 %1480
        %v1482 = vsel %vm813, %v1479, %v1481
        %v1483 = vsel %vm813, %v1481, %v1479
        %v1484 = vmul.f32 %v1483, %v819
        %v1485 = vmul.f32 %v1482, %v819
        %1486 = vset.pattern.permute.xlu0 17
        %1487 = vperm.xlu0 %1486, %v445
        %v1488 = vpop.permute.xlu0 %1487
        %v1490 = vmul.f32 %v1488, %v1484
        %v1491 = vmul.f32 %v1488, %v1485
        %v1492 = vadd.f32 %v1476, %v1490
        %v1493 = vadd.f32 %v1477, %v1491
        %1494 = vset.pattern.permute.xlu0 18
        %1495 = vperm.xlu0 %1494, %v445
        %v1496 = vpop.permute.xlu0 %1495
        %v1498 = vmul.f32 %v1496, %v1389
        %v1499 = vmul.f32 %v1496, %v1390
        %v1500 = vadd.f32 %v1492, %v1498
        %v1501 = vadd.f32 %v1493, %v1499
        %1502 = vrot.lane.b32.xlu0 %v1389, 124
        %v1503 = vpop.permute.xlu0 %1502
        %1504 = vrot.lane.b32.xlu0 %v1390, 124
        %v1505 = vpop.permute.xlu0 %1504
        %v1506 = vsel %vm902, %v1503, %v1505
        %v1507 = vsel %vm902, %v1505, %v1503
        %v1508 = vmul.f32 %v1506, %v908
        %v1509 = vmul.f32 %v1507, %v908
        %1510 = vset.pattern.permute.xlu0 19
        %1511 = vperm.xlu0 %1510, %v445
        %v1512 = vpop.permute.xlu0 %1511
        %v1514 = vmul.f32 %v1512, %v1508
        %v1515 = vmul.f32 %v1512, %v1509
        %v1516 = vadd.f32 %v1500, %v1514
        %v1517 = vadd.f32 %v1501, %v1515
        %v1518 = vadd.s32 %v630, 8
        %vm1519 = vcmp.ge.s32.totalorder %v1518, 0
        %vm1520 = vcmp.lt.s32.totalorder %v1518, 128
        %vm1521 = vmand %vm1519, %vm1520
        %v1522 = vsel %vm1521, 1, 0
        %v1523 = vcvt.s32.f32 %v1522
        %1524 = vrot.lane.b32.xlu0 %v1389, 120
        %v1525 = vpop.permute.xlu0 %1524
        %1526 = vrot.lane.b32.xlu0 %v1390, 120
        %v1527 = vpop.permute.xlu0 %1526
        %vm1528 = vcmp.lt.s32.totalorder %v630, 120
        %v1529 = vsel %vm1528, %v1525, %v1527
        %v1530 = vsel %vm1528, %v1527, %v1525
        %v1531 = vlaneseq
        %v1532 = vshrl.u32 %v1531, 7
        %v1533 = vsub.s32 0, %v1532
        %v1534 = vrot.slane %v1523, %v1533
        %v1535 = vmul.f32 %v1529, %v1534
        %v1536 = vmul.f32 %v1530, %v1534
        %1537 = vset.pattern.permute.xlu0 20
        %1538 = vperm.xlu0 %1537, %v445
        %v1539 = vpop.permute.xlu0 %1538
        %v1541 = vmul.f32 %v1539, %v1535
        %v1542 = vmul.f32 %v1539, %v1536
        %v1543 = vadd.f32 %v1516, %v1541
        %v1544 = vadd.f32 %v1517, %v1542
        %v1545 = vadd.s32 %v630, 12
        %vm1546 = vcmp.ge.s32.totalorder %v1545, 0
        %vm1547 = vcmp.lt.s32.totalorder %v1545, 128
        %vm1548 = vmand %vm1546, %vm1547
        %v1549 = vsel %vm1548, 1, 0
        %v1550 = vcvt.s32.f32 %v1549
        %1551 = vrot.lane.b32.xlu0 %v1389, 116
        %v1552 = vpop.permute.xlu0 %1551
        %1553 = vrot.lane.b32.xlu0 %v1390, 116
        %v1554 = vpop.permute.xlu0 %1553
        %vm1555 = vcmp.lt.s32.totalorder %v630, 116
        %v1556 = vsel %vm1555, %v1552, %v1554
        %v1557 = vsel %vm1555, %v1554, %v1552
        %v1558 = vlaneseq
        %v1559 = vshrl.u32 %v1558, 7
        %v1560 = vsub.s32 0, %v1559
        %v1561 = vrot.slane %v1550, %v1560
        %v1562 = vmul.f32 %v1556, %v1561
        %v1563 = vmul.f32 %v1557, %v1561
        %1564 = vset.pattern.permute.xlu0 21
        %1565 = vperm.xlu0 %1564, %v445
        %v1566 = vpop.permute.xlu0 %1565
        %v1568 = vmul.f32 %v1566, %v1562
        %v1569 = vmul.f32 %v1566, %v1563
        %v1570 = vadd.f32 %v1543, %v1568
        %v1571 = vadd.f32 %v1544, %v1569
        %v1572 = vadd.s32 %v630, 16
        %vm1573 = vcmp.ge.s32.totalorder %v1572, 0
        %vm1574 = vcmp.lt.s32.totalorder %v1572, 128
        %vm1575 = vmand %vm1573, %vm1574
        %v1576 = vsel %vm1575, 1, 0
        %v1577 = vcvt.s32.f32 %v1576
        %1578 = vrot.lane.b32.xlu0 %v1389, 112
        %v1579 = vpop.permute.xlu0 %1578
        %1580 = vrot.lane.b32.xlu0 %v1390, 112
        %v1581 = vpop.permute.xlu0 %1580
        %vm1582 = vcmp.lt.s32.totalorder %v630, 112
        %v1583 = vsel %vm1582, %v1579, %v1581
        %v1584 = vsel %vm1582, %v1581, %v1579
        %v1585 = vlaneseq
        %v1586 = vshrl.u32 %v1585, 7
        %v1587 = vsub.s32 0, %v1586
        %v1588 = vrot.slane %v1577, %v1587
        %v1589 = vmul.f32 %v1583, %v1588
        %v1590 = vmul.f32 %v1584, %v1588
        %1591 = vset.pattern.permute.xlu0 22
        %1592 = vperm.xlu0 %1591, %v445
        %v1593 = vpop.permute.xlu0 %1592
        %v1595 = vmul.f32 %v1593, %v1589
        %v1596 = vmul.f32 %v1593, %v1590
        %v1597 = vadd.f32 %v1570, %v1595
        %v1598 = vadd.f32 %v1571, %v1596
        %1599 = vset.pattern.permute.xlu0 25
        %1600 = vperm.xlu0 %1599, %v445
        %v1601 = vpop.permute.xlu0 %1600
        %v1603 = vadd.f32 %v1597, %v1601
        %v1604 = vadd.f32 %v1598, %v1601
        %v1605 = vld [vmem:[%s5] sm:$0xf]
        %v1606 = vld [vmem:[%s5 + $0x4] sm:$0xf]
        %v1607 = vld [vmem:[%s5 + $0x8] sm:$0xf]
        %v1608 = vld [vmem:[%s5 + $0xc] sm:$0xf]
        %v1609 = vpack.c.bf16 %v923, %v725
        %v1610 = vpack.c.bf16 %v924, %v726
        %v1611 = vpack.c.bf16 %v1603, %v1223
        %v1612 = vpack.c.bf16 %v1604, %v1224
        %1613 = vset.pattern.permute.xlu0 26
        %1614 = vperm.xlu0 %1613, %v442
        %v1615 = vpop.permute.xlu0 %1614
        %1617 = vset.pattern.permute.xlu0 26
        %1618 = vperm.xlu0 %1617, %v443
        %v1619 = vpop.permute.xlu0 %1618
        %1621 = vset.pattern.permute.xlu0 26
        %1622 = vperm.xlu0 %1621, %v444
        %v1623 = vpop.permute.xlu0 %1622
        %1625 = vset.pattern.permute.xlu0 26
        %1626 = vperm.xlu0 %1625, %v445
        %v1627 = vpop.permute.xlu0 %1626
        %v1633 = vunpack.c.l.b16 %v1605
        %v1634 = vunpack.c.l.b16 %v1606
        %v1635 = vunpack.c.l.b16 %v1607
        %v1636 = vunpack.c.l.b16 %v1608
        %v1637 = vpack.c.b16 %v1634, %v1633
        %v1638 = vpack.c.b16 %v1636, %v1635
        %v1640 = vsel %vm480, %v1637, 0
        %v1643 = vsel %vm480, %v1638, 0
        %1645 = vmatprep.subr.bf16.mxu0 0
        %1646 = vmatpush1.bf16.msra.mxu0 0
        %1647 = vmatprep.subr.bf16.mxu0 0
        %1648 = vmatpush1.bf16.msra.mxu0 0
        %1649 = vmatprep.subr.bf16.mxu0 0
        %1650 = vmatpush1.bf16.msra.mxu0 0
        %1651 = vmatprep.subr.bf16.mxu0 0
        %1652 = vmatpush1.bf16.msra.mxu0 0
        %1653 = vmatprep.subr.bf16.mxu0 0
        %1654 = vmatpush1.bf16.msra.mxu0 0
        %1655 = vmatprep.subr.bf16.mxu0 0
        %1656 = vmatpush1.bf16.msra.mxu0 0
        %1657 = vmatprep.subr.bf16.mxu0 %v1612
        %1658 = vmatpush1.bf16.msra.mxu0 %v1611
        %1659 = vmatprep.subr.bf16.mxu0 %v1610
        %1660 = vmatpush1.bf16.msra.mxu0 %v1609
        %1661 = vmatprep.subr.bf16.mxu0 0
        %1662 = vmatpush2.bf16.msra.mxu0 0
        %1663 = vmatprep.subr.bf16.mxu0 0
        %1664 = vmatpush2.bf16.msra.mxu0 0
        %1665 = vmatprep.subr.bf16.mxu0 0
        %1666 = vmatpush2.bf16.msra.mxu0 0
        %1667 = vmatprep.subr.bf16.mxu0 0
        %1668 = vmatpush2.bf16.msra.mxu0 0
        %1669 = vmatprep.subr.bf16.mxu0 0
        %1670 = vmatpush2.bf16.msra.mxu0 0
        %1671 = vmatprep.subr.bf16.mxu0 0
        %1672 = vmatpush2.bf16.msra.mxu0 0
        %1673 = vmatprep.subr.bf16.mxu0 0
        %1674 = vmatpush2.bf16.msra.mxu0 0
        %1675 = vmatprep.subr.bf16.mxu0 0
        %1676 = vmatpush2.bf16.msra.mxu0 0
        %1677 = vmatprep.mubr.bf16.mxu0 0
        %1678 = vmatmul.mubr.bf16.gmra.mxu0 %v1640
        %v1679 = vpop.f32.mrf.mxu0
        %v1680 = vadd.f32 %v1615, %v1679
        %v1681 = vpop.f32.mrf.mxu0
        %v1682 = vadd.f32 %v1615, %v1681
        %v1683 = vpop.f32.mrf.mxu0
        %v1684 = vadd.f32 %v1619, %v1683
        %v1685 = vpop.f32.mrf.mxu0
        %v1686 = vadd.f32 %v1619, %v1685
        %1687 = vmatprep.mubr.bf16.mxu0 0
        %1688 = vmatmul.mubr.bf16.gmra.mxu0 %v1643
        %v1689 = vpop.f32.mrf.mxu0
        %v1690 = vadd.f32 %v1623, %v1689
        %v1691 = vpop.f32.mrf.mxu0
        %v1692 = vadd.f32 %v1623, %v1691
        %v1693 = vpop.f32.mrf.mxu0
        %v1694 = vadd.f32 %v1627, %v1693
        %v1695 = vpop.f32.mrf.mxu0
        %v1696 = vadd.f32 %v1627, %v1695
        %1697 = vdwg.mxu0
        %v1698 = vmul.f32 %v1680, %v657
        %v1699 = vmul.f32 %v1682, %v658
        %v1700 = vmul.f32 %v1684, %v801
        %v1701 = vmul.f32 %v1686, %v802
        %v1702 = vmul.f32 %v1690, %v1047
        %v1703 = vmul.f32 %v1692, %v1048
        %v1704 = vmul.f32 %v1694, %v1395
        %v1705 = vmul.f32 %v1696, %v1396
        %v1706 = vmul.f32 %v611, %v1698
        %v1707 = vmul.f32 %v613, %v1699
        %v1708 = vmul.f32 %v615, %v1700
        %v1709 = vmul.f32 %v617, %v1701
        %v1710 = vmul.f32 %v621, %v1702
        %v1711 = vmul.f32 %v623, %v1703
        %v1712 = vmul.f32 %v625, %v1704
        %v1713 = vmul.f32 %v627, %v1705
        %v1714 = vld [vmem:[%s4] sm:$0xf]
        %v1715 = vld [vmem:[%s4 + $0x4] sm:$0xf]
        %v1716 = vld [vmem:[%s4 + $0x8] sm:$0xf]
        %v1717 = vld [vmem:[%s4 + $0xc] sm:$0xf]
        %v1718 = vpack.c.bf16 %v1708, %v1706
        %v1719 = vpack.c.bf16 %v1709, %v1707
        %v1720 = vpack.c.bf16 %v1712, %v1710
        %v1721 = vpack.c.bf16 %v1713, %v1711
        %1722 = vset.pattern.permute.xlu0 27
        %1723 = vperm.xlu0 %1722, %v442
        %v1724 = vpop.permute.xlu0 %1723
        %1726 = vset.pattern.permute.xlu0 27
        %1727 = vperm.xlu0 %1726, %v443
        %v1728 = vpop.permute.xlu0 %1727
        %1730 = vset.pattern.permute.xlu0 27
        %1731 = vperm.xlu0 %1730, %v444
        %v1732 = vpop.permute.xlu0 %1731
        %1734 = vset.pattern.permute.xlu0 27
        %1735 = vperm.xlu0 %1734, %v445
        %v1736 = vpop.permute.xlu0 %1735
        %v1742 = vunpack.c.l.b16 %v1714
        %v1743 = vunpack.c.l.b16 %v1715
        %v1744 = vunpack.c.l.b16 %v1716
        %v1745 = vunpack.c.l.b16 %v1717
        %v1746 = vpack.c.b16 %v1743, %v1742
        %v1747 = vpack.c.b16 %v1745, %v1744
        %v1749 = vsel %vm480, %v1746, 0
        %v1752 = vsel %vm480, %v1747, 0
        %1754 = vmatprep.subr.bf16.mxu0 0
        %1755 = vmatpush1.bf16.msra.mxu0 0
        %1756 = vmatprep.subr.bf16.mxu0 0
        %1757 = vmatpush1.bf16.msra.mxu0 0
        %1758 = vmatprep.subr.bf16.mxu0 0
        %1759 = vmatpush1.bf16.msra.mxu0 0
        %1760 = vmatprep.subr.bf16.mxu0 0
        %1761 = vmatpush1.bf16.msra.mxu0 0
        %1762 = vmatprep.subr.bf16.mxu0 0
        %1763 = vmatpush1.bf16.msra.mxu0 0
        %1764 = vmatprep.subr.bf16.mxu0 0
        %1765 = vmatpush1.bf16.msra.mxu0 0
        %1766 = vmatprep.subr.bf16.mxu0 %v1721
        %1767 = vmatpush1.bf16.msra.mxu0 %v1720
        %1768 = vmatprep.subr.bf16.mxu0 %v1719
        %1769 = vmatpush1.bf16.msra.mxu0 %v1718
        %1770 = vmatprep.subr.bf16.mxu0 0
        %1771 = vmatpush2.bf16.msra.mxu0 0
        %1772 = vmatprep.subr.bf16.mxu0 0
        %1773 = vmatpush2.bf16.msra.mxu0 0
        %1774 = vmatprep.subr.bf16.mxu0 0
        %1775 = vmatpush2.bf16.msra.mxu0 0
        %1776 = vmatprep.subr.bf16.mxu0 0
        %1777 = vmatpush2.bf16.msra.mxu0 0
        %1778 = vmatprep.subr.bf16.mxu0 0
        %1779 = vmatpush2.bf16.msra.mxu0 0
        %1780 = vmatprep.subr.bf16.mxu0 0
        %1781 = vmatpush2.bf16.msra.mxu0 0
        %1782 = vmatprep.subr.bf16.mxu0 0
        %1783 = vmatpush2.bf16.msra.mxu0 0
        %1784 = vmatprep.subr.bf16.mxu0 0
        %1785 = vmatpush2.bf16.msra.mxu0 0
        %1786 = vmatprep.mubr.bf16.mxu0 0
        %1787 = vmatmul.mubr.bf16.gmra.mxu0 %v1749
        %v1788 = vpop.f32.mrf.mxu0
        %v1789 = vadd.f32 %v1724, %v1788
        %v1790 = vpop.f32.mrf.mxu0
        %v1791 = vadd.f32 %v1724, %v1790
        %v1792 = vpop.f32.mrf.mxu0
        %v1793 = vadd.f32 %v1728, %v1792
        %v1794 = vpop.f32.mrf.mxu0
        %v1795 = vadd.f32 %v1728, %v1794
        %1796 = vmatprep.mubr.bf16.mxu0 0
        %1797 = vmatmul.mubr.bf16.gmra.mxu0 %v1752
        %v1798 = vpop.f32.mrf.mxu0
        %v1799 = vadd.f32 %v1732, %v1798
        %v1800 = vpop.f32.mrf.mxu0
        %v1801 = vadd.f32 %v1732, %v1800
        %v1802 = vpop.f32.mrf.mxu0
        %v1803 = vadd.f32 %v1736, %v1802
        %v1804 = vpop.f32.mrf.mxu0
        %v1805 = vadd.f32 %v1736, %v1804
        %1806 = vdwg.mxu0
        %1807 = vset.pattern.permute.xlu0 28
        %1808 = vperm.xlu0 %1807, %v442
        %v1809 = vpop.permute.xlu0 %1808
        %1811 = vset.pattern.permute.xlu0 28
        %1812 = vperm.xlu0 %1811, %v443
        %v1813 = vpop.permute.xlu0 %1812
        %1815 = vset.pattern.permute.xlu0 28
        %1816 = vperm.xlu0 %1815, %v444
        %v1817 = vpop.permute.xlu0 %1816
        %1819 = vset.pattern.permute.xlu0 28
        %1820 = vperm.xlu0 %1819, %v445
        %v1821 = vpop.permute.xlu0 %1820
        %v1823 = vmul.f32 %v1789, %v1809
        %v1824 = vmul.f32 %v1791, %v1809
        %v1825 = vmul.f32 %v1793, %v1813
        %v1826 = vmul.f32 %v1795, %v1813
        %v1827 = vmul.f32 %v1799, %v1817
        %v1828 = vmul.f32 %v1801, %v1817
        %v1829 = vmul.f32 %v1803, %v1821
        %v1830 = vmul.f32 %v1805, %v1821
        %v1831 = vld [vmem:[%s279] sm:$0xff]
        %v1832 = vld [vmem:[%s279 + $0x10] sm:$0xff]
        %v1833 = vld [vmem:[%s279 + $0x20] sm:$0xff]
        %v1834 = vld [vmem:[%s279 + $0x30] sm:$0xff]
        %v1835 = vadd.f32 %v1823, %v1831
        %v1836 = vadd.f32 %v1824, %v378
        %v1837 = vadd.f32 %v1825, %v1832
        %v1838 = vadd.f32 %v1826, %v379
        %v1839 = vadd.f32 %v1827, %v1833
        %v1840 = vadd.f32 %v1828, %v380
        %v1841 = vadd.f32 %v1829, %v1834
        %v1842 = vadd.f32 %v1830, %v381
        %1843 = vst [vmem:[%s306] sm:$0xff] %v1835
        %1844 = vst [vmem:[%s306 + $0x8] sm:$0xff] %v1836
        %1845 = vst [vmem:[%s306 + $0x10] sm:$0xff] %v1837
        %1846 = vst [vmem:[%s306 + $0x18] sm:$0xff] %v1838
        %1847 = vst [vmem:[%s306 + $0x20] sm:$0xff] %v1839
        %1848 = vst [vmem:[%s306 + $0x28] sm:$0xff] %v1840
        %1849 = vst [vmem:[%s306 + $0x30] sm:$0xff] %v1841
        %1850 = vst [vmem:[%s306 + $0x38] sm:$0xff] %v1842
        %s1851 = sand.u32 %s178, 1
        %s1852 = sand.u32 %s178, 1
        %s1853 = smul.addr %s1852, 64
        %s1854 = scalar_lea.vmem [#allocation3], %s1853
        // Predicated region
        $region72: #{multi_kernel_conv.1} parent=66 // pred_check
          %p1855 = pneg %p188
        $region73: #{multi_kernel_conv.1} parent=66 // pred_check_branch
          %1857 = sbr.rel (%p1855) target = $region75
        $region74: #{multi_kernel_conv.1} parent=66 // pred_region
          %s1858 = smul.u32 2, %s18
          %s1859 = smul.addr %s1858, 8
          %s1860 = scalar_lea.vmem %s7, %s1859
          // Predicated region
          $region76: #{multi_kernel_conv.1} parent=74 // pred_check
            _
          $region77: #{multi_kernel_conv.1} parent=74 // pred_check_branch
            %1862 = sbr.rel (0) target = $region79
          $region78: #{multi_kernel_conv.1} parent=74 // pred_region
            // Predicated region
            $region80: #{multi_kernel_conv.1} parent=78 // pred_check
              _
            $region81: #{multi_kernel_conv.1} parent=78 // pred_check_branch
              %1864 = sbr.rel (0) target = $region83
            $region82: #{multi_kernel_conv.1} parent=78 // pred_region
              loop: start=0, step=1, limit=1
              $region84: #{multi_kernel_conv.1} parent=82 // loop_pre_header
                _
              $region85: #{multi_kernel_conv.1} parent=82 // loop_header
                %s1866 = sphi 0, %s1870
                %p1867 = scmp.ge.s32.totalorder %s1866, 1
                %s1871 = sphi %s1854, %s1854
                %s1872 = sphi %s1860, %s1860
              $region86: #{multi_kernel_conv.1} parent=82 // loop_header_branch
                %1869 = sbr.rel (%p1867) target = $region90
              $region87: #{multi_kernel_conv.1} parent=82 // loop_body
                %v1873 = vld [vmem:[%s1871] sm:$0xff]
                %1874 = vst [vmem:[%s1872] sm:$0xff] %v1873
                %v1875 = vld [vmem:[%s1871 + $0x8] sm:$0xff]
                %1876 = vst [vmem:[%s1872 + $0x8] sm:$0xff] %v1875
                %v1877 = vld [vmem:[%s1871 + $0x10] sm:$0xff]
                %1878 = vst [vmem:[%s1872 + $0x20] sm:$0xff] %v1877
                %v1879 = vld [vmem:[%s1871 + $0x18] sm:$0xff]
                %1880 = vst [vmem:[%s1872 + $0x28] sm:$0xff] %v1879
                %v1881 = vld [vmem:[%s1871 + $0x20] sm:$0xff]
                %1882 = vst [vmem:[%s1872 + $0x40] sm:$0xff] %v1881
                %v1883 = vld [vmem:[%s1871 + $0x28] sm:$0xff]
                %1884 = vst [vmem:[%s1872 + $0x48] sm:$0xff] %v1883
                %v1885 = vld [vmem:[%s1871 + $0x30] sm:$0xff]
                %1886 = vst [vmem:[%s1872 + $0x60] sm:$0xff] %v1885
                %v1887 = vld [vmem:[%s1871 + $0x38] sm:$0xff]
                %1888 = vst [vmem:[%s1872 + $0x68] sm:$0xff] %v1887
              $region88: #{multi_kernel_conv.1} parent=82 // loop_footer
                %s1870 = sadd.s32 1, %s1866
              $region89: #{multi_kernel_conv.1} parent=82 // loop_footer_branch
                %1865 = sbr.rel target = $region85
              $region90: #{multi_kernel_conv.1} parent=82 // loop_exit
                _
            $region83: #{multi_kernel_conv.1} parent=78 // pred_fallthru
              _
            // Predicated region
            $region91: #{multi_kernel_conv.1} parent=78 // pred_check
              _
            $region92: #{multi_kernel_conv.1} parent=78 // pred_check_branch
              %1890 = sbr.rel target = $region94
            $region93: #{multi_kernel_conv.1} parent=78 // pred_region
              _
            $region94: #{multi_kernel_conv.1} parent=78 // pred_fallthru
              _
          $region79: #{multi_kernel_conv.1} parent=74 // pred_fallthru
            _
          %1891 = vnop
        $region75: #{multi_kernel_conv.1} parent=66 // pred_fallthru
          _
      $region67: #{multi_kernel_conv.1} parent=5 // pred_fallthru
        _
      %p1892 = scmp.le.s32.totalorder 2, %s13
      // Predicated region
      $region95: #{multi_kernel_conv.1} parent=5 // pred_check
        %p1893 = pneg %p1892
      $region96: #{multi_kernel_conv.1} parent=5 // pred_check_branch
        %1895 = sbr.rel (%p1893) target = $region98
      $region97: #{multi_kernel_conv.1} parent=5 // pred_region
        %s1896 = ssub.s32 %s13, 2
        // Predicated region
        $region99: #{multi_kernel_conv.1} parent=97 // pred_check
          %p1897 = pneg %p194
        $region100: #{multi_kernel_conv.1} parent=97 // pred_check_branch
          %1899 = sbr.rel (%p1897) target = $region102
        $region101: #{multi_kernel_conv.1} parent=97 // pred_region
          %s1900 = sand.u32 %s179, 1
          %s1901 = sand.u32 %s179, 1
          %s1902 = smul.addr %s1901, 64
          %s1903 = scalar_lea.vmem [#allocation3], %s1902
        $region102: #{multi_kernel_conv.1} parent=97 // pred_fallthru
          _
      $region98: #{multi_kernel_conv.1} parent=5 // pred_fallthru
        _
    $region6: #{multi_kernel_conv.1} parent=1 // loop_footer
      %s17 = sadd.s32 1, %s13
    $region7: #{multi_kernel_conv.1} parent=1 // loop_footer_branch
      %12 = sbr.rel target = $region3
    $region8: #{multi_kernel_conv.1} parent=1 // loop_exit
      _

</llo_original>
